<compile_context>
chip_gen: v7x
topology: tpu7x:2x2x1
jax: 0.10.0
libtpu: 0.0.40
codegen_flags: <defaults>
</compile_context>

<pallas_src>
import functools

import jax
import jax.numpy as jnp
from jax.experimental import pallas as pl
from jax.experimental.pallas import tpu as pltpu


_VMEM_LIMIT = 32 * 1024 * 1024   # fits v7x's 64 MiB physical; raises v5e's 16 MiB default

# Static layer config (Cout, Cin, k, stride, pad, pooled?) matching SimpleCNN.features.
# Kept OUT of the jitted-argument pytree so Python control flow stays concrete.
_CONV_CFG = (
    (32, 3, 7, 2, 3, True),
    (64, 32, 5, 2, 2, True),
    (128, 64, 3, 1, 1, True),
    (256, 128, 3, 1, 1, False),
    (256, 256, 3, 2, 1, False),
    (512, 256, 3, 2, 1, False),
)


def _round_up(x, m):
    return (x + m - 1) // m * m


def _pick_tile(dim, prefs):
    """Largest preferred tile that divides `dim`; otherwise the full dim."""
    for p in prefs:
        if dim >= p and dim % p == 0:
            return p
    return dim


def _pick_tile_m(m):
    """Row-tile pick; caps at M//2 when M >= 256 so v7x's two cores both get work."""
    cap = m // 2 if m >= 256 else m
    for p in (512, 256, 128, 64, 32, 16, 8):
        if p <= cap and m % p == 0:
            return p
    return m


def _pick_tile_k(k, tm, tn, budget=12 * 1024 * 1024):
    """Prefer full K (single grid step, no accumulator RMW) when it fits VMEM."""
    def fits(tk):
        # double-buffered bf16 x & w tiles + f32 accumulator + output tile
        return (tm * tk + tk * tn) * 2 * 2 + tm * tn * (4 + 2) <= budget
    if fits(k):
        return k
    for p in (1024, 512, 256, 128):
        if k % p == 0 and fits(p):
            return p
    return k


# ------------------- generic tiled matmul (+ affine + ReLU) ------------------- #

def _matmul_kernel_1k(x_ref, w_ref, s_ref, b_ref, o_ref, *, relu, apply_affine):
    """Single-K-step fast path: no accumulator scratch, no k grid axis."""
    y = jnp.dot(x_ref[...], w_ref[...], preferred_element_type=jnp.float32)
    if apply_affine:
        y = y * s_ref[...] + b_ref[...]
    if relu:
        y = jnp.maximum(y, 0.0)
    o_ref[...] = y.astype(o_ref.dtype)


def _matmul_kernel_acc(x_ref, w_ref, s_ref, b_ref, o_ref, acc_ref, *, relu,
                       apply_affine):
    """acc += x @ w over the k grid axis; epilogue on the last k step."""
    k = pl.program_id(2)

    @pl.when(k == 0)
    def _():
        acc_ref[...] = jnp.zeros_like(acc_ref)

    acc_ref[...] += jnp.dot(x_ref[...], w_ref[...],
                            preferred_element_type=jnp.float32)

    @pl.when(k == pl.num_programs(2) - 1)
    def _():
        y = acc_ref[...]
        if apply_affine:
            y = y * s_ref[...] + b_ref[...]
        if relu:
            y = jnp.maximum(y, 0.0)
        o_ref[...] = y.astype(o_ref.dtype)


def fused_matmul(x, w, scale, bias, *, relu, apply_affine, out_dtype=jnp.bfloat16):
    """y = [relu]([affine](x @ w)).  x:(M,K), w:(K_pad,N) bf16, N % 128 == 0."""
    M, K = x.shape
    Kw, N = w.shape
    if K < Kw:                      # zero-pad K to the lane-aligned weight rows
        x = jnp.pad(x, ((0, 0), (0, Kw - K)))
        K = Kw
    assert K == Kw and N % 128 == 0

    tm = _pick_tile_m(M)
    tn = _pick_tile(N, (512, 256, 128))
    tk = _pick_tile_k(K, tm, tn)

    s2 = scale.reshape(1, N).astype(jnp.float32)
    b2 = bias.reshape(1, N).astype(jnp.float32)
    xb = x.astype(jnp.bfloat16)
    wb = w.astype(jnp.bfloat16)

    if tk == K:
        return pl.pallas_call(
            functools.partial(_matmul_kernel_1k, relu=relu,
                              apply_affine=apply_affine),
            out_shape=jax.ShapeDtypeStruct((M, N), out_dtype),
            grid_spec=pltpu.PrefetchScalarGridSpec(
                num_scalar_prefetch=0,
                grid=(M // tm, N // tn),
                in_specs=[
                    pl.BlockSpec((tm, K), lambda i, j: (i, 0)),
                    pl.BlockSpec((K, tn), lambda i, j: (0, j)),
                    pl.BlockSpec((1, tn), lambda i, j: (0, j)),
                    pl.BlockSpec((1, tn), lambda i, j: (0, j)),
                ],
                out_specs=pl.BlockSpec((tm, tn), lambda i, j: (i, j)),
            ),
            compiler_params=pltpu.CompilerParams(
                dimension_semantics=("parallel", "parallel"),
                vmem_limit_bytes=_VMEM_LIMIT),
        )(xb, wb, s2, b2)

    return pl.pallas_call(
        functools.partial(_matmul_kernel_acc, relu=relu,
                          apply_affine=apply_affine),
        out_shape=jax.ShapeDtypeStruct((M, N), out_dtype),
        grid_spec=pltpu.PrefetchScalarGridSpec(
            num_scalar_prefetch=0,
            grid=(M // tm, N // tn, K // tk),
            in_specs=[
                pl.BlockSpec((tm, tk), lambda i, j, k: (i, k)),
                pl.BlockSpec((tk, tn), lambda i, j, k: (k, j)),
                pl.BlockSpec((1, tn), lambda i, j, k: (0, j)),
                pl.BlockSpec((1, tn), lambda i, j, k: (0, j)),
            ],
            out_specs=pl.BlockSpec((tm, tn), lambda i, j, k: (i, j)),
            scratch_shapes=[pltpu.VMEM((tm, tn), jnp.float32)],
        ),
        compiler_params=pltpu.CompilerParams(
            dimension_semantics=("parallel", "parallel", "arbitrary"),
            vmem_limit_bytes=_VMEM_LIMIT),
    )(xb, wb, s2, b2)


# ------------- fused Conv(matmul) + MaxPool(2,2) + BN(eval) + ReLU ------------- #

def _conv_pool_kernel(x_ref, w_ref, s_ref, b_ref, o_ref, pool_ref):
    """Grid (i, j, p): p indexes the 4 positions of the 2x2 pooling window.

    x_ref block is (1, tm, K): the im2col patches of pooling position p for the
    tm pooled output rows.  pool = max_p(patches_p @ w); affine + ReLU on p==3.
    """
    p = pl.program_id(2)
    res = jnp.dot(x_ref[0], w_ref[...], preferred_element_type=jnp.float32)

    @pl.when(p == 0)
    def _():
        pool_ref[...] = res

    @pl.when(p > 0)
    def _():
        pool_ref[...] = jnp.maximum(pool_ref[...], res)

    @pl.when(p == pl.num_programs(2) - 1)
    def _():
        y = pool_ref[...] * s_ref[...] + b_ref[...]
        o_ref[...] = jnp.maximum(y, 0.0).astype(o_ref.dtype)


def _im2col_patches(x, kh, kw, stride, pad):
    """x: (B,H,W,C) -> patches (B, OH, OW, kh*kw, C), matching PyTorch conv."""
    B, H, W, C = x.shape
    OH = (H + 2 * pad - kh) // stride + 1
    OW = (W + 2 * pad - kw) // stride + 1
    xp = jnp.pad(x, ((0, 0), (pad, pad), (pad, pad), (0, 0)))
    cols = []
    for i in range(kh):
        for j in range(kw):
            cols.append(
                jax.lax.slice(
                    xp,
                    (0, i, j, 0),
                    (B, i + (OH - 1) * stride + 1, j + (OW - 1) * stride + 1, C),
                    (1, stride, stride, 1)))
    return jnp.stack(cols, axis=3), OH, OW


def conv2d_pool_bn_relu(x, w2, scale, bias, kh, kw, stride, pad):
    """Conv2d(bias=False) -> MaxPool2d(2,2) -> BN(eval) -> ReLU in one kernel."""
    B, H, W, C = x.shape
    patches, OH, OW = _im2col_patches(x, kh, kw, stride, pad)
    OH2, OW2 = OH // 2, OW // 2                     # MaxPool2d floor mode
    T = kh * kw
    K = T * C
    Kpad, N = w2.shape

    # Re-group im2col rows so axis 0 enumerates the 4 positions of each 2x2
    # pooling window and axis 1 enumerates the pooled output pixels.
    pe = patches[:, :2 * OH2, :2 * OW2]
    xp4 = (pe.reshape(B, OH2, 2, OW2, 2, T, C)
             .transpose(2, 4, 0, 1, 3, 5, 6)
             .reshape(4, B * OH2 * OW2, K))
    if K < Kpad:
        xp4 = jnp.pad(xp4, ((0, 0), (0, 0), (0, Kpad - K)))

    M = B * OH2 * OW2
    tm = _pick_tile_m(M)
    tn = _pick_tile(N, (512, 256, 128))
    s2 = scale.reshape(1, N).astype(jnp.float32)
    b2 = bias.reshape(1, N).astype(jnp.float32)

    # K here is always small (<= a few hundred for this net), so full-K tiles.
    out = pl.pallas_call(
        _conv_pool_kernel,
        out_shape=jax.ShapeDtypeStruct((M, N), jnp.bfloat16),
        grid_spec=pltpu.PrefetchScalarGridSpec(
            num_scalar_prefetch=0,
            grid=(M // tm, N // tn, 4),
            in_specs=[
                pl.BlockSpec((1, tm, Kpad), lambda i, j, p: (p, i, 0)),
                pl.BlockSpec((Kpad, tn), lambda i, j, p: (0, j)),
                pl.BlockSpec((1, tn), lambda i, j, p: (0, j)),
                pl.BlockSpec((1, tn), lambda i, j, p: (0, j)),
            ],
            out_specs=pl.BlockSpec((tm, tn), lambda i, j, p: (i, j)),
            scratch_shapes=[pltpu.VMEM((tm, tn), jnp.float32)],
        ),
        compiler_params=pltpu.CompilerParams(
            dimension_semantics=("parallel", "parallel", "arbitrary"),
            vmem_limit_bytes=_VMEM_LIMIT),
    )(xp4.astype(jnp.bfloat16), w2, s2, b2)
    return out.reshape(B, OH2, OW2, N)


def conv2d_fused(x, w2, scale, bias, kh, kw, stride, pad, *, relu, apply_affine):
    """Generic Conv2d(bias=False) via im2col + tiled matmul (fallback path)."""
    B = x.shape[0]
    patches, OH, OW = _im2col_patches(x, kh, kw, stride, pad)
    p2 = patches.reshape(B * OH * OW, kh * kw * x.shape[3])
    y = fused_matmul(p2, w2, scale, bias, relu=relu, apply_affine=apply_affine)
    return y.reshape(B, OH, OW, w2.shape[1])


# ------------- fused 1x1-spatial tail: conv4 -> conv5 -> conv6 -> fc ------------ #

def _tail_kernel(x_ref, w4_ref, s4_ref, b4_ref, w5_ref, s5_ref, b5_ref,
                 w6_ref, s6_ref, b6_ref, wfc_ref, bfc_ref, o_ref):
    """All weights resident in VMEM; chains four small MXU matmuls.

    Valid only when the spatial size is 1x1, so each 3x3/pad-1 conv reduces to
    its center tap (the other 8 taps multiply zero padding) and
    AdaptiveAvgPool2d(1) is the identity.  Dropout(0.1) is identity in eval mode.
    """
    h = x_ref[...]
    h = jnp.dot(h, w4_ref[...], preferred_element_type=jnp.float32)
    h = jnp.maximum(h * s4_ref[...] + b4_ref[...], 0.0).astype(jnp.bfloat16)
    h = jnp.dot(h, w5_ref[...], preferred_element_type=jnp.float32)
    h = jnp.maximum(h * s5_ref[...] + b5_ref[...], 0.0).astype(jnp.bfloat16)
    h = jnp.dot(h, w6_ref[...], preferred_element_type=jnp.float32)
    h = jnp.maximum(h * s6_ref[...] + b6_ref[...], 0.0).astype(jnp.bfloat16)
    logits = jnp.dot(h, wfc_ref[...], preferred_element_type=jnp.float32)
    o_ref[...] = logits + bfc_ref[...]


def fused_tail(x2, w4, s4, b4, w5, s5, b5, w6, s6, b6, wfc, bfc):
    B = x2.shape[0]
    N = wfc.shape[1]
    vspec = pl.BlockSpec(memory_space=pltpu.MemorySpace.VMEM)
    return pl.pallas_call(
        _tail_kernel,
        out_shape=jax.ShapeDtypeStruct((B, N), jnp.float32),
        in_specs=[vspec] * 12,
        out_specs=vspec,
        compiler_params=pltpu.CompilerParams(vmem_limit_bytes=_VMEM_LIMIT),
    )(x2.astype(jnp.bfloat16), w4, s4, b4, w5, s5, b5, w6, s6, b6, wfc, bfc)


# -------------------------------- parameters --------------------------------- #

def init_params(key, num_classes=10):
    """Raw PyTorch-style parameters (OIHW weights, BN stats, fc weight/bias)."""
    params = {"convs": []}
    for (cout, cin, k, _s, _p, _pool) in _CONV_CFG:
        key, kw_, kg, kb, km, kv = jax.random.split(key, 6)
        fan_in = cin * k * k
        w = jax.random.normal(kw_, (cout, cin, k, k), jnp.float32) * (2.0 / fan_in) ** 0.5
        params["convs"].append({
            "w": w,
            "gamma": 1.0 + 0.1 * jax.random.normal(kg, (cout,), jnp.float32),
            "beta": 0.1 * jax.random.normal(kb, (cout,), jnp.float32),
            "mean": 0.1 * jax.random.normal(km, (cout,), jnp.float32),
            "var": jax.random.uniform(kv, (cout,), jnp.float32, 0.5, 1.5),
        })
    key, kfw, kfb = jax.random.split(key, 3)
    params["fc_w"] = jax.random.normal(kfw, (num_classes, 512), jnp.float32) / 512.0 ** 0.5
    params["fc_b"] = 0.01 * jax.random.normal(kfb, (num_classes,), jnp.float32)
    return params


def prepare_params(params):
    """Fold BN (eval) into scale/bias; reshape + lane/K-pad weights to bf16.

    Done once, outside the jitted forward.  The returned pytree contains ONLY
    arrays (all static metadata lives in _CONV_CFG) so it can be a jit argument.
    """
    eps = 1e-5
    prepared = {"convs": []}
    for cfg, cp in zip(_CONV_CFG, params["convs"]):
        cout, cin, k, _stride, _pad, _pooled = cfg
        npad = _round_up(cout, 128)
        kdim = k * k * cin
        kpad = _round_up(kdim, 128)
        # (tap, cin) row ordering to match the im2col patch layout.
        w2 = jnp.transpose(cp["w"], (2, 3, 1, 0)).reshape(kdim, cout)
        w2 = jnp.pad(w2, ((0, kpad - kdim), (0, npad - cout))).astype(jnp.bfloat16)
        scale = cp["gamma"] * jax.lax.rsqrt(cp["var"] + eps)
        bias = cp["beta"] - cp["mean"] * scale
        scale_p = jnp.pad(scale, (0, npad - cout), constant_values=1.0).astype(jnp.float32)
        bias_p = jnp.pad(bias, (0, npad - cout)).astype(jnp.float32)
        prepared["convs"].append(dict(w2=w2, scale_p=scale_p, bias_p=bias_p))
    nc = params["fc_b"].shape[0]
    npad = _round_up(nc, 128)
    prepared["fc_w2"] = jnp.pad(params["fc_w"].T, ((0, 0), (0, npad - nc))).astype(jnp.bfloat16)
    prepared["fc_scale"] = jnp.ones((npad,), jnp.float32)
    prepared["fc_bias"] = jnp.pad(params["fc_b"], (0, npad - nc)).astype(jnp.float32)
    return prepared


# ---------------------------------- forward ----------------------------------- #

def simple_cnn_forward(prepared, x_nchw, *, num_classes=10):
    """Input (B, 3, H, W) -> logits (B, num_classes)."""
    x = jnp.transpose(x_nchw, (0, 2, 3, 1)).astype(jnp.bfloat16)   # NCHW -> NHWC
    convs = prepared["convs"]

    # Blocks 1-3: Conv -> MaxPool(2,2) -> BN -> ReLU, one fused kernel per block.
    li = 0
    for cfg, cp in zip(_CONV_CFG, convs):
        cout, _cin, k, stride, pad, pooled = cfg
        if not pooled:
            break
        x = conv2d_pool_bn_relu(x, cp["w2"], cp["scale_p"], cp["bias_p"],
                                k, k, stride, pad)
        x = x[..., :cout]          # drop lane-padding channels
        li += 1

    B, H, W, C = x.shape
    tail_cfgs = _CONV_CFG[li:]
    tail_convs = convs[li:]

    # Fast path: 1x1 spatial -> each 3x3/pad-1 conv is its center tap; fuse
    # conv4 -> conv5 -> conv6 -> avgpool(identity) -> fc into one kernel.
    can_fuse_tail = (
        len(tail_cfgs) == 3 and H == 1 and W == 1 and C == tail_cfgs[0][1]
        and all(c[2] == 3 and c[4] == 1 and not c[5] for c in tail_cfgs))

    if can_fuse_tail:
        x2 = x.reshape(B, C)
        args = []
        for cfg, cp in zip(tail_cfgs, tail_convs):
            _cout, cin, k, _stride, _pad, _pooled = cfg
            ctr = (k // 2) * k + (k // 2)           # center-tap row block
            wc = jax.lax.slice_in_dim(cp["w2"], ctr * cin, (ctr + 1) * cin, axis=0)
            args += [wc,
                     cp["scale_p"].reshape(1, -1).astype(jnp.float32),
                     cp["bias_p"].reshape(1, -1).astype(jnp.float32)]
        logits = fused_tail(x2, *args, prepared["fc_w2"],
                            prepared["fc_bias"].reshape(1, -1).astype(jnp.float32))
    else:
        # Generic fallback (larger inputs): per-layer Conv -> BN -> ReLU kernels.
        for cfg, cp in zip(tail_cfgs, tail_convs):
            cout, _cin, k, stride, pad, _pooled = cfg
            x = conv2d_fused(x, cp["w2"], cp["scale_p"], cp["bias_p"],
                             k, k, stride, pad, relu=True, apply_affine=True)
            x = x[..., :cout]
        # Dropout(0.1): identity in eval mode.  AdaptiveAvgPool2d(1) + Flatten.
        x = jnp.mean(x.astype(jnp.float32), axis=(1, 2))
        logits = fused_matmul(x.astype(jnp.bfloat16), prepared["fc_w2"],
                              prepared["fc_scale"], prepared["fc_bias"],
                              relu=False, apply_affine=True, out_dtype=jnp.float32)

    return logits[:, :num_classes]


# ------------------------------------ main ------------------------------------ #

if __name__ == "__main__":
    root = jax.random.PRNGKey(0)
    k_params, k_x = jax.random.split(root)
    raw_params = init_params(k_params, num_classes=10)
    prepared = prepare_params(raw_params)                 # folded once, outside jit
    x = jax.random.normal(k_x, (2, 3, 32, 32), jnp.float32)  # NCHW, CIFAR-like

    fwd = jax.jit(simple_cnn_forward)
    logits = jax.block_until_ready(fwd(prepared, x))

    assert logits.shape == (2, 10), logits.shape
    assert bool(jnp.all(jnp.isfinite(logits)))
    print("KERNEL_OK")
</pallas_src>

<mosaic_0001>
module attributes {stable_mosaic.version = 11 : i64} {
  func.func @_conv_pool_kernel(%arg0: i32, %arg1: i32, %arg2: i32, %arg3: memref<1x128x256xbf16, #tpu.memory_space<vmem>>, %arg4: memref<256x128xbf16, #tpu.memory_space<vmem>>, %arg5: memref<1x128xf32, #tpu.memory_space<vmem>>, %arg6: memref<1x128xf32, #tpu.memory_space<vmem>>, %arg7: memref<128x128xbf16, #tpu.memory_space<vmem>>, %arg8: memref<128x128xf32, #tpu.memory_space<vmem>>) attributes {dimension_semantics = [#tpu.dimension_semantics<parallel>, #tpu.dimension_semantics<parallel>, #tpu.dimension_semantics<arbitrary>], iteration_bounds = array<i64: 1, 1, 4>, scalar_prefetch = 0 : i64, scratch_operands = 1 : i64, tpu.core_type = #tpu.core_type<tc>, window_params = [{transform_indices = @transform_0, window_bounds = array<i64: 1, 128, 256>}, {transform_indices = @transform_1, window_bounds = array<i64: 256, 128>}, {transform_indices = @transform_2, window_bounds = array<i64: 1, 128>}, {transform_indices = @transform_3, window_bounds = array<i64: 1, 128>}, {transform_indices = @transform_4, window_bounds = array<i64: 128, 128>}]} {
    %c0 = arith.constant 0 : index
    %c0_0 = arith.constant 0 : index
    %c0_1 = arith.constant 0 : index
    %0 = vector.load %arg3[%c0, %c0_0, %c0_1] : memref<1x128x256xbf16, #tpu.memory_space<vmem>>, vector<1x128x256xbf16>
    %1 = vector.shape_cast %0 : vector<1x128x256xbf16> to vector<128x256xbf16>
    %c0_2 = arith.constant 0 : index
    %c0_3 = arith.constant 0 : index
    %2 = vector.load %arg4[%c0_2, %c0_3] : memref<256x128xbf16, #tpu.memory_space<vmem>>, vector<256x128xbf16>
    %cst = arith.constant dense<0.000000e+00> : vector<128x128xf32>
    %3 = tpu.matmul %1, %2, %cst {dimension_numbers = #tpu.dot_dimension_numbers<[1], [0], [0], [1], [0, 0, 1, 1], [], []>} : vector<128x256xbf16>, vector<256x128xbf16>, vector<128x128xf32> -> vector<128x128xf32>
    %c0_i32 = arith.constant 0 : i32
    %4 = arith.cmpi eq, %arg2, %c0_i32 : i32
    %5 = arith.extui %4 : i1 to i32
    %c0_i32_4 = arith.constant 0 : i32
    %6 = arith.cmpi ne, %5, %c0_i32_4 : i32
    scf.if %6 {
      %c0_8 = arith.constant 0 : index
      %c0_9 = arith.constant 0 : index
      %13 = vector.load %arg8[%c0_8, %c0_9] : memref<128x128xf32, #tpu.memory_space<vmem>>, vector<128x128xf32>
      tpu.vector_store %arg8[%c0_8, %c0_9], %3 {strides = array<i32>} : memref<128x128xf32, #tpu.memory_space<vmem>>, vector<128x128xf32>,
    } else {
    }
    %c0_i32_5 = arith.constant 0 : i32
    %7 = arith.cmpi sgt, %arg2, %c0_i32_5 : i32
    %8 = arith.extui %7 : i1 to i32
    %c0_i32_6 = arith.constant 0 : i32
    %9 = arith.cmpi ne, %8, %c0_i32_6 : i32
    scf.if %9 {
      %c0_8 = arith.constant 0 : index
      %c0_9 = arith.constant 0 : index
      %13 = vector.load %arg8[%c0_8, %c0_9] : memref<128x128xf32, #tpu.memory_space<vmem>>, vector<128x128xf32>
      %14 = arith.maximumf %13, %3 : vector<128x128xf32>
      %c0_10 = arith.constant 0 : index
      %c0_11 = arith.constant 0 : index
      %15 = vector.load %arg8[%c0_10, %c0_11] : memref<128x128xf32, #tpu.memory_space<vmem>>, vector<128x128xf32>
      tpu.vector_store %arg8[%c0_10, %c0_11], %14 {strides = array<i32>} : memref<128x128xf32, #tpu.memory_space<vmem>>, vector<128x128xf32>,
    } else {
    }
    %c3_i32 = arith.constant 3 : i32
    %10 = arith.cmpi eq, %arg2, %c3_i32 : i32
    %11 = arith.extui %10 : i1 to i32
    %c0_i32_7 = arith.constant 0 : i32
    %12 = arith.cmpi ne, %11, %c0_i32_7 : i32
    scf.if %12 {
      %c0_8 = arith.constant 0 : index
      %c0_9 = arith.constant 0 : index
      %13 = vector.load %arg8[%c0_8, %c0_9] : memref<128x128xf32, #tpu.memory_space<vmem>>, vector<128x128xf32>
      %c0_10 = arith.constant 0 : index
      %c0_11 = arith.constant 0 : index
      %14 = vector.load %arg5[%c0_10, %c0_11] : memref<1x128xf32, #tpu.memory_space<vmem>>, vector<1x128xf32>
      %15 = vector.broadcast %14 : vector<1x128xf32> to vector<128x128xf32>
      %16 = arith.mulf %13, %15 : vector<128x128xf32>
      %c0_12 = arith.constant 0 : index
      %c0_13 = arith.constant 0 : index
      %17 = vector.load %arg6[%c0_12, %c0_13] : memref<1x128xf32, #tpu.memory_space<vmem>>, vector<1x128xf32>
      %18 = vector.broadcast %17 : vector<1x128xf32> to vector<128x128xf32>
      %19 = arith.addf %16, %18 : vector<128x128xf32>
      %cst_14 = arith.constant 0.000000e+00 : f32
      %20 = vector.broadcast %cst_14 : f32 to vector<128x128xf32>
      %21 = arith.maximumf %19, %20 : vector<128x128xf32>
      %22 = arith.truncf %21 : vector<128x128xf32> to vector<128x128xbf16>
      %c0_15 = arith.constant 0 : index
      %c0_16 = arith.constant 0 : index
      %23 = vector.load %arg7[%c0_15, %c0_16] : memref<128x128xbf16, #tpu.memory_space<vmem>>, vector<128x128xbf16>
      tpu.vector_store %arg7[%c0_15, %c0_16], %22 {strides = array<i32>} : memref<128x128xbf16, #tpu.memory_space<vmem>>, vector<128x128xbf16>,
    } else {
    }
    return
  }
  func.func @transform_0(%arg0: i32, %arg1: i32, %arg2: i32) -> (i32, i32, i32) {
    %c0_i32 = arith.constant 0 : i32
    %c0_i32_0 = arith.constant 0 : i32
    return %arg2, %arg0, %c0_i32 : i32, i32, i32
  }
  func.func @transform_1(%arg0: i32, %arg1: i32, %arg2: i32) -> (i32, i32) {
    %c0_i32 = arith.constant 0 : i32
    %c0_i32_0 = arith.constant 0 : i32
    return %c0_i32, %arg1 : i32, i32
  }
  func.func @transform_2(%arg0: i32, %arg1: i32, %arg2: i32) -> (i32, i32) {
    %c0_i32 = arith.constant 0 : i32
    %c0_i32_0 = arith.constant 0 : i32
    return %c0_i32, %arg1 : i32, i32
  }
  func.func @transform_3(%arg0: i32, %arg1: i32, %arg2: i32) -> (i32, i32) {
    %c0_i32 = arith.constant 0 : i32
    %c0_i32_0 = arith.constant 0 : i32
    return %c0_i32, %arg1 : i32, i32
  }
  func.func @transform_4(%arg0: i32, %arg1: i32, %arg2: i32) -> (i32, i32) {
    %c0_i32 = arith.constant 0 : i32
    return %arg0, %arg1 : i32, i32
  }
}

module attributes {stable_mosaic.version = 11 : i64} {
  func.func @_conv_pool_kernel(%arg0: i32, %arg1: i32, %arg2: i32, %arg3: memref<1x8x896xbf16, #tpu.memory_space<vmem>>, %arg4: memref<896x128xbf16, #tpu.memory_space<vmem>>, %arg5: memref<1x128xf32, #tpu.memory_space<vmem>>, %arg6: memref<1x128xf32, #tpu.memory_space<vmem>>, %arg7: memref<8x128xbf16, #tpu.memory_space<vmem>>, %arg8: memref<8x128xf32, #tpu.memory_space<vmem>>) attributes {dimension_semantics = [#tpu.dimension_semantics<parallel>, #tpu.dimension_semantics<parallel>, #tpu.dimension_semantics<arbitrary>], iteration_bounds = array<i64: 1, 1, 4>, scalar_prefetch = 0 : i64, scratch_operands = 1 : i64, tpu.core_type = #tpu.core_type<tc>, window_params = [{transform_indices = @transform_0, window_bounds = array<i64: 1, 8, 896>}, {transform_indices = @transform_1, window_bounds = array<i64: 896, 128>}, {transform_indices = @transform_2, window_bounds = array<i64: 1, 128>}, {transform_indices = @transform_3, window_bounds = array<i64: 1, 128>}, {transform_indices = @transform_4, window_bounds = array<i64: 8, 128>}]} {
    %c0 = arith.constant 0 : index
    %c0_0 = arith.constant 0 : index
    %c0_1 = arith.constant 0 : index
    %0 = vector.load %arg3[%c0, %c0_0, %c0_1] : memref<1x8x896xbf16, #tpu.memory_space<vmem>>, vector<1x8x896xbf16>
    %1 = vector.shape_cast %0 : vector<1x8x896xbf16> to vector<8x896xbf16>
    %c0_2 = arith.constant 0 : index
    %c0_3 = arith.constant 0 : index
    %2 = vector.load %arg4[%c0_2, %c0_3] : memref<896x128xbf16, #tpu.memory_space<vmem>>, vector<896x128xbf16>
    %cst = arith.constant dense<0.000000e+00> : vector<8x128xf32>
    %3 = tpu.matmul %1, %2, %cst {dimension_numbers = #tpu.dot_dimension_numbers<[1], [0], [0], [1], [0, 0, 1, 1], [], []>} : vector<8x896xbf16>, vector<896x128xbf16>, vector<8x128xf32> -> vector<8x128xf32>
    %c0_i32 = arith.constant 0 : i32
    %4 = arith.cmpi eq, %arg2, %c0_i32 : i32
    %5 = arith.extui %4 : i1 to i32
    %c0_i32_4 = arith.constant 0 : i32
    %6 = arith.cmpi ne, %5, %c0_i32_4 : i32
    scf.if %6 {
      %c0_8 = arith.constant 0 : index
      %c0_9 = arith.constant 0 : index
      %13 = vector.load %arg8[%c0_8, %c0_9] : memref<8x128xf32, #tpu.memory_space<vmem>>, vector<8x128xf32>
      tpu.vector_store %arg8[%c0_8, %c0_9], %3 {strides = array<i32>} : memref<8x128xf32, #tpu.memory_space<vmem>>, vector<8x128xf32>,
    } else {
    }
    %c0_i32_5 = arith.constant 0 : i32
    %7 = arith.cmpi sgt, %arg2, %c0_i32_5 : i32
    %8 = arith.extui %7 : i1 to i32
    %c0_i32_6 = arith.constant 0 : i32
    %9 = arith.cmpi ne, %8, %c0_i32_6 : i32
    scf.if %9 {
      %c0_8 = arith.constant 0 : index
      %c0_9 = arith.constant 0 : index
      %13 = vector.load %arg8[%c0_8, %c0_9] : memref<8x128xf32, #tpu.memory_space<vmem>>, vector<8x128xf32>
      %14 = arith.maximumf %13, %3 : vector<8x128xf32>
      %c0_10 = arith.constant 0 : index
      %c0_11 = arith.constant 0 : index
      %15 = vector.load %arg8[%c0_10, %c0_11] : memref<8x128xf32, #tpu.memory_space<vmem>>, vector<8x128xf32>
      tpu.vector_store %arg8[%c0_10, %c0_11], %14 {strides = array<i32>} : memref<8x128xf32, #tpu.memory_space<vmem>>, vector<8x128xf32>,
    } else {
    }
    %c3_i32 = arith.constant 3 : i32
    %10 = arith.cmpi eq, %arg2, %c3_i32 : i32
    %11 = arith.extui %10 : i1 to i32
    %c0_i32_7 = arith.constant 0 : i32
    %12 = arith.cmpi ne, %11, %c0_i32_7 : i32
    scf.if %12 {
      %c0_8 = arith.constant 0 : index
      %c0_9 = arith.constant 0 : index
      %13 = vector.load %arg8[%c0_8, %c0_9] : memref<8x128xf32, #tpu.memory_space<vmem>>, vector<8x128xf32>
      %c0_10 = arith.constant 0 : index
      %c0_11 = arith.constant 0 : index
      %14 = vector.load %arg5[%c0_10, %c0_11] : memref<1x128xf32, #tpu.memory_space<vmem>>, vector<1x128xf32>
      %15 = vector.broadcast %14 : vector<1x128xf32> to vector<8x128xf32>
      %16 = arith.mulf %13, %15 : vector<8x128xf32>
      %c0_12 = arith.constant 0 : index
      %c0_13 = arith.constant 0 : index
      %17 = vector.load %arg6[%c0_12, %c0_13] : memref<1x128xf32, #tpu.memory_space<vmem>>, vector<1x128xf32>
      %18 = vector.broadcast %17 : vector<1x128xf32> to vector<8x128xf32>
      %19 = arith.addf %16, %18 : vector<8x128xf32>
      %cst_14 = arith.constant 0.000000e+00 : f32
      %20 = vector.broadcast %cst_14 : f32 to vector<8x128xf32>
      %21 = arith.maximumf %19, %20 : vector<8x128xf32>
      %22 = arith.truncf %21 : vector<8x128xf32> to vector<8x128xbf16>
      %c0_15 = arith.constant 0 : index
      %c0_16 = arith.constant 0 : index
      %23 = vector.load %arg7[%c0_15, %c0_16] : memref<8x128xbf16, #tpu.memory_space<vmem>>, vector<8x128xbf16>
      tpu.vector_store %arg7[%c0_15, %c0_16], %22 {strides = array<i32>} : memref<8x128xbf16, #tpu.memory_space<vmem>>, vector<8x128xbf16>,
    } else {
    }
    return
  }
  func.func @transform_0(%arg0: i32, %arg1: i32, %arg2: i32) -> (i32, i32, i32) {
    %c0_i32 = arith.constant 0 : i32
    %c0_i32_0 = arith.constant 0 : i32
    return %arg2, %arg0, %c0_i32 : i32, i32, i32
  }
  func.func @transform_1(%arg0: i32, %arg1: i32, %arg2: i32) -> (i32, i32) {
    %c0_i32 = arith.constant 0 : i32
    %c0_i32_0 = arith.constant 0 : i32
    return %c0_i32, %arg1 : i32, i32
  }
  func.func @transform_2(%arg0: i32, %arg1: i32, %arg2: i32) -> (i32, i32) {
    %c0_i32 = arith.constant 0 : i32
    %c0_i32_0 = arith.constant 0 : i32
    return %c0_i32, %arg1 : i32, i32
  }
  func.func @transform_3(%arg0: i32, %arg1: i32, %arg2: i32) -> (i32, i32) {
    %c0_i32 = arith.constant 0 : i32
    %c0_i32_0 = arith.constant 0 : i32
    return %c0_i32, %arg1 : i32, i32
  }
  func.func @transform_4(%arg0: i32, %arg1: i32, %arg2: i32) -> (i32, i32) {
    %c0_i32 = arith.constant 0 : i32
    return %arg0, %arg1 : i32, i32
  }
}

module attributes {stable_mosaic.version = 11 : i64} {
  func.func @_conv_pool_kernel(%arg0: i32, %arg1: i32, %arg2: i32, %arg3: memref<1x2x640xbf16, #tpu.memory_space<vmem>>, %arg4: memref<640x128xbf16, #tpu.memory_space<vmem>>, %arg5: memref<1x128xf32, #tpu.memory_space<vmem>>, %arg6: memref<1x128xf32, #tpu.memory_space<vmem>>, %arg7: memref<2x128xbf16, #tpu.memory_space<vmem>>, %arg8: memref<2x128xf32, #tpu.memory_space<vmem>>) attributes {dimension_semantics = [#tpu.dimension_semantics<parallel>, #tpu.dimension_semantics<parallel>, #tpu.dimension_semantics<arbitrary>], iteration_bounds = array<i64: 1, 1, 4>, scalar_prefetch = 0 : i64, scratch_operands = 1 : i64, tpu.core_type = #tpu.core_type<tc>, window_params = [{transform_indices = @transform_0, window_bounds = array<i64: 1, 2, 640>}, {transform_indices = @transform_1, window_bounds = array<i64: 640, 128>}, {transform_indices = @transform_2, window_bounds = array<i64: 1, 128>}, {transform_indices = @transform_3, window_bounds = array<i64: 1, 128>}, {transform_indices = @transform_4, window_bounds = array<i64: 2, 128>}]} {
    %c0 = arith.constant 0 : index
    %c0_0 = arith.constant 0 : index
    %c0_1 = arith.constant 0 : index
    %0 = vector.load %arg3[%c0, %c0_0, %c0_1] : memref<1x2x640xbf16, #tpu.memory_space<vmem>>, vector<1x2x640xbf16>
    %1 = vector.shape_cast %0 : vector<1x2x640xbf16> to vector<2x640xbf16>
    %c0_2 = arith.constant 0 : index
    %c0_3 = arith.constant 0 : index
    %2 = vector.load %arg4[%c0_2, %c0_3] : memref<640x128xbf16, #tpu.memory_space<vmem>>, vector<640x128xbf16>
    %cst = arith.constant dense<0.000000e+00> : vector<2x128xf32>
    %3 = tpu.matmul %1, %2, %cst {dimension_numbers = #tpu.dot_dimension_numbers<[1], [0], [0], [1], [0, 0, 1, 1], [], []>} : vector<2x640xbf16>, vector<640x128xbf16>, vector<2x128xf32> -> vector<2x128xf32>
    %c0_i32 = arith.constant 0 : i32
    %4 = arith.cmpi eq, %arg2, %c0_i32 : i32
    %5 = arith.extui %4 : i1 to i32
    %c0_i32_4 = arith.constant 0 : i32
    %6 = arith.cmpi ne, %5, %c0_i32_4 : i32
    scf.if %6 {
      %c0_8 = arith.constant 0 : index
      %c0_9 = arith.constant 0 : index
      %13 = vector.load %arg8[%c0_8, %c0_9] : memref<2x128xf32, #tpu.memory_space<vmem>>, vector<2x128xf32>
      tpu.vector_store %arg8[%c0_8, %c0_9], %3 {strides = array<i32>} : memref<2x128xf32, #tpu.memory_space<vmem>>, vector<2x128xf32>,
    } else {
    }
    %c0_i32_5 = arith.constant 0 : i32
    %7 = arith.cmpi sgt, %arg2, %c0_i32_5 : i32
    %8 = arith.extui %7 : i1 to i32
    %c0_i32_6 = arith.constant 0 : i32
    %9 = arith.cmpi ne, %8, %c0_i32_6 : i32
    scf.if %9 {
      %c0_8 = arith.constant 0 : index
      %c0_9 = arith.constant 0 : index
      %13 = vector.load %arg8[%c0_8, %c0_9] : memref<2x128xf32, #tpu.memory_space<vmem>>, vector<2x128xf32>
      %14 = arith.maximumf %13, %3 : vector<2x128xf32>
      %c0_10 = arith.constant 0 : index
      %c0_11 = arith.constant 0 : index
      %15 = vector.load %arg8[%c0_10, %c0_11] : memref<2x128xf32, #tpu.memory_space<vmem>>, vector<2x128xf32>
      tpu.vector_store %arg8[%c0_10, %c0_11], %14 {strides = array<i32>} : memref<2x128xf32, #tpu.memory_space<vmem>>, vector<2x128xf32>,
    } else {
    }
    %c3_i32 = arith.constant 3 : i32
    %10 = arith.cmpi eq, %arg2, %c3_i32 : i32
    %11 = arith.extui %10 : i1 to i32
    %c0_i32_7 = arith.constant 0 : i32
    %12 = arith.cmpi ne, %11, %c0_i32_7 : i32
    scf.if %12 {
      %c0_8 = arith.constant 0 : index
      %c0_9 = arith.constant 0 : index
      %13 = vector.load %arg8[%c0_8, %c0_9] : memref<2x128xf32, #tpu.memory_space<vmem>>, vector<2x128xf32>
      %c0_10 = arith.constant 0 : index
      %c0_11 = arith.constant 0 : index
      %14 = vector.load %arg5[%c0_10, %c0_11] : memref<1x128xf32, #tpu.memory_space<vmem>>, vector<1x128xf32>
      %15 = vector.broadcast %14 : vector<1x128xf32> to vector<2x128xf32>
      %16 = arith.mulf %13, %15 : vector<2x128xf32>
      %c0_12 = arith.constant 0 : index
      %c0_13 = arith.constant 0 : index
      %17 = vector.load %arg6[%c0_12, %c0_13] : memref<1x128xf32, #tpu.memory_space<vmem>>, vector<1x128xf32>
      %18 = vector.broadcast %17 : vector<1x128xf32> to vector<2x128xf32>
      %19 = arith.addf %16, %18 : vector<2x128xf32>
      %cst_14 = arith.constant 0.000000e+00 : f32
      %20 = vector.broadcast %cst_14 : f32 to vector<2x128xf32>
      %21 = arith.maximumf %19, %20 : vector<2x128xf32>
      %22 = arith.truncf %21 : vector<2x128xf32> to vector<2x128xbf16>
      %c0_15 = arith.constant 0 : index
      %c0_16 = arith.constant 0 : index
      %23 = vector.load %arg7[%c0_15, %c0_16] : memref<2x128xbf16, #tpu.memory_space<vmem>>, vector<2x128xbf16>
      tpu.vector_store %arg7[%c0_15, %c0_16], %22 {strides = array<i32>} : memref<2x128xbf16, #tpu.memory_space<vmem>>, vector<2x128xbf16>,
    } else {
    }
    return
  }
  func.func @transform_0(%arg0: i32, %arg1: i32, %arg2: i32) -> (i32, i32, i32) {
    %c0_i32 = arith.constant 0 : i32
    %c0_i32_0 = arith.constant 0 : i32
    return %arg2, %arg0, %c0_i32 : i32, i32, i32
  }
  func.func @transform_1(%arg0: i32, %arg1: i32, %arg2: i32) -> (i32, i32) {
    %c0_i32 = arith.constant 0 : i32
    %c0_i32_0 = arith.constant 0 : i32
    return %c0_i32, %arg1 : i32, i32
  }
  func.func @transform_2(%arg0: i32, %arg1: i32, %arg2: i32) -> (i32, i32) {
    %c0_i32 = arith.constant 0 : i32
    %c0_i32_0 = arith.constant 0 : i32
    return %c0_i32, %arg1 : i32, i32
  }
  func.func @transform_3(%arg0: i32, %arg1: i32, %arg2: i32) -> (i32, i32) {
    %c0_i32 = arith.constant 0 : i32
    %c0_i32_0 = arith.constant 0 : i32
    return %c0_i32, %arg1 : i32, i32
  }
  func.func @transform_4(%arg0: i32, %arg1: i32, %arg2: i32) -> (i32, i32) {
    %c0_i32 = arith.constant 0 : i32
    return %arg0, %arg1 : i32, i32
  }
}

module attributes {stable_mosaic.version = 11 : i64} {
  func.func @_tail_kernel(%arg0: memref<2x128xbf16, #tpu.memory_space<vmem>>, %arg1: memref<128x256xbf16, #tpu.memory_space<vmem>>, %arg2: memref<1x256xf32, #tpu.memory_space<vmem>>, %arg3: memref<1x256xf32, #tpu.memory_space<vmem>>, %arg4: memref<256x256xbf16, #tpu.memory_space<vmem>>, %arg5: memref<1x256xf32, #tpu.memory_space<vmem>>, %arg6: memref<1x256xf32, #tpu.memory_space<vmem>>, %arg7: memref<256x512xbf16, #tpu.memory_space<vmem>>, %arg8: memref<1x512xf32, #tpu.memory_space<vmem>>, %arg9: memref<1x512xf32, #tpu.memory_space<vmem>>, %arg10: memref<512x128xbf16, #tpu.memory_space<vmem>>, %arg11: memref<1x128xf32, #tpu.memory_space<vmem>>, %arg12: memref<2x128xf32, #tpu.memory_space<vmem>>) attributes {dimension_semantics = [], scalar_prefetch = 0 : i64, scratch_operands = 0 : i64, tpu.core_type = #tpu.core_type<tc>} {
    %c0 = arith.constant 0 : index
    %c0_0 = arith.constant 0 : index
    %0 = vector.load %arg0[%c0, %c0_0] : memref<2x128xbf16, #tpu.memory_space<vmem>>, vector<2x128xbf16>
    %c0_1 = arith.constant 0 : index
    %c0_2 = arith.constant 0 : index
    %1 = vector.load %arg1[%c0_1, %c0_2] : memref<128x256xbf16, #tpu.memory_space<vmem>>, vector<128x256xbf16>
    %cst = arith.constant dense<0.000000e+00> : vector<2x256xf32>
    %2 = tpu.matmul %0, %1, %cst {dimension_numbers = #tpu.dot_dimension_numbers<[1], [0], [0], [1], [0, 0, 1, 1], [], []>} : vector<2x128xbf16>, vector<128x256xbf16>, vector<2x256xf32> -> vector<2x256xf32>
    %c0_3 = arith.constant 0 : index
    %c0_4 = arith.constant 0 : index
    %3 = vector.load %arg2[%c0_3, %c0_4] : memref<1x256xf32, #tpu.memory_space<vmem>>, vector<1x256xf32>
    %4 = vector.broadcast %3 : vector<1x256xf32> to vector<2x256xf32>
    %5 = arith.mulf %2, %4 : vector<2x256xf32>
    %c0_5 = arith.constant 0 : index
    %c0_6 = arith.constant 0 : index
    %6 = vector.load %arg3[%c0_5, %c0_6] : memref<1x256xf32, #tpu.memory_space<vmem>>, vector<1x256xf32>
    %7 = vector.broadcast %6 : vector<1x256xf32> to vector<2x256xf32>
    %8 = arith.addf %5, %7 : vector<2x256xf32>
    %cst_7 = arith.constant 0.000000e+00 : f32
    %9 = vector.broadcast %cst_7 : f32 to vector<2x256xf32>
    %10 = arith.maximumf %8, %9 : vector<2x256xf32>
    %11 = arith.truncf %10 : vector<2x256xf32> to vector<2x256xbf16>
    %c0_8 = arith.constant 0 : index
    %c0_9 = arith.constant 0 : index
    %12 = vector.load %arg4[%c0_8, %c0_9] : memref<256x256xbf16, #tpu.memory_space<vmem>>, vector<256x256xbf16>
    %cst_10 = arith.constant dense<0.000000e+00> : vector<2x256xf32>
    %13 = tpu.matmul %11, %12, %cst_10 {dimension_numbers = #tpu.dot_dimension_numbers<[1], [0], [0], [1], [0, 0, 1, 1], [], []>} : vector<2x256xbf16>, vector<256x256xbf16>, vector<2x256xf32> -> vector<2x256xf32>
    %c0_11 = arith.constant 0 : index
    %c0_12 = arith.constant 0 : index
    %14 = vector.load %arg5[%c0_11, %c0_12] : memref<1x256xf32, #tpu.memory_space<vmem>>, vector<1x256xf32>
    %15 = vector.broadcast %14 : vector<1x256xf32> to vector<2x256xf32>
    %16 = arith.mulf %13, %15 : vector<2x256xf32>
    %c0_13 = arith.constant 0 : index
    %c0_14 = arith.constant 0 : index
    %17 = vector.load %arg6[%c0_13, %c0_14] : memref<1x256xf32, #tpu.memory_space<vmem>>, vector<1x256xf32>
    %18 = vector.broadcast %17 : vector<1x256xf32> to vector<2x256xf32>
    %19 = arith.addf %16, %18 : vector<2x256xf32>
    %cst_15 = arith.constant 0.000000e+00 : f32
    %20 = vector.broadcast %cst_15 : f32 to vector<2x256xf32>
    %21 = arith.maximumf %19, %20 : vector<2x256xf32>
    %22 = arith.truncf %21 : vector<2x256xf32> to vector<2x256xbf16>
    %c0_16 = arith.constant 0 : index
    %c0_17 = arith.constant 0 : index
    %23 = vector.load %arg7[%c0_16, %c0_17] : memref<256x512xbf16, #tpu.memory_space<vmem>>, vector<256x512xbf16>
    %cst_18 = arith.constant dense<0.000000e+00> : vector<2x512xf32>
    %24 = tpu.matmul %22, %23, %cst_18 {dimension_numbers = #tpu.dot_dimension_numbers<[1], [0], [0], [1], [0, 0, 1, 1], [], []>} : vector<2x256xbf16>, vector<256x512xbf16>, vector<2x512xf32> -> vector<2x512xf32>
    %c0_19 = arith.constant 0 : index
    %c0_20 = arith.constant 0 : index
    %25 = vector.load %arg8[%c0_19, %c0_20] : memref<1x512xf32, #tpu.memory_space<vmem>>, vector<1x512xf32>
    %26 = vector.broadcast %25 : vector<1x512xf32> to vector<2x512xf32>
    %27 = arith.mulf %24, %26 : vector<2x512xf32>
    %c0_21 = arith.constant 0 : index
    %c0_22 = arith.constant 0 : index
    %28 = vector.load %arg9[%c0_21, %c0_22] : memref<1x512xf32, #tpu.memory_space<vmem>>, vector<1x512xf32>
    %29 = vector.broadcast %28 : vector<1x512xf32> to vector<2x512xf32>
    %30 = arith.addf %27, %29 : vector<2x512xf32>
    %cst_23 = arith.constant 0.000000e+00 : f32
    %31 = vector.broadcast %cst_23 : f32 to vector<2x512xf32>
    %32 = arith.maximumf %30, %31 : vector<2x512xf32>
    %33 = arith.truncf %32 : vector<2x512xf32> to vector<2x512xbf16>
    %c0_24 = arith.constant 0 : index
    %c0_25 = arith.constant 0 : index
    %34 = vector.load %arg10[%c0_24, %c0_25] : memref<512x128xbf16, #tpu.memory_space<vmem>>, vector<512x128xbf16>
    %cst_26 = arith.constant dense<0.000000e+00> : vector<2x128xf32>
    %35 = tpu.matmul %33, %34, %cst_26 {dimension_numbers = #tpu.dot_dimension_numbers<[1], [0], [0], [1], [0, 0, 1, 1], [], []>} : vector<2x512xbf16>, vector<512x128xbf16>, vector<2x128xf32> -> vector<2x128xf32>
    %c0_27 = arith.constant 0 : index
    %c0_28 = arith.constant 0 : index
    %36 = vector.load %arg11[%c0_27, %c0_28] : memref<1x128xf32, #tpu.memory_space<vmem>>, vector<1x128xf32>
    %37 = vector.broadcast %36 : vector<1x128xf32> to vector<2x128xf32>
    %38 = arith.addf %35, %37 : vector<2x128xf32>
    %c0_29 = arith.constant 0 : index
    %c0_30 = arith.constant 0 : index
    %39 = vector.load %arg12[%c0_29, %c0_30] : memref<2x128xf32, #tpu.memory_space<vmem>>, vector<2x128xf32>
    tpu.vector_store %arg12[%c0_29, %c0_30], %38 {strides = array<i32>} : memref<2x128xf32, #tpu.memory_space<vmem>>, vector<2x128xf32>,
    return
  }
}

</mosaic_0001>

<llo_original>
// kernel: simple_cnn_forward.4
$region0: #{simple_cnn_forward.4}
  #allocation0 [shape = 'u32[]', space=smem, size = 0x4, offset = 0x4, fixed_abs, tag = 'smem constant byte address 0x4 - core index']
  #allocation1 [shape = 'u32[144,128]{1,0:T(1,128)}', space=vmem, size = 0x12000, scoped, tag = 'internal scratch']
  #allocation2 [shape = 'f32[128,128]{1,0:T(8,128)}', space=vmem, size = 0x10000, scoped, tag = 'scratch operand']
  %s0 = inlined_call_operand.vmem [shape: bf16[4,128,256], index: 0, kind: input, shape index: {}]
  %s1 = inlined_call_operand.vmem [shape: bf16[256,128], index: 1, kind: input, shape index: {}]
  %s2 = inlined_call_operand.vmem [shape: f32[1,128], index: 2, kind: input, shape index: {}]
  %s3 = inlined_call_operand.vmem [shape: f32[1,128], index: 3, kind: input, shape index: {}]
  %s4 = inlined_call_operand.vmem [shape: bf16[128,128], index: 4, kind: output, shape index: {}]
  %s5 = sld [smem:[#allocation0]]
  $region61: #{simple_cnn_forward.4} parent=0
    _
  %s7 = ssub.s32 1, %s5
  %s8 = scalar_select 0, %s7, %s5
  loop: start=0, step=1, limit=6
  $region2: #{simple_cnn_forward.4} parent=0 // loop_pre_header
    _
  $region3: #{simple_cnn_forward.4} parent=0 // loop_header
    %s10 = sphi 0, %s14
    %p11 = scmp.ge.s32.totalorder %s10, 6
    %s17 = sphi 0, %s36
    %s18 = sphi 0, %s32
    %s19 = sphi 0, %s28
    %s20 = sphi 0, %s17
    %s21 = sphi 0, %s18
    %s22 = sphi 0, %s19
    %s23 = sphi 0, %s20
    %s24 = sphi 0, %s21
    %s25 = sphi 0, %s22
    %s41 = sphi 0, %s43
    %s44 = sphi 0, %s41
    %s45 = sphi 0, %s44
    %s61 = sphi 0, %s45
    %s67 = sphi 0, %s69
    %s70 = sphi 0, %s67
    %s71 = sphi 0, %s70
    %s87 = sphi 0, %s71
    %s93 = sphi 0, %s95
    %s96 = sphi 0, %s93
    %s97 = sphi 0, %s96
    %s113 = sphi 0, %s97
    %s119 = sphi 0, %s121
    %s122 = sphi 0, %s119
    %s123 = sphi 0, %s122
    %s139 = sphi 0, %s123
    %s147 = sphi 0, %s149
    %s150 = sphi 0, %s147
    %s151 = sphi 0, %s150
    %s167 = sphi 0, %s151
  $region4: #{simple_cnn_forward.4} parent=0 // loop_header_branch
    %13 = sbr.rel (%p11) target = $region8
  $region5: #{simple_cnn_forward.4} parent=0 // loop_body
    %s15 = ssub.s32 %s10, 1
    %s16 = ssub.s32 %s10, 2
    %s26 = sadd.s32 1, %s19
    %p27 = scmp.ge.s32.totalorder %s26, 4
    %s28 = scalar_select %p27, 0, %s26
    %s29 = sadd.s32 1, %s18
    %s30 = scalar_select %p27, %s29, %s18
    %p31 = scmp.ge.s32.totalorder %s30, 1
    %s32 = scalar_select %p31, 0, %s30
    %s33 = sadd.s32 1, %s17
    %s34 = scalar_select %p31, %s33, %s17
    %p35 = scmp.ge.s32.totalorder %s34, 1
    %s36 = scalar_select %p35, 0, %s34
    %s37 = ssub.s32 %s19, %s28
    %s38 = ssub.s32 %s17, %s36
    %s39 = sor.u32 %s37, %s38
    %p40 = scmp.eq.s32.totalorder %s39, 0
    %s42 = sadd.s32 %s41, 1
    %s43 = scalar_select %p40, %s41, %s42
    %p46 = pneg %p40
    %p47 = scmp.eq.s32.totalorder %s10, 3
    %p48 = por %p46, %p47
    %p49 = scmp.ne.s32.totalorder %s41, %s44
    %p50 = scmp.eq.s32.totalorder %s10, 0
    %p51 = por %p49, %p50
    %p52 = scmp.ne.s32.totalorder %s41, %s44
    %p53 = scmp.eq.s32.totalorder %s15, 3
    %p54 = por %p52, %p53
    %p55 = scmp.ne.s32.totalorder %s44, %s45
    %p56 = scmp.eq.s32.totalorder %s15, 0
    %p57 = por %p55, %p56
    %p58 = scmp.ne.s32.totalorder %s44, %s45
    %p59 = scmp.eq.s32.totalorder %s16, 3
    %p60 = por %p58, %p59
    %p62 = scmp.ne.s32.totalorder %s45, %s61
    %p63 = scmp.eq.s32.totalorder %s16, 0
    %p64 = por %p62, %p63
    %s65 = ssub.s32 %s18, %s32
    %p66 = scmp.eq.s32.totalorder %s65, 0
    %s68 = sadd.s32 %s67, 1
    %s69 = scalar_select %p66, %s67, %s68
    %p72 = pneg %p66
    %p73 = scmp.eq.s32.totalorder %s10, 3
    %p74 = por %p72, %p73
    %p75 = scmp.ne.s32.totalorder %s67, %s70
    %p76 = scmp.eq.s32.totalorder %s10, 0
    %p77 = por %p75, %p76
    %p78 = scmp.ne.s32.totalorder %s67, %s70
    %p79 = scmp.eq.s32.totalorder %s15, 3
    %p80 = por %p78, %p79
    %p81 = scmp.ne.s32.totalorder %s70, %s71
    %p82 = scmp.eq.s32.totalorder %s15, 0
    %p83 = por %p81, %p82
    %p84 = scmp.ne.s32.totalorder %s70, %s71
    %p85 = scmp.eq.s32.totalorder %s16, 3
    %p86 = por %p84, %p85
    %p88 = scmp.ne.s32.totalorder %s71, %s87
    %p89 = scmp.eq.s32.totalorder %s16, 0
    %p90 = por %p88, %p89
    %s91 = ssub.s32 %s18, %s32
    %p92 = scmp.eq.s32.totalorder %s91, 0
    %s94 = sadd.s32 %s93, 1
    %s95 = scalar_select %p92, %s93, %s94
    %p98 = pneg %p92
    %p99 = scmp.eq.s32.totalorder %s10, 3
    %p100 = por %p98, %p99
    %p101 = scmp.ne.s32.totalorder %s93, %s96
    %p102 = scmp.eq.s32.totalorder %s10, 0
    %p103 = por %p101, %p102
    %p104 = scmp.ne.s32.totalorder %s93, %s96
    %p105 = scmp.eq.s32.totalorder %s15, 3
    %p106 = por %p104, %p105
    %p107 = scmp.ne.s32.totalorder %s96, %s97
    %p108 = scmp.eq.s32.totalorder %s15, 0
    %p109 = por %p107, %p108
    %p110 = scmp.ne.s32.totalorder %s96, %s97
    %p111 = scmp.eq.s32.totalorder %s16, 3
    %p112 = por %p110, %p111
    %p114 = scmp.ne.s32.totalorder %s97, %s113
    %p115 = scmp.eq.s32.totalorder %s16, 0
    %p116 = por %p114, %p115
    %s117 = ssub.s32 %s18, %s32
    %p118 = scmp.eq.s32.totalorder %s117, 0
    %s120 = sadd.s32 %s119, 1
    %s121 = scalar_select %p118, %s119, %s120
    %p124 = pneg %p118
    %p125 = scmp.eq.s32.totalorder %s10, 3
    %p126 = por %p124, %p125
    %p127 = scmp.ne.s32.totalorder %s119, %s122
    %p128 = scmp.eq.s32.totalorder %s10, 0
    %p129 = por %p127, %p128
    %p130 = scmp.ne.s32.totalorder %s119, %s122
    %p131 = scmp.eq.s32.totalorder %s15, 3
    %p132 = por %p130, %p131
    %p133 = scmp.ne.s32.totalorder %s122, %s123
    %p134 = scmp.eq.s32.totalorder %s15, 0
    %p135 = por %p133, %p134
    %p136 = scmp.ne.s32.totalorder %s122, %s123
    %p137 = scmp.eq.s32.totalorder %s16, 3
    %p138 = por %p136, %p137
    %p140 = scmp.ne.s32.totalorder %s123, %s139
    %p141 = scmp.eq.s32.totalorder %s16, 0
    %p142 = por %p140, %p141
    %s143 = ssub.s32 %s17, %s36
    %s144 = ssub.s32 %s18, %s32
    %s145 = sor.u32 %s143, %s144
    %p146 = scmp.eq.s32.totalorder %s145, 0
    %s148 = sadd.s32 %s147, 1
    %s149 = scalar_select %p146, %s147, %s148
    %p152 = pneg %p146
    %p153 = scmp.eq.s32.totalorder %s10, 3
    %p154 = por %p152, %p153
    %p155 = scmp.ne.s32.totalorder %s147, %s150
    %p156 = scmp.eq.s32.totalorder %s10, 0
    %p157 = por %p155, %p156
    %p158 = scmp.ne.s32.totalorder %s147, %s150
    %p159 = scmp.eq.s32.totalorder %s15, 3
    %p160 = por %p158, %p159
    %p161 = scmp.ne.s32.totalorder %s150, %s151
    %p162 = scmp.eq.s32.totalorder %s15, 0
    %p163 = por %p161, %p162
    %p164 = scmp.ne.s32.totalorder %s150, %s151
    %p165 = scmp.eq.s32.totalorder %s16, 3
    %p166 = por %p164, %p165
    %p168 = scmp.ne.s32.totalorder %s151, %s167
    %p169 = scmp.eq.s32.totalorder %s16, 0
    %p170 = por %p168, %p169
    %p171 = scmp.le.s32.totalorder 1, %s10
    %p172 = scmp.lt.s32.totalorder %s10, 5
    %p173 = pnand %p171, %p172
    %p174 = pneg %p173
    // Predicated region
    $region9: #{simple_cnn_forward.4} parent=5 // pred_check
      _
    $region10: #{simple_cnn_forward.4} parent=5 // pred_check_branch
      %176 = sbr.rel (%p173) target = $region12
    $region11: #{simple_cnn_forward.4} parent=5 // pred_region
      %s177 = ssub.s32 %s10, 1
      // Predicated region
      $region13: #{simple_cnn_forward.4} parent=11 // pred_check
        %p178 = pneg %p83
      $region14: #{simple_cnn_forward.4} parent=11 // pred_check_branch
        %180 = sbr.rel (%p178) target = $region16
      $region15: #{simple_cnn_forward.4} parent=11 // pred_region
        %p181 = scmp.lt.s32.totalorder %s21, 0
        %s182 = scalar_select %p181, %s21, 0
        %s183 = smul.addr %s182, 4
        %s184 = scalar_lea.vmem %s1, %s183
      $region16: #{simple_cnn_forward.4} parent=11 // pred_fallthru
        _
      // Predicated region
      $region17: #{simple_cnn_forward.4} parent=11 // pred_check
        %p185 = pneg %p109
      $region18: #{simple_cnn_forward.4} parent=11 // pred_check_branch
        %187 = sbr.rel (%p185) target = $region20
      $region19: #{simple_cnn_forward.4} parent=11 // pred_region
        %p188 = scmp.lt.s32.totalorder %s21, 0
        %s189 = scalar_select %p188, %s21, 0
        %s190 = scalar_lea.vmem %s2, %s189
      $region20: #{simple_cnn_forward.4} parent=11 // pred_fallthru
        _
      // Predicated region
      $region21: #{simple_cnn_forward.4} parent=11 // pred_check
        %p191 = pneg %p135
      $region22: #{simple_cnn_forward.4} parent=11 // pred_check_branch
        %193 = sbr.rel (%p191) target = $region24
      $region23: #{simple_cnn_forward.4} parent=11 // pred_region
        %p194 = scmp.lt.s32.totalorder %s21, 0
        %s195 = scalar_select %p194, %s21, 0
        %s196 = scalar_lea.vmem %s3, %s195
      $region24: #{simple_cnn_forward.4} parent=11 // pred_fallthru
        _
    $region12: #{simple_cnn_forward.4} parent=5 // pred_fallthru
      _
    %p197 = scmp.lt.s32.totalorder %s10, 4
    // Predicated region
    $region25: #{simple_cnn_forward.4} parent=5 // pred_check
      %p198 = pneg %p197
    $region26: #{simple_cnn_forward.4} parent=5 // pred_check_branch
      %200 = sbr.rel (%p198) target = $region28
    $region27: #{simple_cnn_forward.4} parent=5 // pred_region
      // Predicated region
      $region29: #{simple_cnn_forward.4} parent=27 // pred_check
        %p201 = pneg %p51
      $region30: #{simple_cnn_forward.4} parent=27 // pred_check_branch
        %203 = sbr.rel (%p201) target = $region32
      $region31: #{simple_cnn_forward.4} parent=27 // pred_region
        %s204 = smul.u32 16, %s17
        %p205 = scmp.lt.s32.totalorder %s19, 3
        %s206 = scalar_select %p205, %s19, 3
        %p207 = scmp.lt.s32.totalorder %s204, 15
        %s208 = scalar_select %p207, %s204, 15
        %s209 = smul.addr %s208, 2
        %s210 = smul.addr %s206, 32
        %s211 = sadd.s32 %s209, %s210
        %s212 = smul.addr %s211, 4
        %s213 = scalar_lea.vmem %s0, %s212
        %s214 = smul.u32 16, %s17
      $region32: #{simple_cnn_forward.4} parent=27 // pred_fallthru
        _
    $region28: #{simple_cnn_forward.4} parent=5 // pred_fallthru
      _
    %p215 = scmp.le.s32.totalorder 1, %s10
    %p216 = scmp.lt.s32.totalorder %s10, 5
    %p217 = pnand %p215, %p216
    %p218 = pneg %p217
    // Predicated region
    $region33: #{simple_cnn_forward.4} parent=5 // pred_check
      _
    $region34: #{simple_cnn_forward.4} parent=5 // pred_check_branch
      %220 = sbr.rel (%p217) target = $region36
    $region35: #{simple_cnn_forward.4} parent=5 // pred_region
      %s221 = ssub.s32 %s10, 1
      %s222 = smul.u32 16, %s20
      %p223 = scmp.lt.s32.totalorder %s22, 3
      %s224 = scalar_select %p223, %s22, 3
      %p225 = scmp.lt.s32.totalorder %s222, 15
      %s226 = scalar_select %p225, %s222, 15
      %s227 = smul.addr %s226, 2
      %s228 = smul.addr %s224, 32
      %s229 = sadd.s32 %s227, %s228
      %s230 = smul.addr %s229, 4
      %s231 = scalar_lea.vmem %s0, %s230
      %p232 = pneg %p57
      %p233 = pneg %p54
      %p234 = scmp.lt.s32.totalorder %s21, 0
      %s235 = scalar_select %p234, %s21, 0
      %s236 = smul.addr %s235, 4
      %s237 = scalar_lea.vmem %s1, %s236
      %p238 = pneg %p83
      %p239 = pneg %p80
      %p240 = scmp.lt.s32.totalorder %s21, 0
      %s241 = scalar_select %p240, %s21, 0
      %s242 = scalar_lea.vmem %s2, %s241
      %p243 = pneg %p109
      %p244 = pneg %p106
      %p245 = scmp.lt.s32.totalorder %s21, 0
      %s246 = scalar_select %p245, %s21, 0
      %s247 = scalar_lea.vmem %s3, %s246
      %p248 = pneg %p135
      %p249 = pneg %p132
      %p250 = pneg %p163
      %p251 = pneg %p160
      %s252 = smul.u32 16, %s20
      %p253 = scmp.lt.s32.totalorder %s252, 15
      %s254 = scalar_select %p253, %s252, 15
      %p255 = scmp.lt.s32.totalorder %s21, 0
      %s256 = scalar_select %p255, %s21, 0
      %s257 = sadd.s32 %s256, %s254
      %s258 = smul.addr %s257, 4
      %s259 = scalar_lea.vmem %s4, %s258
      %s260 = smul.u32 16, %s20
      %p261 = scmp.lt.s32.totalorder %s22, 3
      %s262 = scalar_select %p261, %s22, 3
      %p263 = scmp.lt.s32.totalorder %s260, 15
      %s264 = scalar_select %p263, %s260, 15
      %s265 = smul.addr %s264, 2
      %s266 = smul.addr %s262, 32
      %s267 = sadd.s32 %s265, %s266
      %s268 = smul.addr %s267, 4
      %s269 = scalar_lea.vmem %s0, %s268
      %s270 = smul.u32 16, %s20
      %p271 = scmp.lt.s32.totalorder %s21, 0
      %s272 = scalar_select %p271, %s21, 0
      %s273 = smul.addr %s272, 4
      %s274 = scalar_lea.vmem %s1, %s273
      %p275 = scmp.lt.s32.totalorder %s21, 0
      %s276 = scalar_select %p275, %s21, 0
      %s277 = scalar_lea.vmem %s2, %s276
      %p278 = scmp.lt.s32.totalorder %s21, 0
      %s279 = scalar_select %p278, %s21, 0
      %s280 = scalar_lea.vmem %s3, %s279
      %s281 = smul.u32 16, %s20
      %p282 = scmp.lt.s32.totalorder %s281, 15
      %s283 = scalar_select %p282, %s281, 15
      %p284 = scmp.lt.s32.totalorder %s21, 0
      %s285 = scalar_select %p284, %s21, 0
      %s286 = sadd.s32 %s285, %s283
      %s287 = smul.addr %s286, 4
      %s288 = scalar_lea.vmem %s4, %s287
      %s289 = smul.u32 16, %s20
      %v291 = vld [vmem:[%s269] sm:$0xff]
      %v292 = vld [vmem:[%s269 + $0x8] sm:$0xff]
      %v293 = vld [vmem:[%s269 + $0x10] sm:$0xff]
      %v294 = vld [vmem:[%s269 + $0x18] sm:$0xff]
      %v295 = vld [vmem:[%s269 + $0x20] sm:$0xff]
      %v296 = vld [vmem:[%s269 + $0x28] sm:$0xff]
      %v297 = vld [vmem:[%s269 + $0x30] sm:$0xff]
      %v298 = vld [vmem:[%s269 + $0x38] sm:$0xff]
      %v299 = vld [vmem:[%s269 + $0x40] sm:$0xff]
      %v300 = vld [vmem:[%s269 + $0x48] sm:$0xff]
      %v301 = vld [vmem:[%s269 + $0x50] sm:$0xff]
      %v302 = vld [vmem:[%s269 + $0x58] sm:$0xff]
      %v303 = vld [vmem:[%s269 + $0x60] sm:$0xff]
      %v304 = vld [vmem:[%s269 + $0x68] sm:$0xff]
      %v305 = vld [vmem:[%s269 + $0x70] sm:$0xff]
      %v306 = vld [vmem:[%s269 + $0x78] sm:$0xff]
      %v307 = vld [vmem:[%s274] sm:$0xf]
      %v308 = vld [vmem:[%s274 + $0x4] sm:$0xf]
      %v309 = vld [vmem:[%s274 + $0x8] sm:$0xf]
      %v310 = vld [vmem:[%s274 + $0xc] sm:$0xf]
      %v311 = vld [vmem:[%s274 + $0x10] sm:$0xf]
      %v312 = vld [vmem:[%s274 + $0x14] sm:$0xf]
      %v313 = vld [vmem:[%s274 + $0x18] sm:$0xf]
      %v314 = vld [vmem:[%s274 + $0x1c] sm:$0xf]
      %v315 = vld [vmem:[%s274 + $0x20] sm:$0xf]
      %v316 = vld [vmem:[%s274 + $0x24] sm:$0xf]
      %v317 = vld [vmem:[%s274 + $0x28] sm:$0xf]
      %v318 = vld [vmem:[%s274 + $0x2c] sm:$0xf]
      %v319 = vld [vmem:[%s274 + $0x30] sm:$0xf]
      %v320 = vld [vmem:[%s274 + $0x34] sm:$0xf]
      %v321 = vld [vmem:[%s274 + $0x38] sm:$0xf]
      %v322 = vld [vmem:[%s274 + $0x3c] sm:$0xf]
      %v323 = vld [vmem:[%s274 + $0x40] sm:$0xf]
      %v324 = vld [vmem:[%s274 + $0x44] sm:$0xf]
      %v325 = vld [vmem:[%s274 + $0x48] sm:$0xf]
      %v326 = vld [vmem:[%s274 + $0x4c] sm:$0xf]
      %v327 = vld [vmem:[%s274 + $0x50] sm:$0xf]
      %v328 = vld [vmem:[%s274 + $0x54] sm:$0xf]
      %v329 = vld [vmem:[%s274 + $0x58] sm:$0xf]
      %v330 = vld [vmem:[%s274 + $0x5c] sm:$0xf]
      %v331 = vld [vmem:[%s274 + $0x60] sm:$0xf]
      %v332 = vld [vmem:[%s274 + $0x64] sm:$0xf]
      %v333 = vld [vmem:[%s274 + $0x68] sm:$0xf]
      %v334 = vld [vmem:[%s274 + $0x6c] sm:$0xf]
      %v335 = vld [vmem:[%s274 + $0x70] sm:$0xf]
      %v336 = vld [vmem:[%s274 + $0x74] sm:$0xf]
      %v337 = vld [vmem:[%s274 + $0x78] sm:$0xf]
      %v338 = vld [vmem:[%s274 + $0x7c] sm:$0xf]
      %v355 = vunpack.c.l.b16 %v291
      %v356 = vunpack.c.h.b16 %v291
      %v357 = vunpack.c.l.b16 %v292
      %v358 = vunpack.c.h.b16 %v292
      %v359 = vunpack.c.l.b16 %v293
      %v360 = vunpack.c.h.b16 %v293
      %v361 = vunpack.c.l.b16 %v294
      %v362 = vunpack.c.h.b16 %v294
      %v363 = vunpack.c.l.b16 %v295
      %v364 = vunpack.c.h.b16 %v295
      %v365 = vunpack.c.l.b16 %v296
      %v366 = vunpack.c.h.b16 %v296
      %v367 = vunpack.c.l.b16 %v297
      %v368 = vunpack.c.h.b16 %v297
      %v369 = vunpack.c.l.b16 %v298
      %v370 = vunpack.c.h.b16 %v298
      %v371 = vunpack.c.l.b16 %v299
      %v372 = vunpack.c.h.b16 %v299
      %v373 = vunpack.c.l.b16 %v300
      %v374 = vunpack.c.h.b16 %v300
      %v375 = vunpack.c.l.b16 %v301
      %v376 = vunpack.c.h.b16 %v301
      %v377 = vunpack.c.l.b16 %v302
      %v378 = vunpack.c.h.b16 %v302
      %v379 = vunpack.c.l.b16 %v303
      %v380 = vunpack.c.h.b16 %v303
      %v381 = vunpack.c.l.b16 %v304
      %v382 = vunpack.c.h.b16 %v304
      %v383 = vunpack.c.l.b16 %v305
      %v384 = vunpack.c.h.b16 %v305
      %v385 = vunpack.c.l.b16 %v306
      %v386 = vunpack.c.h.b16 %v306
      %v387 = vpack.c.b16 %v357, %v355
      %v388 = vpack.c.b16 %v358, %v356
      %v389 = vpack.c.b16 %v361, %v359
      %v390 = vpack.c.b16 %v362, %v360
      %v391 = vpack.c.b16 %v365, %v363
      %v392 = vpack.c.b16 %v366, %v364
      %v393 = vpack.c.b16 %v369, %v367
      %v394 = vpack.c.b16 %v370, %v368
      %v395 = vpack.c.b16 %v373, %v371
      %v396 = vpack.c.b16 %v374, %v372
      %v397 = vpack.c.b16 %v377, %v375
      %v398 = vpack.c.b16 %v378, %v376
      %v399 = vpack.c.b16 %v381, %v379
      %v400 = vpack.c.b16 %v382, %v380
      %v401 = vpack.c.b16 %v385, %v383
      %v402 = vpack.c.b16 %v386, %v384
      %v451 = vunpack.c.l.b16 %v307
      %v452 = vunpack.c.l.b16 %v308
      %v453 = vunpack.c.l.b16 %v309
      %v454 = vunpack.c.l.b16 %v310
      %v455 = vunpack.c.l.b16 %v311
      %v456 = vunpack.c.l.b16 %v312
      %v457 = vunpack.c.l.b16 %v313
      %v458 = vunpack.c.l.b16 %v314
      %v459 = vunpack.c.l.b16 %v315
      %v460 = vunpack.c.l.b16 %v316
      %v461 = vunpack.c.l.b16 %v317
      %v462 = vunpack.c.l.b16 %v318
      %v463 = vunpack.c.l.b16 %v319
      %v464 = vunpack.c.l.b16 %v320
      %v465 = vunpack.c.l.b16 %v321
      %v466 = vunpack.c.l.b16 %v322
      %v467 = vunpack.c.l.b16 %v323
      %v468 = vunpack.c.l.b16 %v324
      %v469 = vunpack.c.l.b16 %v325
      %v470 = vunpack.c.l.b16 %v326
      %v471 = vunpack.c.l.b16 %v327
      %v472 = vunpack.c.l.b16 %v328
      %v473 = vunpack.c.l.b16 %v329
      %v474 = vunpack.c.l.b16 %v330
      %v475 = vunpack.c.l.b16 %v331
      %v476 = vunpack.c.l.b16 %v332
      %v477 = vunpack.c.l.b16 %v333
      %v478 = vunpack.c.l.b16 %v334
      %v479 = vunpack.c.l.b16 %v335
      %v480 = vunpack.c.l.b16 %v336
      %v481 = vunpack.c.l.b16 %v337
      %v482 = vunpack.c.l.b16 %v338
      %v483 = vpack.c.b16 %v452, %v451
      %v484 = vpack.c.b16 %v454, %v453
      %v485 = vpack.c.b16 %v456, %v455
      %v486 = vpack.c.b16 %v458, %v457
      %v487 = vpack.c.b16 %v460, %v459
      %v488 = vpack.c.b16 %v462, %v461
      %v489 = vpack.c.b16 %v464, %v463
      %v490 = vpack.c.b16 %v466, %v465
      %v491 = vpack.c.b16 %v468, %v467
      %v492 = vpack.c.b16 %v470, %v469
      %v493 = vpack.c.b16 %v472, %v471
      %v494 = vpack.c.b16 %v474, %v473
      %v495 = vpack.c.b16 %v476, %v475
      %v496 = vpack.c.b16 %v478, %v477
      %v497 = vpack.c.b16 %v480, %v479
      %v498 = vpack.c.b16 %v482, %v481
      %515 = vmatprep.subr.bf16.mxu0 0
      %516 = vmatpush1.bf16.msra.mxu0 %v483
      %517 = vmatprep.subr.bf16.mxu0 0
      %518 = vmatpush1.bf16.msra.mxu0 %v484
      %519 = vmatprep.subr.bf16.mxu0 0
      %520 = vmatpush1.bf16.msra.mxu0 %v485
      %521 = vmatprep.subr.bf16.mxu0 0
      %522 = vmatpush1.bf16.msra.mxu0 %v486
      %523 = vmatprep.subr.bf16.mxu0 0
      %524 = vmatpush1.bf16.msra.mxu0 %v487
      %525 = vmatprep.subr.bf16.mxu0 0
      %526 = vmatpush1.bf16.msra.mxu0 %v488
      %527 = vmatprep.subr.bf16.mxu0 0
      %528 = vmatpush1.bf16.msra.mxu0 %v489
      %529 = vmatprep.subr.bf16.mxu0 0
      %530 = vmatpush1.bf16.msra.mxu0 %v490
      %531 = vmatprep.subr.bf16.mxu0 0
      %532 = vmatpush1.bf16.msra.mxu0 %v491
      %533 = vmatprep.subr.bf16.mxu0 0
      %534 = vmatpush1.bf16.msra.mxu0 %v492
      %535 = vmatprep.subr.bf16.mxu0 0
      %536 = vmatpush1.bf16.msra.mxu0 %v493
      %537 = vmatprep.subr.bf16.mxu0 0
      %538 = vmatpush1.bf16.msra.mxu0 %v494
      %539 = vmatprep.subr.bf16.mxu0 0
      %540 = vmatpush1.bf16.msra.mxu0 %v495
      %541 = vmatprep.subr.bf16.mxu0 0
      %542 = vmatpush1.bf16.msra.mxu0 %v496
      %543 = vmatprep.subr.bf16.mxu0 0
      %544 = vmatpush1.bf16.msra.mxu0 %v497
      %545 = vmatprep.subr.bf16.mxu0 0
      %546 = vmatpush1.bf16.msra.mxu0 %v498
      %547 = vmatprep.mubr.bf16.mxu0 %v388
      %548 = vmatmul.mubr.bf16.gmra.mrb[0].mxu0 %v387
      %v549 = vpop.f32.mrb[0].mxu0
      %v550 = vadd.f32 0.0, %v549
      %v551 = vpop.f32.mrb[0].mxu0
      %v552 = vpop.f32.mrb[0].mxu0
      %v553 = vadd.f32 0.0, %v552
      %v554 = vpop.f32.mrb[0].mxu0
      %555 = vmatprep.mubr.bf16.mxu0 %v390
      %556 = vmatmul.mubr.bf16.gmra.mrb[0].mxu0 %v389
      %v557 = vpop.f32.mrb[0].mxu0
      %v558 = vadd.f32 0.0, %v557
      %v559 = vpop.f32.mrb[0].mxu0
      %v560 = vpop.f32.mrb[0].mxu0
      %v561 = vadd.f32 0.0, %v560
      %v562 = vpop.f32.mrb[0].mxu0
      %563 = vmatprep.mubr.bf16.mxu0 %v392
      %564 = vmatmul.mubr.bf16.gmra.mrb[0].mxu0 %v391
      %v565 = vpop.f32.mrb[0].mxu0
      %v566 = vadd.f32 0.0, %v565
      %v567 = vpop.f32.mrb[0].mxu0
      %v568 = vpop.f32.mrb[0].mxu0
      %v569 = vadd.f32 0.0, %v568
      %v570 = vpop.f32.mrb[0].mxu0
      %571 = vmatprep.mubr.bf16.mxu0 %v394
      %572 = vmatmul.mubr.bf16.gmra.mrb[0].mxu0 %v393
      %v573 = vpop.f32.mrb[0].mxu0
      %v574 = vadd.f32 0.0, %v573
      %v575 = vpop.f32.mrb[0].mxu0
      %v576 = vpop.f32.mrb[0].mxu0
      %v577 = vadd.f32 0.0, %v576
      %v578 = vpop.f32.mrb[0].mxu0
      %579 = vmatprep.mubr.bf16.mxu0 %v396
      %580 = vmatmul.mubr.bf16.gmra.mrb[0].mxu0 %v395
      %v581 = vpop.f32.mrb[0].mxu0
      %v582 = vadd.f32 0.0, %v581
      %v583 = vpop.f32.mrb[0].mxu0
      %v584 = vpop.f32.mrb[0].mxu0
      %v585 = vadd.f32 0.0, %v584
      %v586 = vpop.f32.mrb[0].mxu0
      %587 = vmatprep.mubr.bf16.mxu0 %v398
      %588 = vmatmul.mubr.bf16.gmra.mrb[0].mxu0 %v397
      %v589 = vpop.f32.mrb[0].mxu0
      %v590 = vadd.f32 0.0, %v589
      %v591 = vpop.f32.mrb[0].mxu0
      %v592 = vpop.f32.mrb[0].mxu0
      %v593 = vadd.f32 0.0, %v592
      %v594 = vpop.f32.mrb[0].mxu0
      %595 = vmatprep.mubr.bf16.mxu0 %v400
      %596 = vmatmul.mubr.bf16.gmra.mrb[0].mxu0 %v399
      %v597 = vpop.f32.mrb[0].mxu0
      %v598 = vadd.f32 0.0, %v597
      %v599 = vpop.f32.mrb[0].mxu0
      %v600 = vpop.f32.mrb[0].mxu0
      %v601 = vadd.f32 0.0, %v600
      %v602 = vpop.f32.mrb[0].mxu0
      %603 = vmatprep.mubr.bf16.mxu0 %v402
      %604 = vmatmul.mubr.bf16.gmra.mrb[0].mxu0 %v401
      %v605 = vpop.f32.mrb[0].mxu0
      %v606 = vadd.f32 0.0, %v605
      %v607 = vpop.f32.mrb[0].mxu0
      %v608 = vpop.f32.mrb[0].mxu0
      %v609 = vadd.f32 0.0, %v608
      %v610 = vpop.f32.mrb[0].mxu0
      %611 = vdwg.mxu0
      %p612 = scmp.eq.s32.totalorder %s22, 0
      // Predicated region
      $region37: #{simple_cnn_forward.4} parent=35 // pred_check
        %p613 = pneg %p612
      $region38: #{simple_cnn_forward.4} parent=35 // pred_check_branch
        %615 = sbr.rel (%p613) target = $region40
      $region39: #{simple_cnn_forward.4} parent=35 // pred_region
        %616 = vst [vmem:[#allocation2] sm:$0xff] %v550
        %617 = vst [vmem:[#allocation2 + $0x8] sm:$0xff] %v553
        %618 = vst [vmem:[#allocation2 + $0x10] sm:$0xff] %v558
        %619 = vst [vmem:[#allocation2 + $0x18] sm:$0xff] %v561
        %620 = vst [vmem:[#allocation2 + $0x20] sm:$0xff] %v566
        %621 = vst [vmem:[#allocation2 + $0x28] sm:$0xff] %v569
        %622 = vst [vmem:[#allocation2 + $0x30] sm:$0xff] %v574
        %623 = vst [vmem:[#allocation2 + $0x38] sm:$0xff] %v577
        %624 = vst [vmem:[#allocation2 + $0x40] sm:$0xff] %v582
        %625 = vst [vmem:[#allocation2 + $0x48] sm:$0xff] %v585
        %626 = vst [vmem:[#allocation2 + $0x50] sm:$0xff] %v590
        %627 = vst [vmem:[#allocation2 + $0x58] sm:$0xff] %v593
        %628 = vst [vmem:[#allocation2 + $0x60] sm:$0xff] %v598
        %629 = vst [vmem:[#allocation2 + $0x68] sm:$0xff] %v601
        %630 = vst [vmem:[#allocation2 + $0x70] sm:$0xff] %v606
        %631 = vst [vmem:[#allocation2 + $0x78] sm:$0xff] %v609
      $region40: #{simple_cnn_forward.4} parent=35 // pred_fallthru
        _
      %p632 = scmp.gt.s32.totalorder %s22, 0
      // Predicated region
      $region41: #{simple_cnn_forward.4} parent=35 // pred_check
        %p633 = pneg %p632
      $region42: #{simple_cnn_forward.4} parent=35 // pred_check_branch
        %635 = sbr.rel (%p633) target = $region44
      $region43: #{simple_cnn_forward.4} parent=35 // pred_region
        %v636 = vld [vmem:[#allocation2] sm:$0xff]
        %v637 = vld [vmem:[#allocation2 + $0x8] sm:$0xff]
        %v638 = vld [vmem:[#allocation2 + $0x10] sm:$0xff]
        %v639 = vld [vmem:[#allocation2 + $0x18] sm:$0xff]
        %v640 = vld [vmem:[#allocation2 + $0x20] sm:$0xff]
        %v641 = vld [vmem:[#allocation2 + $0x28] sm:$0xff]
        %v642 = vld [vmem:[#allocation2 + $0x30] sm:$0xff]
        %v643 = vld [vmem:[#allocation2 + $0x38] sm:$0xff]
        %v644 = vld [vmem:[#allocation2 + $0x40] sm:$0xff]
        %v645 = vld [vmem:[#allocation2 + $0x48] sm:$0xff]
        %v646 = vld [vmem:[#allocation2 + $0x50] sm:$0xff]
        %v647 = vld [vmem:[#allocation2 + $0x58] sm:$0xff]
        %v648 = vld [vmem:[#allocation2 + $0x60] sm:$0xff]
        %v649 = vld [vmem:[#allocation2 + $0x68] sm:$0xff]
        %v650 = vld [vmem:[#allocation2 + $0x70] sm:$0xff]
        %v651 = vld [vmem:[#allocation2 + $0x78] sm:$0xff]
        %v652 = vmax.f32 %v636, %v550
        %v653 = vmax.f32 %v637, %v553
        %v654 = vmax.f32 %v638, %v558
        %v655 = vmax.f32 %v639, %v561
        %v656 = vmax.f32 %v640, %v566
        %v657 = vmax.f32 %v641, %v569
        %v658 = vmax.f32 %v642, %v574
        %v659 = vmax.f32 %v643, %v577
        %v660 = vmax.f32 %v644, %v582
        %v661 = vmax.f32 %v645, %v585
        %v662 = vmax.f32 %v646, %v590
        %v663 = vmax.f32 %v647, %v593
        %v664 = vmax.f32 %v648, %v598
        %v665 = vmax.f32 %v649, %v601
        %v666 = vmax.f32 %v650, %v606
        %v667 = vmax.f32 %v651, %v609
        %668 = vst [vmem:[#allocation2] sm:$0xff] %v652
        %669 = vst [vmem:[#allocation2 + $0x8] sm:$0xff] %v653
        %670 = vst [vmem:[#allocation2 + $0x10] sm:$0xff] %v654
        %671 = vst [vmem:[#allocation2 + $0x18] sm:$0xff] %v655
        %672 = vst [vmem:[#allocation2 + $0x20] sm:$0xff] %v656
        %673 = vst [vmem:[#allocation2 + $0x28] sm:$0xff] %v657
        %674 = vst [vmem:[#allocation2 + $0x30] sm:$0xff] %v658
        %675 = vst [vmem:[#allocation2 + $0x38] sm:$0xff] %v659
        %676 = vst [vmem:[#allocation2 + $0x40] sm:$0xff] %v660
        %677 = vst [vmem:[#allocation2 + $0x48] sm:$0xff] %v661
        %678 = vst [vmem:[#allocation2 + $0x50] sm:$0xff] %v662
        %679 = vst [vmem:[#allocation2 + $0x58] sm:$0xff] %v663
        %680 = vst [vmem:[#allocation2 + $0x60] sm:$0xff] %v664
        %681 = vst [vmem:[#allocation2 + $0x68] sm:$0xff] %v665
        %682 = vst [vmem:[#allocation2 + $0x70] sm:$0xff] %v666
        %683 = vst [vmem:[#allocation2 + $0x78] sm:$0xff] %v667
      $region44: #{simple_cnn_forward.4} parent=35 // pred_fallthru
        _
      %p684 = scmp.eq.s32.totalorder %s22, 3
      // Predicated region
      $region45: #{simple_cnn_forward.4} parent=35 // pred_check
        %p685 = pneg %p684
      $region46: #{simple_cnn_forward.4} parent=35 // pred_check_branch
        %687 = sbr.rel (%p685) target = $region48
      $region47: #{simple_cnn_forward.4} parent=35 // pred_region
        %v688 = vld [vmem:[#allocation2] sm:$0xff]
        %v689 = vld [vmem:[#allocation2 + $0x8] sm:$0xff]
        %v690 = vld [vmem:[#allocation2 + $0x10] sm:$0xff]
        %v691 = vld [vmem:[#allocation2 + $0x18] sm:$0xff]
        %v692 = vld [vmem:[#allocation2 + $0x20] sm:$0xff]
        %v693 = vld [vmem:[#allocation2 + $0x28] sm:$0xff]
        %v694 = vld [vmem:[#allocation2 + $0x30] sm:$0xff]
        %v695 = vld [vmem:[#allocation2 + $0x38] sm:$0xff]
        %v696 = vld [vmem:[#allocation2 + $0x40] sm:$0xff]
        %v697 = vld [vmem:[#allocation2 + $0x48] sm:$0xff]
        %v698 = vld [vmem:[#allocation2 + $0x50] sm:$0xff]
        %v699 = vld [vmem:[#allocation2 + $0x58] sm:$0xff]
        %v700 = vld [vmem:[#allocation2 + $0x60] sm:$0xff]
        %v701 = vld [vmem:[#allocation2 + $0x68] sm:$0xff]
        %v702 = vld [vmem:[#allocation2 + $0x70] sm:$0xff]
        %v703 = vld [vmem:[#allocation2 + $0x78] sm:$0xff]
        %v704 = vld [vmem:[%s277] sm:$0x1]
        %v706 = vlaneseq
        %v707 = vshrl.u32 %v706, 7
        %v708 = vsub.s32 0, %v707
        %v709 = vrot.slane %v704, %v708
        %v711 = vmul.f32 %v688, %v709
        %v712 = vmul.f32 %v689, %v709
        %v713 = vmul.f32 %v690, %v709
        %v714 = vmul.f32 %v691, %v709
        %v715 = vmul.f32 %v692, %v709
        %v716 = vmul.f32 %v693, %v709
        %v717 = vmul.f32 %v694, %v709
        %v718 = vmul.f32 %v695, %v709
        %v719 = vmul.f32 %v696, %v709
        %v720 = vmul.f32 %v697, %v709
        %v721 = vmul.f32 %v698, %v709
        %v722 = vmul.f32 %v699, %v709
        %v723 = vmul.f32 %v700, %v709
        %v724 = vmul.f32 %v701, %v709
        %v725 = vmul.f32 %v702, %v709
        %v726 = vmul.f32 %v703, %v709
        %v727 = vld [vmem:[%s280] sm:$0x1]
        %v729 = vlaneseq
        %v730 = vshrl.u32 %v729, 7
        %v731 = vsub.s32 0, %v730
        %v732 = vrot.slane %v727, %v731
        %v734 = vadd.f32 %v711, %v732
        %v735 = vadd.f32 %v712, %v732
        %v736 = vadd.f32 %v713, %v732
        %v737 = vadd.f32 %v714, %v732
        %v738 = vadd.f32 %v715, %v732
        %v739 = vadd.f32 %v716, %v732
        %v740 = vadd.f32 %v717, %v732
        %v741 = vadd.f32 %v718, %v732
        %v742 = vadd.f32 %v719, %v732
        %v743 = vadd.f32 %v720, %v732
        %v744 = vadd.f32 %v721, %v732
        %v745 = vadd.f32 %v722, %v732
        %v746 = vadd.f32 %v723, %v732
        %v747 = vadd.f32 %v724, %v732
        %v748 = vadd.f32 %v725, %v732
        %v749 = vadd.f32 %v726, %v732
        %v750 = vmax.f32 %v734, 0.0
        %v751 = vmax.f32 %v735, 0.0
        %v752 = vmax.f32 %v736, 0.0
        %v753 = vmax.f32 %v737, 0.0
        %v754 = vmax.f32 %v738, 0.0
        %v755 = vmax.f32 %v739, 0.0
        %v756 = vmax.f32 %v740, 0.0
        %v757 = vmax.f32 %v741, 0.0
        %v758 = vmax.f32 %v742, 0.0
        %v759 = vmax.f32 %v743, 0.0
        %v760 = vmax.f32 %v744, 0.0
        %v761 = vmax.f32 %v745, 0.0
        %v762 = vmax.f32 %v746, 0.0
        %v763 = vmax.f32 %v747, 0.0
        %v764 = vmax.f32 %v748, 0.0
        %v765 = vmax.f32 %v749, 0.0
        %v766 = vpack.c.bf16 %v751, %v750
        %v767 = vpack.c.bf16 %v753, %v752
        %v768 = vpack.c.bf16 %v755, %v754
        %v769 = vpack.c.bf16 %v757, %v756
        %v770 = vpack.c.bf16 %v759, %v758
        %v771 = vpack.c.bf16 %v761, %v760
        %v772 = vpack.c.bf16 %v763, %v762
        %v773 = vpack.c.bf16 %v765, %v764
        %v782 = vunpack.c.l.b16 %v766
        %v783 = vunpack.c.h.b16 %v766
        %v784 = vunpack.c.l.b16 %v767
        %v785 = vunpack.c.h.b16 %v767
        %v786 = vunpack.c.l.b16 %v768
        %v787 = vunpack.c.h.b16 %v768
        %v788 = vunpack.c.l.b16 %v769
        %v789 = vunpack.c.h.b16 %v769
        %v790 = vunpack.c.l.b16 %v770
        %v791 = vunpack.c.h.b16 %v770
        %v792 = vunpack.c.l.b16 %v771
        %v793 = vunpack.c.h.b16 %v771
        %v794 = vunpack.c.l.b16 %v772
        %v795 = vunpack.c.h.b16 %v772
        %v796 = vunpack.c.l.b16 %v773
        %v797 = vunpack.c.h.b16 %v773
        %v798 = vpack.c.b16 %v782, %v782
        %v799 = vpack.c.b16 %v783, %v783
        %v800 = vpack.c.b16 %v784, %v784
        %v801 = vpack.c.b16 %v785, %v785
        %v802 = vpack.c.b16 %v786, %v786
        %v803 = vpack.c.b16 %v787, %v787
        %v804 = vpack.c.b16 %v788, %v788
        %v805 = vpack.c.b16 %v789, %v789
        %v806 = vpack.c.b16 %v790, %v790
        %v807 = vpack.c.b16 %v791, %v791
        %v808 = vpack.c.b16 %v792, %v792
        %v809 = vpack.c.b16 %v793, %v793
        %v810 = vpack.c.b16 %v794, %v794
        %v811 = vpack.c.b16 %v795, %v795
        %v812 = vpack.c.b16 %v796, %v796
        %v813 = vpack.c.b16 %v797, %v797
        %830 = vst [vmem:[%s288] sm:$0xf] %v798
        %831 = vst [vmem:[%s288 + $0x4] sm:$0xf] %v799
        %832 = vst [vmem:[%s288 + $0x8] sm:$0xf] %v800
        %833 = vst [vmem:[%s288 + $0xc] sm:$0xf] %v801
        %834 = vst [vmem:[%s288 + $0x10] sm:$0xf] %v802
        %835 = vst [vmem:[%s288 + $0x14] sm:$0xf] %v803
        %836 = vst [vmem:[%s288 + $0x18] sm:$0xf] %v804
        %837 = vst [vmem:[%s288 + $0x1c] sm:$0xf] %v805
        %838 = vst [vmem:[%s288 + $0x20] sm:$0xf] %v806
        %839 = vst [vmem:[%s288 + $0x24] sm:$0xf] %v807
        %840 = vst [vmem:[%s288 + $0x28] sm:$0xf] %v808
        %841 = vst [vmem:[%s288 + $0x2c] sm:$0xf] %v809
        %842 = vst [vmem:[%s288 + $0x30] sm:$0xf] %v810
        %843 = vst [vmem:[%s288 + $0x34] sm:$0xf] %v811
        %844 = vst [vmem:[%s288 + $0x38] sm:$0xf] %v812
        %845 = vst [vmem:[%s288 + $0x3c] sm:$0xf] %v813
      $region48: #{simple_cnn_forward.4} parent=35 // pred_fallthru
        _
      %s846 = smul.u32 16, %s20
      %p847 = scmp.lt.s32.totalorder %s846, 15
      %s848 = scalar_select %p847, %s846, 15
      %p849 = scmp.lt.s32.totalorder %s21, 0
      %s850 = scalar_select %p849, %s21, 0
      %s851 = sadd.s32 %s850, %s848
      %s852 = smul.addr %s851, 4
      %s853 = scalar_lea.vmem %s4, %s852
      // Predicated region
      $region49: #{simple_cnn_forward.4} parent=35 // pred_check
        %p854 = pneg %p160
      $region50: #{simple_cnn_forward.4} parent=35 // pred_check_branch
        %856 = sbr.rel (%p854) target = $region52
      $region51: #{simple_cnn_forward.4} parent=35 // pred_region
        %s857 = smul.u32 16, %s20
      $region52: #{simple_cnn_forward.4} parent=35 // pred_fallthru
        _
      // Predicated region
      $region53: #{simple_cnn_forward.4} parent=35 // pred_check
        %p858 = pneg %p160
      $region54: #{simple_cnn_forward.4} parent=35 // pred_check_branch
        %860 = sbr.rel (%p858) target = $region56
      $region55: #{simple_cnn_forward.4} parent=35 // pred_region
        %s861 = smul.u32 16, %s20
        %p862 = scmp.lt.s32.totalorder %s861, 15
        %s863 = scalar_select %p862, %s861, 15
        %p864 = scmp.lt.s32.totalorder %s21, 0
        %s865 = scalar_select %p864, %s21, 0
        %s866 = sadd.s32 %s865, %s863
        %s867 = smul.addr %s866, 4
        %s868 = scalar_lea.vmem %s4, %s867
      $region56: #{simple_cnn_forward.4} parent=35 // pred_fallthru
        _
    $region36: #{simple_cnn_forward.4} parent=5 // pred_fallthru
      _
    %p869 = scmp.le.s32.totalorder 2, %s10
    // Predicated region
    $region57: #{simple_cnn_forward.4} parent=5 // pred_check
      %p870 = pneg %p869
    $region58: #{simple_cnn_forward.4} parent=5 // pred_check_branch
      %872 = sbr.rel (%p870) target = $region60
    $region59: #{simple_cnn_forward.4} parent=5 // pred_region
      %s873 = ssub.s32 %s10, 2
    $region60: #{simple_cnn_forward.4} parent=5 // pred_fallthru
      _
  $region6: #{simple_cnn_forward.4} parent=0 // loop_footer
    %s14 = sadd.s32 1, %s10
  $region7: #{simple_cnn_forward.4} parent=0 // loop_footer_branch
    %9 = sbr.rel target = $region3
  $region8: #{simple_cnn_forward.4} parent=0 // loop_exit
    _

// kernel: simple_cnn_forward.5
$region0: #{simple_cnn_forward.5}
  #allocation0 [shape = 'u32[]', space=smem, size = 0x4, offset = 0x4, fixed_abs, tag = 'smem constant byte address 0x4 - core index']
  #allocation1 [shape = 'u32[144,128]{1,0:T(1,128)}', space=vmem, size = 0x12000, scoped, tag = 'internal scratch']
  #allocation2 [shape = 'f32[8,128]{1,0:T(8,128)}', space=vmem, size = 0x1000, scoped, tag = 'scratch operand']
  %s0 = inlined_call_operand.vmem [shape: bf16[4,8,896], index: 0, kind: input, shape index: {}]
  %s1 = inlined_call_operand.vmem [shape: bf16[896,128], index: 1, kind: input, shape index: {}]
  %s2 = inlined_call_operand.vmem [shape: f32[1,128], index: 2, kind: input, shape index: {}]
  %s3 = inlined_call_operand.vmem [shape: f32[1,128], index: 3, kind: input, shape index: {}]
  %s4 = inlined_call_operand.vmem [shape: bf16[8,128], index: 4, kind: output, shape index: {}]
  %s5 = sld [smem:[#allocation0]]
  $region61: #{simple_cnn_forward.5} parent=0
    _
  %s7 = ssub.s32 1, %s5
  %s8 = scalar_select 0, %s7, %s5
  loop: start=0, step=1, limit=6
  $region2: #{simple_cnn_forward.5} parent=0 // loop_pre_header
    _
  $region3: #{simple_cnn_forward.5} parent=0 // loop_header
    %s10 = sphi 0, %s14
    %p11 = scmp.ge.s32.totalorder %s10, 6
    %s17 = sphi 0, %s36
    %s18 = sphi 0, %s32
    %s19 = sphi 0, %s28
    %s20 = sphi 0, %s17
    %s21 = sphi 0, %s18
    %s22 = sphi 0, %s19
    %s23 = sphi 0, %s20
    %s24 = sphi 0, %s21
    %s25 = sphi 0, %s22
    %s41 = sphi 0, %s43
    %s44 = sphi 0, %s41
    %s45 = sphi 0, %s44
    %s61 = sphi 0, %s45
    %s67 = sphi 0, %s69
    %s70 = sphi 0, %s67
    %s71 = sphi 0, %s70
    %s87 = sphi 0, %s71
    %s93 = sphi 0, %s95
    %s96 = sphi 0, %s93
    %s97 = sphi 0, %s96
    %s113 = sphi 0, %s97
    %s119 = sphi 0, %s121
    %s122 = sphi 0, %s119
    %s123 = sphi 0, %s122
    %s139 = sphi 0, %s123
    %s147 = sphi 0, %s149
    %s150 = sphi 0, %s147
    %s151 = sphi 0, %s150
    %s167 = sphi 0, %s151
  $region4: #{simple_cnn_forward.5} parent=0 // loop_header_branch
    %13 = sbr.rel (%p11) target = $region8
  $region5: #{simple_cnn_forward.5} parent=0 // loop_body
    %s15 = ssub.s32 %s10, 1
    %s16 = ssub.s32 %s10, 2
    %s26 = sadd.s32 1, %s19
    %p27 = scmp.ge.s32.totalorder %s26, 4
    %s28 = scalar_select %p27, 0, %s26
    %s29 = sadd.s32 1, %s18
    %s30 = scalar_select %p27, %s29, %s18
    %p31 = scmp.ge.s32.totalorder %s30, 1
    %s32 = scalar_select %p31, 0, %s30
    %s33 = sadd.s32 1, %s17
    %s34 = scalar_select %p31, %s33, %s17
    %p35 = scmp.ge.s32.totalorder %s34, 1
    %s36 = scalar_select %p35, 0, %s34
    %s37 = ssub.s32 %s19, %s28
    %s38 = ssub.s32 %s17, %s36
    %s39 = sor.u32 %s37, %s38
    %p40 = scmp.eq.s32.totalorder %s39, 0
    %s42 = sadd.s32 %s41, 1
    %s43 = scalar_select %p40, %s41, %s42
    %p46 = pneg %p40
    %p47 = scmp.eq.s32.totalorder %s10, 3
    %p48 = por %p46, %p47
    %p49 = scmp.ne.s32.totalorder %s41, %s44
    %p50 = scmp.eq.s32.totalorder %s10, 0
    %p51 = por %p49, %p50
    %p52 = scmp.ne.s32.totalorder %s41, %s44
    %p53 = scmp.eq.s32.totalorder %s15, 3
    %p54 = por %p52, %p53
    %p55 = scmp.ne.s32.totalorder %s44, %s45
    %p56 = scmp.eq.s32.totalorder %s15, 0
    %p57 = por %p55, %p56
    %p58 = scmp.ne.s32.totalorder %s44, %s45
    %p59 = scmp.eq.s32.totalorder %s16, 3
    %p60 = por %p58, %p59
    %p62 = scmp.ne.s32.totalorder %s45, %s61
    %p63 = scmp.eq.s32.totalorder %s16, 0
    %p64 = por %p62, %p63
    %s65 = ssub.s32 %s18, %s32
    %p66 = scmp.eq.s32.totalorder %s65, 0
    %s68 = sadd.s32 %s67, 1
    %s69 = scalar_select %p66, %s67, %s68
    %p72 = pneg %p66
    %p73 = scmp.eq.s32.totalorder %s10, 3
    %p74 = por %p72, %p73
    %p75 = scmp.ne.s32.totalorder %s67, %s70
    %p76 = scmp.eq.s32.totalorder %s10, 0
    %p77 = por %p75, %p76
    %p78 = scmp.ne.s32.totalorder %s67, %s70
    %p79 = scmp.eq.s32.totalorder %s15, 3
    %p80 = por %p78, %p79
    %p81 = scmp.ne.s32.totalorder %s70, %s71
    %p82 = scmp.eq.s32.totalorder %s15, 0
    %p83 = por %p81, %p82
    %p84 = scmp.ne.s32.totalorder %s70, %s71
    %p85 = scmp.eq.s32.totalorder %s16, 3
    %p86 = por %p84, %p85
    %p88 = scmp.ne.s32.totalorder %s71, %s87
    %p89 = scmp.eq.s32.totalorder %s16, 0
    %p90 = por %p88, %p89
    %s91 = ssub.s32 %s18, %s32
    %p92 = scmp.eq.s32.totalorder %s91, 0
    %s94 = sadd.s32 %s93, 1
    %s95 = scalar_select %p92, %s93, %s94
    %p98 = pneg %p92
    %p99 = scmp.eq.s32.totalorder %s10, 3
    %p100 = por %p98, %p99
    %p101 = scmp.ne.s32.totalorder %s93, %s96
    %p102 = scmp.eq.s32.totalorder %s10, 0
    %p103 = por %p101, %p102
    %p104 = scmp.ne.s32.totalorder %s93, %s96
    %p105 = scmp.eq.s32.totalorder %s15, 3
    %p106 = por %p104, %p105
    %p107 = scmp.ne.s32.totalorder %s96, %s97
    %p108 = scmp.eq.s32.totalorder %s15, 0
    %p109 = por %p107, %p108
    %p110 = scmp.ne.s32.totalorder %s96, %s97
    %p111 = scmp.eq.s32.totalorder %s16, 3
    %p112 = por %p110, %p111
    %p114 = scmp.ne.s32.totalorder %s97, %s113
    %p115 = scmp.eq.s32.totalorder %s16, 0
    %p116 = por %p114, %p115
    %s117 = ssub.s32 %s18, %s32
    %p118 = scmp.eq.s32.totalorder %s117, 0
    %s120 = sadd.s32 %s119, 1
    %s121 = scalar_select %p118, %s119, %s120
    %p124 = pneg %p118
    %p125 = scmp.eq.s32.totalorder %s10, 3
    %p126 = por %p124, %p125
    %p127 = scmp.ne.s32.totalorder %s119, %s122
    %p128 = scmp.eq.s32.totalorder %s10, 0
    %p129 = por %p127, %p128
    %p130 = scmp.ne.s32.totalorder %s119, %s122
    %p131 = scmp.eq.s32.totalorder %s15, 3
    %p132 = por %p130, %p131
    %p133 = scmp.ne.s32.totalorder %s122, %s123
    %p134 = scmp.eq.s32.totalorder %s15, 0
    %p135 = por %p133, %p134
    %p136 = scmp.ne.s32.totalorder %s122, %s123
    %p137 = scmp.eq.s32.totalorder %s16, 3
    %p138 = por %p136, %p137
    %p140 = scmp.ne.s32.totalorder %s123, %s139
    %p141 = scmp.eq.s32.totalorder %s16, 0
    %p142 = por %p140, %p141
    %s143 = ssub.s32 %s17, %s36
    %s144 = ssub.s32 %s18, %s32
    %s145 = sor.u32 %s143, %s144
    %p146 = scmp.eq.s32.totalorder %s145, 0
    %s148 = sadd.s32 %s147, 1
    %s149 = scalar_select %p146, %s147, %s148
    %p152 = pneg %p146
    %p153 = scmp.eq.s32.totalorder %s10, 3
    %p154 = por %p152, %p153
    %p155 = scmp.ne.s32.totalorder %s147, %s150
    %p156 = scmp.eq.s32.totalorder %s10, 0
    %p157 = por %p155, %p156
    %p158 = scmp.ne.s32.totalorder %s147, %s150
    %p159 = scmp.eq.s32.totalorder %s15, 3
    %p160 = por %p158, %p159
    %p161 = scmp.ne.s32.totalorder %s150, %s151
    %p162 = scmp.eq.s32.totalorder %s15, 0
    %p163 = por %p161, %p162
    %p164 = scmp.ne.s32.totalorder %s150, %s151
    %p165 = scmp.eq.s32.totalorder %s16, 3
    %p166 = por %p164, %p165
    %p168 = scmp.ne.s32.totalorder %s151, %s167
    %p169 = scmp.eq.s32.totalorder %s16, 0
    %p170 = por %p168, %p169
    %p171 = scmp.le.s32.totalorder 1, %s10
    %p172 = scmp.lt.s32.totalorder %s10, 5
    %p173 = pnand %p171, %p172
    %p174 = pneg %p173
    // Predicated region
    $region9: #{simple_cnn_forward.5} parent=5 // pred_check
      _
    $region10: #{simple_cnn_forward.5} parent=5 // pred_check_branch
      %176 = sbr.rel (%p173) target = $region12
    $region11: #{simple_cnn_forward.5} parent=5 // pred_region
      %s177 = ssub.s32 %s10, 1
      // Predicated region
      $region13: #{simple_cnn_forward.5} parent=11 // pred_check
        %p178 = pneg %p83
      $region14: #{simple_cnn_forward.5} parent=11 // pred_check_branch
        %180 = sbr.rel (%p178) target = $region16
      $region15: #{simple_cnn_forward.5} parent=11 // pred_region
        %p181 = scmp.lt.s32.totalorder %s21, 0
        %s182 = scalar_select %p181, %s21, 0
        %s183 = smul.addr %s182, 4
        %s184 = scalar_lea.vmem %s1, %s183
      $region16: #{simple_cnn_forward.5} parent=11 // pred_fallthru
        _
      // Predicated region
      $region17: #{simple_cnn_forward.5} parent=11 // pred_check
        %p185 = pneg %p109
      $region18: #{simple_cnn_forward.5} parent=11 // pred_check_branch
        %187 = sbr.rel (%p185) target = $region20
      $region19: #{simple_cnn_forward.5} parent=11 // pred_region
        %p188 = scmp.lt.s32.totalorder %s21, 0
        %s189 = scalar_select %p188, %s21, 0
        %s190 = scalar_lea.vmem %s2, %s189
      $region20: #{simple_cnn_forward.5} parent=11 // pred_fallthru
        _
      // Predicated region
      $region21: #{simple_cnn_forward.5} parent=11 // pred_check
        %p191 = pneg %p135
      $region22: #{simple_cnn_forward.5} parent=11 // pred_check_branch
        %193 = sbr.rel (%p191) target = $region24
      $region23: #{simple_cnn_forward.5} parent=11 // pred_region
        %p194 = scmp.lt.s32.totalorder %s21, 0
        %s195 = scalar_select %p194, %s21, 0
        %s196 = scalar_lea.vmem %s3, %s195
      $region24: #{simple_cnn_forward.5} parent=11 // pred_fallthru
        _
    $region12: #{simple_cnn_forward.5} parent=5 // pred_fallthru
      _
    %p197 = scmp.lt.s32.totalorder %s10, 4
    // Predicated region
    $region25: #{simple_cnn_forward.5} parent=5 // pred_check
      %p198 = pneg %p197
    $region26: #{simple_cnn_forward.5} parent=5 // pred_check_branch
      %200 = sbr.rel (%p198) target = $region28
    $region27: #{simple_cnn_forward.5} parent=5 // pred_region
      // Predicated region
      $region29: #{simple_cnn_forward.5} parent=27 // pred_check
        %p201 = pneg %p51
      $region30: #{simple_cnn_forward.5} parent=27 // pred_check_branch
        %203 = sbr.rel (%p201) target = $region32
      $region31: #{simple_cnn_forward.5} parent=27 // pred_region
        %p204 = scmp.lt.s32.totalorder %s19, 3
        %s205 = scalar_select %p204, %s19, 3
        %p206 = scmp.lt.s32.totalorder %s17, 0
        %s207 = scalar_select %p206, %s17, 0
        %s208 = smul.addr %s207, 7
        %s209 = smul.addr %s205, 7
        %s210 = sadd.s32 %s208, %s209
        %s211 = smul.addr %s210, 4
        %s212 = scalar_lea.vmem %s0, %s211
      $region32: #{simple_cnn_forward.5} parent=27 // pred_fallthru
        _
    $region28: #{simple_cnn_forward.5} parent=5 // pred_fallthru
      _
    %p213 = scmp.le.s32.totalorder 1, %s10
    %p214 = scmp.lt.s32.totalorder %s10, 5
    %p215 = pnand %p213, %p214
    %p216 = pneg %p215
    // Predicated region
    $region33: #{simple_cnn_forward.5} parent=5 // pred_check
      _
    $region34: #{simple_cnn_forward.5} parent=5 // pred_check_branch
      %218 = sbr.rel (%p215) target = $region36
    $region35: #{simple_cnn_forward.5} parent=5 // pred_region
      %s219 = ssub.s32 %s10, 1
      %p220 = scmp.lt.s32.totalorder %s22, 3
      %s221 = scalar_select %p220, %s22, 3
      %p222 = scmp.lt.s32.totalorder %s20, 0
      %s223 = scalar_select %p222, %s20, 0
      %s224 = smul.addr %s223, 7
      %s225 = smul.addr %s221, 7
      %s226 = sadd.s32 %s224, %s225
      %s227 = smul.addr %s226, 4
      %s228 = scalar_lea.vmem %s0, %s227
      %p229 = pneg %p57
      %p230 = pneg %p54
      %p231 = scmp.lt.s32.totalorder %s21, 0
      %s232 = scalar_select %p231, %s21, 0
      %s233 = smul.addr %s232, 4
      %s234 = scalar_lea.vmem %s1, %s233
      %p235 = pneg %p83
      %p236 = pneg %p80
      %p237 = scmp.lt.s32.totalorder %s21, 0
      %s238 = scalar_select %p237, %s21, 0
      %s239 = scalar_lea.vmem %s2, %s238
      %p240 = pneg %p109
      %p241 = pneg %p106
      %p242 = scmp.lt.s32.totalorder %s21, 0
      %s243 = scalar_select %p242, %s21, 0
      %s244 = scalar_lea.vmem %s3, %s243
      %p245 = pneg %p135
      %p246 = pneg %p132
      %p247 = pneg %p163
      %p248 = pneg %p160
      %p249 = scmp.lt.s32.totalorder %s20, 0
      %s250 = scalar_select %p249, %s20, 0
      %p251 = scmp.lt.s32.totalorder %s21, 0
      %s252 = scalar_select %p251, %s21, 0
      %s253 = sadd.s32 %s252, %s250
      %s254 = smul.addr %s253, 4
      %s255 = scalar_lea.vmem %s4, %s254
      %p256 = scmp.lt.s32.totalorder %s22, 3
      %s257 = scalar_select %p256, %s22, 3
      %p258 = scmp.lt.s32.totalorder %s20, 0
      %s259 = scalar_select %p258, %s20, 0
      %s260 = smul.addr %s259, 7
      %s261 = smul.addr %s257, 7
      %s262 = sadd.s32 %s260, %s261
      %s263 = smul.addr %s262, 4
      %s264 = scalar_lea.vmem %s0, %s263
      %p265 = scmp.lt.s32.totalorder %s21, 0
      %s266 = scalar_select %p265, %s21, 0
      %s267 = smul.addr %s266, 4
      %s268 = scalar_lea.vmem %s1, %s267
      %p269 = scmp.lt.s32.totalorder %s21, 0
      %s270 = scalar_select %p269, %s21, 0
      %s271 = scalar_lea.vmem %s2, %s270
      %p272 = scmp.lt.s32.totalorder %s21, 0
      %s273 = scalar_select %p272, %s21, 0
      %s274 = scalar_lea.vmem %s3, %s273
      %p275 = scmp.lt.s32.totalorder %s20, 0
      %s276 = scalar_select %p275, %s20, 0
      %p277 = scmp.lt.s32.totalorder %s21, 0
      %s278 = scalar_select %p277, %s21, 0
      %s279 = sadd.s32 %s278, %s276
      %s280 = smul.addr %s279, 4
      %s281 = scalar_lea.vmem %s4, %s280
      %v283 = vld [vmem:[%s264] sm:$0xff]
      %v284 = vld [vmem:[%s264 + $0x8] sm:$0xff]
      %v285 = vld [vmem:[%s264 + $0x10] sm:$0xff]
      %v286 = vld [vmem:[%s264 + $0x18] sm:$0xf]
      %v287 = vld [vmem:[%s268] sm:$0xf]
      %v288 = vld [vmem:[%s268 + $0x4] sm:$0xf]
      %v289 = vld [vmem:[%s268 + $0x8] sm:$0xf]
      %v290 = vld [vmem:[%s268 + $0xc] sm:$0xf]
      %v291 = vld [vmem:[%s268 + $0x10] sm:$0xf]
      %v292 = vld [vmem:[%s268 + $0x14] sm:$0xf]
      %v293 = vld [vmem:[%s268 + $0x18] sm:$0xf]
      %v294 = vld [vmem:[%s268 + $0x1c] sm:$0xf]
      %v295 = vld [vmem:[%s268 + $0x20] sm:$0xf]
      %v296 = vld [vmem:[%s268 + $0x24] sm:$0xf]
      %v297 = vld [vmem:[%s268 + $0x28] sm:$0xf]
      %v298 = vld [vmem:[%s268 + $0x2c] sm:$0xf]
      %v299 = vld [vmem:[%s268 + $0x30] sm:$0xf]
      %v300 = vld [vmem:[%s268 + $0x34] sm:$0xf]
      %v301 = vld [vmem:[%s268 + $0x38] sm:$0xf]
      %v302 = vld [vmem:[%s268 + $0x3c] sm:$0xf]
      %v303 = vld [vmem:[%s268 + $0x40] sm:$0xf]
      %v304 = vld [vmem:[%s268 + $0x44] sm:$0xf]
      %v305 = vld [vmem:[%s268 + $0x48] sm:$0xf]
      %v306 = vld [vmem:[%s268 + $0x4c] sm:$0xf]
      %v307 = vld [vmem:[%s268 + $0x50] sm:$0xf]
      %v308 = vld [vmem:[%s268 + $0x54] sm:$0xf]
      %v309 = vld [vmem:[%s268 + $0x58] sm:$0xf]
      %v310 = vld [vmem:[%s268 + $0x5c] sm:$0xf]
      %v311 = vld [vmem:[%s268 + $0x60] sm:$0xf]
      %v312 = vld [vmem:[%s268 + $0x64] sm:$0xf]
      %v313 = vld [vmem:[%s268 + $0x68] sm:$0xf]
      %v314 = vld [vmem:[%s268 + $0x6c] sm:$0xf]
      %v315 = vld [vmem:[%s268 + $0x70] sm:$0xf]
      %v316 = vld [vmem:[%s268 + $0x74] sm:$0xf]
      %v317 = vld [vmem:[%s268 + $0x78] sm:$0xf]
      %v318 = vld [vmem:[%s268 + $0x7c] sm:$0xf]
      %v319 = vld [vmem:[%s268 + $0x80] sm:$0xf]
      %v320 = vld [vmem:[%s268 + $0x84] sm:$0xf]
      %v321 = vld [vmem:[%s268 + $0x88] sm:$0xf]
      %v322 = vld [vmem:[%s268 + $0x8c] sm:$0xf]
      %v323 = vld [vmem:[%s268 + $0x90] sm:$0xf]
      %v324 = vld [vmem:[%s268 + $0x94] sm:$0xf]
      %v325 = vld [vmem:[%s268 + $0x98] sm:$0xf]
      %v326 = vld [vmem:[%s268 + $0x9c] sm:$0xf]
      %v327 = vld [vmem:[%s268 + $0xa0] sm:$0xf]
      %v328 = vld [vmem:[%s268 + $0xa4] sm:$0xf]
      %v329 = vld [vmem:[%s268 + $0xa8] sm:$0xf]
      %v330 = vld [vmem:[%s268 + $0xac] sm:$0xf]
      %v331 = vld [vmem:[%s268 + $0xb0] sm:$0xf]
      %v332 = vld [vmem:[%s268 + $0xb4] sm:$0xf]
      %v333 = vld [vmem:[%s268 + $0xb8] sm:$0xf]
      %v334 = vld [vmem:[%s268 + $0xbc] sm:$0xf]
      %v335 = vld [vmem:[%s268 + $0xc0] sm:$0xf]
      %v336 = vld [vmem:[%s268 + $0xc4] sm:$0xf]
      %v337 = vld [vmem:[%s268 + $0xc8] sm:$0xf]
      %v338 = vld [vmem:[%s268 + $0xcc] sm:$0xf]
      %v339 = vld [vmem:[%s268 + $0xd0] sm:$0xf]
      %v340 = vld [vmem:[%s268 + $0xd4] sm:$0xf]
      %v341 = vld [vmem:[%s268 + $0xd8] sm:$0xf]
      %v342 = vld [vmem:[%s268 + $0xdc] sm:$0xf]
      %v343 = vld [vmem:[%s268 + $0xe0] sm:$0xf]
      %v344 = vld [vmem:[%s268 + $0xe4] sm:$0xf]
      %v345 = vld [vmem:[%s268 + $0xe8] sm:$0xf]
      %v346 = vld [vmem:[%s268 + $0xec] sm:$0xf]
      %v347 = vld [vmem:[%s268 + $0xf0] sm:$0xf]
      %v348 = vld [vmem:[%s268 + $0xf4] sm:$0xf]
      %v349 = vld [vmem:[%s268 + $0xf8] sm:$0xf]
      %v350 = vld [vmem:[%s268 + $0xfc] sm:$0xf]
      %v351 = vld [vmem:[%s268 + $0x100] sm:$0xf]
      %v352 = vld [vmem:[%s268 + $0x104] sm:$0xf]
      %v353 = vld [vmem:[%s268 + $0x108] sm:$0xf]
      %v354 = vld [vmem:[%s268 + $0x10c] sm:$0xf]
      %v355 = vld [vmem:[%s268 + $0x110] sm:$0xf]
      %v356 = vld [vmem:[%s268 + $0x114] sm:$0xf]
      %v357 = vld [vmem:[%s268 + $0x118] sm:$0xf]
      %v358 = vld [vmem:[%s268 + $0x11c] sm:$0xf]
      %v359 = vld [vmem:[%s268 + $0x120] sm:$0xf]
      %v360 = vld [vmem:[%s268 + $0x124] sm:$0xf]
      %v361 = vld [vmem:[%s268 + $0x128] sm:$0xf]
      %v362 = vld [vmem:[%s268 + $0x12c] sm:$0xf]
      %v363 = vld [vmem:[%s268 + $0x130] sm:$0xf]
      %v364 = vld [vmem:[%s268 + $0x134] sm:$0xf]
      %v365 = vld [vmem:[%s268 + $0x138] sm:$0xf]
      %v366 = vld [vmem:[%s268 + $0x13c] sm:$0xf]
      %v367 = vld [vmem:[%s268 + $0x140] sm:$0xf]
      %v368 = vld [vmem:[%s268 + $0x144] sm:$0xf]
      %v369 = vld [vmem:[%s268 + $0x148] sm:$0xf]
      %v370 = vld [vmem:[%s268 + $0x14c] sm:$0xf]
      %v371 = vld [vmem:[%s268 + $0x150] sm:$0xf]
      %v372 = vld [vmem:[%s268 + $0x154] sm:$0xf]
      %v373 = vld [vmem:[%s268 + $0x158] sm:$0xf]
      %v374 = vld [vmem:[%s268 + $0x15c] sm:$0xf]
      %v375 = vld [vmem:[%s268 + $0x160] sm:$0xf]
      %v376 = vld [vmem:[%s268 + $0x164] sm:$0xf]
      %v377 = vld [vmem:[%s268 + $0x168] sm:$0xf]
      %v378 = vld [vmem:[%s268 + $0x16c] sm:$0xf]
      %v379 = vld [vmem:[%s268 + $0x170] sm:$0xf]
      %v380 = vld [vmem:[%s268 + $0x174] sm:$0xf]
      %v381 = vld [vmem:[%s268 + $0x178] sm:$0xf]
      %v382 = vld [vmem:[%s268 + $0x17c] sm:$0xf]
      %v383 = vld [vmem:[%s268 + $0x180] sm:$0xf]
      %v384 = vld [vmem:[%s268 + $0x184] sm:$0xf]
      %v385 = vld [vmem:[%s268 + $0x188] sm:$0xf]
      %v386 = vld [vmem:[%s268 + $0x18c] sm:$0xf]
      %v387 = vld [vmem:[%s268 + $0x190] sm:$0xf]
      %v388 = vld [vmem:[%s268 + $0x194] sm:$0xf]
      %v389 = vld [vmem:[%s268 + $0x198] sm:$0xf]
      %v390 = vld [vmem:[%s268 + $0x19c] sm:$0xf]
      %v391 = vld [vmem:[%s268 + $0x1a0] sm:$0xf]
      %v392 = vld [vmem:[%s268 + $0x1a4] sm:$0xf]
      %v393 = vld [vmem:[%s268 + $0x1a8] sm:$0xf]
      %v394 = vld [vmem:[%s268 + $0x1ac] sm:$0xf]
      %v395 = vld [vmem:[%s268 + $0x1b0] sm:$0xf]
      %v396 = vld [vmem:[%s268 + $0x1b4] sm:$0xf]
      %v397 = vld [vmem:[%s268 + $0x1b8] sm:$0xf]
      %v398 = vld [vmem:[%s268 + $0x1bc] sm:$0xf]
      %v403 = vunpack.c.l.b16 %v283
      %v404 = vunpack.c.h.b16 %v283
      %v405 = vunpack.c.l.b16 %v284
      %v406 = vunpack.c.h.b16 %v284
      %v407 = vunpack.c.l.b16 %v285
      %v408 = vunpack.c.h.b16 %v285
      %v409 = vunpack.c.l.b16 %v286
      %v410 = vpack.c.b16 %v403, %v403
      %v411 = vpack.c.b16 %v404, %v404
      %v412 = vpack.c.b16 %v405, %v405
      %v413 = vpack.c.b16 %v406, %v406
      %v414 = vpack.c.b16 %v407, %v407
      %v415 = vpack.c.b16 %v408, %v408
      %v416 = vpack.c.b16 %v409, %v409
      %v536 = vunpack.c.l.b16 %v287
      %v537 = vunpack.c.l.b16 %v288
      %v538 = vunpack.c.l.b16 %v289
      %v539 = vunpack.c.l.b16 %v290
      %v540 = vunpack.c.l.b16 %v291
      %v541 = vunpack.c.l.b16 %v292
      %v542 = vunpack.c.l.b16 %v293
      %v543 = vunpack.c.l.b16 %v294
      %v544 = vunpack.c.l.b16 %v295
      %v545 = vunpack.c.l.b16 %v296
      %v546 = vunpack.c.l.b16 %v297
      %v547 = vunpack.c.l.b16 %v298
      %v548 = vunpack.c.l.b16 %v299
      %v549 = vunpack.c.l.b16 %v300
      %v550 = vunpack.c.l.b16 %v301
      %v551 = vunpack.c.l.b16 %v302
      %v552 = vunpack.c.l.b16 %v303
      %v553 = vunpack.c.l.b16 %v304
      %v554 = vunpack.c.l.b16 %v305
      %v555 = vunpack.c.l.b16 %v306
      %v556 = vunpack.c.l.b16 %v307
      %v557 = vunpack.c.l.b16 %v308
      %v558 = vunpack.c.l.b16 %v309
      %v559 = vunpack.c.l.b16 %v310
      %v560 = vunpack.c.l.b16 %v311
      %v561 = vunpack.c.l.b16 %v312
      %v562 = vunpack.c.l.b16 %v313
      %v563 = vunpack.c.l.b16 %v314
      %v564 = vunpack.c.l.b16 %v315
      %v565 = vunpack.c.l.b16 %v316
      %v566 = vunpack.c.l.b16 %v317
      %v567 = vunpack.c.l.b16 %v318
      %v568 = vunpack.c.l.b16 %v319
      %v569 = vunpack.c.l.b16 %v320
      %v570 = vunpack.c.l.b16 %v321
      %v571 = vunpack.c.l.b16 %v322
      %v572 = vunpack.c.l.b16 %v323
      %v573 = vunpack.c.l.b16 %v324
      %v574 = vunpack.c.l.b16 %v325
      %v575 = vunpack.c.l.b16 %v326
      %v576 = vunpack.c.l.b16 %v327
      %v577 = vunpack.c.l.b16 %v328
      %v578 = vunpack.c.l.b16 %v329
      %v579 = vunpack.c.l.b16 %v330
      %v580 = vunpack.c.l.b16 %v331
      %v581 = vunpack.c.l.b16 %v332
      %v582 = vunpack.c.l.b16 %v333
      %v583 = vunpack.c.l.b16 %v334
      %v584 = vunpack.c.l.b16 %v335
      %v585 = vunpack.c.l.b16 %v336
      %v586 = vunpack.c.l.b16 %v337
      %v587 = vunpack.c.l.b16 %v338
      %v588 = vunpack.c.l.b16 %v339
      %v589 = vunpack.c.l.b16 %v340
      %v590 = vunpack.c.l.b16 %v341
      %v591 = vunpack.c.l.b16 %v342
      %v592 = vunpack.c.l.b16 %v343
      %v593 = vunpack.c.l.b16 %v344
      %v594 = vunpack.c.l.b16 %v345
      %v595 = vunpack.c.l.b16 %v346
      %v596 = vunpack.c.l.b16 %v347
      %v597 = vunpack.c.l.b16 %v348
      %v598 = vunpack.c.l.b16 %v349
      %v599 = vunpack.c.l.b16 %v350
      %v600 = vunpack.c.l.b16 %v351
      %v601 = vunpack.c.l.b16 %v352
      %v602 = vunpack.c.l.b16 %v353
      %v603 = vunpack.c.l.b16 %v354
      %v604 = vunpack.c.l.b16 %v355
      %v605 = vunpack.c.l.b16 %v356
      %v606 = vunpack.c.l.b16 %v357
      %v607 = vunpack.c.l.b16 %v358
      %v608 = vunpack.c.l.b16 %v359
      %v609 = vunpack.c.l.b16 %v360
      %v610 = vunpack.c.l.b16 %v361
      %v611 = vunpack.c.l.b16 %v362
      %v612 = vunpack.c.l.b16 %v363
      %v613 = vunpack.c.l.b16 %v364
      %v614 = vunpack.c.l.b16 %v365
      %v615 = vunpack.c.l.b16 %v366
      %v616 = vunpack.c.l.b16 %v367
      %v617 = vunpack.c.l.b16 %v368
      %v618 = vunpack.c.l.b16 %v369
      %v619 = vunpack.c.l.b16 %v370
      %v620 = vunpack.c.l.b16 %v371
      %v621 = vunpack.c.l.b16 %v372
      %v622 = vunpack.c.l.b16 %v373
      %v623 = vunpack.c.l.b16 %v374
      %v624 = vunpack.c.l.b16 %v375
      %v625 = vunpack.c.l.b16 %v376
      %v626 = vunpack.c.l.b16 %v377
      %v627 = vunpack.c.l.b16 %v378
      %v628 = vunpack.c.l.b16 %v379
      %v629 = vunpack.c.l.b16 %v380
      %v630 = vunpack.c.l.b16 %v381
      %v631 = vunpack.c.l.b16 %v382
      %v632 = vunpack.c.l.b16 %v383
      %v633 = vunpack.c.l.b16 %v384
      %v634 = vunpack.c.l.b16 %v385
      %v635 = vunpack.c.l.b16 %v386
      %v636 = vunpack.c.l.b16 %v387
      %v637 = vunpack.c.l.b16 %v388
      %v638 = vunpack.c.l.b16 %v389
      %v639 = vunpack.c.l.b16 %v390
      %v640 = vunpack.c.l.b16 %v391
      %v641 = vunpack.c.l.b16 %v392
      %v642 = vunpack.c.l.b16 %v393
      %v643 = vunpack.c.l.b16 %v394
      %v644 = vunpack.c.l.b16 %v395
      %v645 = vunpack.c.l.b16 %v396
      %v646 = vunpack.c.l.b16 %v397
      %v647 = vunpack.c.l.b16 %v398
      %v648 = vpack.c.b16 %v537, %v536
      %v649 = vpack.c.b16 %v539, %v538
      %v650 = vpack.c.b16 %v541, %v540
      %v651 = vpack.c.b16 %v543, %v542
      %v652 = vpack.c.b16 %v545, %v544
      %v653 = vpack.c.b16 %v547, %v546
      %v654 = vpack.c.b16 %v549, %v548
      %v655 = vpack.c.b16 %v551, %v550
      %v656 = vpack.c.b16 %v553, %v552
      %v657 = vpack.c.b16 %v555, %v554
      %v658 = vpack.c.b16 %v557, %v556
      %v659 = vpack.c.b16 %v559, %v558
      %v660 = vpack.c.b16 %v561, %v560
      %v661 = vpack.c.b16 %v563, %v562
      %v662 = vpack.c.b16 %v565, %v564
      %v663 = vpack.c.b16 %v567, %v566
      %v664 = vpack.c.b16 %v569, %v568
      %v665 = vpack.c.b16 %v571, %v570
      %v666 = vpack.c.b16 %v573, %v572
      %v667 = vpack.c.b16 %v575, %v574
      %v668 = vpack.c.b16 %v577, %v576
      %v669 = vpack.c.b16 %v579, %v578
      %v670 = vpack.c.b16 %v581, %v580
      %v671 = vpack.c.b16 %v583, %v582
      %v672 = vpack.c.b16 %v585, %v584
      %v673 = vpack.c.b16 %v587, %v586
      %v674 = vpack.c.b16 %v589, %v588
      %v675 = vpack.c.b16 %v591, %v590
      %v676 = vpack.c.b16 %v593, %v592
      %v677 = vpack.c.b16 %v595, %v594
      %v678 = vpack.c.b16 %v597, %v596
      %v679 = vpack.c.b16 %v599, %v598
      %v680 = vpack.c.b16 %v601, %v600
      %v681 = vpack.c.b16 %v603, %v602
      %v682 = vpack.c.b16 %v605, %v604
      %v683 = vpack.c.b16 %v607, %v606
      %v684 = vpack.c.b16 %v609, %v608
      %v685 = vpack.c.b16 %v611, %v610
      %v686 = vpack.c.b16 %v613, %v612
      %v687 = vpack.c.b16 %v615, %v614
      %v688 = vpack.c.b16 %v617, %v616
      %v689 = vpack.c.b16 %v619, %v618
      %v690 = vpack.c.b16 %v621, %v620
      %v691 = vpack.c.b16 %v623, %v622
      %v692 = vpack.c.b16 %v625, %v624
      %v693 = vpack.c.b16 %v627, %v626
      %v694 = vpack.c.b16 %v629, %v628
      %v695 = vpack.c.b16 %v631, %v630
      %v696 = vpack.c.b16 %v633, %v632
      %v697 = vpack.c.b16 %v635, %v634
      %v698 = vpack.c.b16 %v637, %v636
      %v699 = vpack.c.b16 %v639, %v638
      %v700 = vpack.c.b16 %v641, %v640
      %v701 = vpack.c.b16 %v643, %v642
      %v702 = vpack.c.b16 %v645, %v644
      %v703 = vpack.c.b16 %v647, %v646
      %760 = vmatprep.subr.bf16.mxu0 0
      %761 = vmatpush1.bf16.msra.mxu0 %v648
      %762 = vmatprep.subr.bf16.mxu0 0
      %763 = vmatpush1.bf16.msra.mxu0 %v649
      %764 = vmatprep.subr.bf16.mxu0 0
      %765 = vmatpush1.bf16.msra.mxu0 %v650
      %766 = vmatprep.subr.bf16.mxu0 0
      %767 = vmatpush1.bf16.msra.mxu0 %v651
      %768 = vmatprep.subr.bf16.mxu0 0
      %769 = vmatpush1.bf16.msra.mxu0 %v652
      %770 = vmatprep.subr.bf16.mxu0 0
      %771 = vmatpush1.bf16.msra.mxu0 %v653
      %772 = vmatprep.subr.bf16.mxu0 0
      %773 = vmatpush1.bf16.msra.mxu0 %v654
      %774 = vmatprep.subr.bf16.mxu0 0
      %775 = vmatpush1.bf16.msra.mxu0 %v655
      %776 = vmatprep.subr.bf16.mxu0 0
      %777 = vmatpush1.bf16.msra.mxu0 %v656
      %778 = vmatprep.subr.bf16.mxu0 0
      %779 = vmatpush1.bf16.msra.mxu0 %v657
      %780 = vmatprep.subr.bf16.mxu0 0
      %781 = vmatpush1.bf16.msra.mxu0 %v658
      %782 = vmatprep.subr.bf16.mxu0 0
      %783 = vmatpush1.bf16.msra.mxu0 %v659
      %784 = vmatprep.subr.bf16.mxu0 0
      %785 = vmatpush1.bf16.msra.mxu0 %v660
      %786 = vmatprep.subr.bf16.mxu0 0
      %787 = vmatpush1.bf16.msra.mxu0 %v661
      %788 = vmatprep.subr.bf16.mxu0 0
      %789 = vmatpush1.bf16.msra.mxu0 %v662
      %790 = vmatprep.subr.bf16.mxu0 0
      %791 = vmatpush1.bf16.msra.mxu0 %v663
      %792 = vmatprep.mubr.bf16.mxu0 %v411
      %793 = vmatmul.mubr.bf16.gmra.mrb[0].mxu0 %v410
      %v794 = vpop.f32.mrb[0].mxu0
      %v795 = vadd.f32 0.0, %v794
      %v796 = vpop.f32.mrb[0].mxu0
      %v797 = vpop.f32.mrb[0].mxu0
      %v798 = vpop.f32.mrb[0].mxu0
      %799 = vdwg.mxu0
      %800 = vmatprep.subr.bf16.mxu0 0
      %801 = vmatpush1.bf16.msra.mxu0 %v664
      %802 = vmatprep.subr.bf16.mxu0 0
      %803 = vmatpush1.bf16.msra.mxu0 %v665
      %804 = vmatprep.subr.bf16.mxu0 0
      %805 = vmatpush1.bf16.msra.mxu0 %v666
      %806 = vmatprep.subr.bf16.mxu0 0
      %807 = vmatpush1.bf16.msra.mxu0 %v667
      %808 = vmatprep.subr.bf16.mxu0 0
      %809 = vmatpush1.bf16.msra.mxu0 %v668
      %810 = vmatprep.subr.bf16.mxu0 0
      %811 = vmatpush1.bf16.msra.mxu0 %v669
      %812 = vmatprep.subr.bf16.mxu0 0
      %813 = vmatpush1.bf16.msra.mxu0 %v670
      %814 = vmatprep.subr.bf16.mxu0 0
      %815 = vmatpush1.bf16.msra.mxu0 %v671
      %816 = vmatprep.subr.bf16.mxu0 0
      %817 = vmatpush1.bf16.msra.mxu0 %v672
      %818 = vmatprep.subr.bf16.mxu0 0
      %819 = vmatpush1.bf16.msra.mxu0 %v673
      %820 = vmatprep.subr.bf16.mxu0 0
      %821 = vmatpush1.bf16.msra.mxu0 %v674
      %822 = vmatprep.subr.bf16.mxu0 0
      %823 = vmatpush1.bf16.msra.mxu0 %v675
      %824 = vmatprep.subr.bf16.mxu0 0
      %825 = vmatpush1.bf16.msra.mxu0 %v676
      %826 = vmatprep.subr.bf16.mxu0 0
      %827 = vmatpush1.bf16.msra.mxu0 %v677
      %828 = vmatprep.subr.bf16.mxu0 0
      %829 = vmatpush1.bf16.msra.mxu0 %v678
      %830 = vmatprep.subr.bf16.mxu0 0
      %831 = vmatpush1.bf16.msra.mxu0 %v679
      %832 = vmatprep.mubr.bf16.mxu0 %v413
      %833 = vmatmul.mubr.bf16.gmra.mrb[0].mxu0 %v412
      %v834 = vpop.f32.mrb[0].mxu0
      %v835 = vadd.f32 %v795, %v834
      %v836 = vpop.f32.mrb[0].mxu0
      %v837 = vpop.f32.mrb[0].mxu0
      %v838 = vpop.f32.mrb[0].mxu0
      %839 = vdwg.mxu0
      %840 = vmatprep.subr.bf16.mxu0 0
      %841 = vmatpush1.bf16.msra.mxu0 %v680
      %842 = vmatprep.subr.bf16.mxu0 0
      %843 = vmatpush1.bf16.msra.mxu0 %v681
      %844 = vmatprep.subr.bf16.mxu0 0
      %845 = vmatpush1.bf16.msra.mxu0 %v682
      %846 = vmatprep.subr.bf16.mxu0 0
      %847 = vmatpush1.bf16.msra.mxu0 %v683
      %848 = vmatprep.subr.bf16.mxu0 0
      %849 = vmatpush1.bf16.msra.mxu0 %v684
      %850 = vmatprep.subr.bf16.mxu0 0
      %851 = vmatpush1.bf16.msra.mxu0 %v685
      %852 = vmatprep.subr.bf16.mxu0 0
      %853 = vmatpush1.bf16.msra.mxu0 %v686
      %854 = vmatprep.subr.bf16.mxu0 0
      %855 = vmatpush1.bf16.msra.mxu0 %v687
      %856 = vmatprep.subr.bf16.mxu0 0
      %857 = vmatpush1.bf16.msra.mxu0 %v688
      %858 = vmatprep.subr.bf16.mxu0 0
      %859 = vmatpush1.bf16.msra.mxu0 %v689
      %860 = vmatprep.subr.bf16.mxu0 0
      %861 = vmatpush1.bf16.msra.mxu0 %v690
      %862 = vmatprep.subr.bf16.mxu0 0
      %863 = vmatpush1.bf16.msra.mxu0 %v691
      %864 = vmatprep.subr.bf16.mxu0 0
      %865 = vmatpush1.bf16.msra.mxu0 %v692
      %866 = vmatprep.subr.bf16.mxu0 0
      %867 = vmatpush1.bf16.msra.mxu0 %v693
      %868 = vmatprep.subr.bf16.mxu0 0
      %869 = vmatpush1.bf16.msra.mxu0 %v694
      %870 = vmatprep.subr.bf16.mxu0 0
      %871 = vmatpush1.bf16.msra.mxu0 %v695
      %872 = vmatprep.mubr.bf16.mxu0 %v415
      %873 = vmatmul.mubr.bf16.gmra.mrb[0].mxu0 %v414
      %v874 = vpop.f32.mrb[0].mxu0
      %v875 = vadd.f32 %v835, %v874
      %v876 = vpop.f32.mrb[0].mxu0
      %v877 = vpop.f32.mrb[0].mxu0
      %v878 = vpop.f32.mrb[0].mxu0
      %879 = vdwg.mxu0
      %880 = vmatprep.subr.bf16.mxu0 0
      %881 = vmatpush1.bf16.msra.mxu0 %v696
      %882 = vmatprep.subr.bf16.mxu0 0
      %883 = vmatpush1.bf16.msra.mxu0 %v697
      %884 = vmatprep.subr.bf16.mxu0 0
      %885 = vmatpush1.bf16.msra.mxu0 %v698
      %886 = vmatprep.subr.bf16.mxu0 0
      %887 = vmatpush1.bf16.msra.mxu0 %v699
      %888 = vmatprep.subr.bf16.mxu0 0
      %889 = vmatpush1.bf16.msra.mxu0 %v700
      %890 = vmatprep.subr.bf16.mxu0 0
      %891 = vmatpush1.bf16.msra.mxu0 %v701
      %892 = vmatprep.subr.bf16.mxu0 0
      %893 = vmatpush1.bf16.msra.mxu0 %v702
      %894 = vmatprep.subr.bf16.mxu0 0
      %895 = vmatpush1.bf16.msra.mxu0 %v703
      %896 = vmatprep.subr.bf16.mxu0 0
      %897 = vmatpush1.bf16.msra.mxu0 0
      %898 = vmatprep.subr.bf16.mxu0 0
      %899 = vmatpush1.bf16.msra.mxu0 0
      %900 = vmatprep.subr.bf16.mxu0 0
      %901 = vmatpush1.bf16.msra.mxu0 0
      %902 = vmatprep.subr.bf16.mxu0 0
      %903 = vmatpush1.bf16.msra.mxu0 0
      %904 = vmatprep.subr.bf16.mxu0 0
      %905 = vmatpush1.bf16.msra.mxu0 0
      %906 = vmatprep.subr.bf16.mxu0 0
      %907 = vmatpush1.bf16.msra.mxu0 0
      %908 = vmatprep.subr.bf16.mxu0 0
      %909 = vmatpush1.bf16.msra.mxu0 0
      %910 = vmatprep.subr.bf16.mxu0 0
      %911 = vmatpush1.bf16.msra.mxu0 0
      %912 = vmatprep.mubr.bf16.mxu0 0
      %913 = vmatmul.mubr.bf16.gmra.mrb[0].mxu0 %v416
      %v914 = vpop.f32.mrb[0].mxu0
      %v915 = vadd.f32 %v875, %v914
      %v916 = vpop.f32.mrb[0].mxu0
      %v917 = vpop.f32.mrb[0].mxu0
      %v918 = vpop.f32.mrb[0].mxu0
      %919 = vdwg.mxu0
      %p920 = scmp.eq.s32.totalorder %s22, 0
      // Predicated region
      $region37: #{simple_cnn_forward.5} parent=35 // pred_check
        %p921 = pneg %p920
      $region38: #{simple_cnn_forward.5} parent=35 // pred_check_branch
        %923 = sbr.rel (%p921) target = $region40
      $region39: #{simple_cnn_forward.5} parent=35 // pred_region
        %924 = vst [vmem:[#allocation2] sm:$0xff] %v915
      $region40: #{simple_cnn_forward.5} parent=35 // pred_fallthru
        _
      %p925 = scmp.gt.s32.totalorder %s22, 0
      // Predicated region
      $region41: #{simple_cnn_forward.5} parent=35 // pred_check
        %p926 = pneg %p925
      $region42: #{simple_cnn_forward.5} parent=35 // pred_check_branch
        %928 = sbr.rel (%p926) target = $region44
      $region43: #{simple_cnn_forward.5} parent=35 // pred_region
        %v929 = vld [vmem:[#allocation2] sm:$0xff]
        %v930 = vmax.f32 %v929, %v915
        %931 = vst [vmem:[#allocation2] sm:$0xff] %v930
      $region44: #{simple_cnn_forward.5} parent=35 // pred_fallthru
        _
      %p932 = scmp.eq.s32.totalorder %s22, 3
      // Predicated region
      $region45: #{simple_cnn_forward.5} parent=35 // pred_check
        %p933 = pneg %p932
      $region46: #{simple_cnn_forward.5} parent=35 // pred_check_branch
        %935 = sbr.rel (%p933) target = $region48
      $region47: #{simple_cnn_forward.5} parent=35 // pred_region
        %v936 = vld [vmem:[#allocation2] sm:$0xff]
        %v937 = vld [vmem:[%s271] sm:$0x1]
        %v939 = vlaneseq
        %v940 = vshrl.u32 %v939, 7
        %v941 = vsub.s32 0, %v940
        %v942 = vrot.slane %v937, %v941
        %v944 = vmul.f32 %v936, %v942
        %v945 = vld [vmem:[%s274] sm:$0x1]
        %v947 = vlaneseq
        %v948 = vshrl.u32 %v947, 7
        %v949 = vsub.s32 0, %v948
        %v950 = vrot.slane %v945, %v949
        %v952 = vadd.f32 %v944, %v950
        %v953 = vmax.f32 %v952, 0.0
        %v954 = vpack.c.bf16 %v953, %v953
        %955 = vst [vmem:[%s281] sm:$0xf] %v954
      $region48: #{simple_cnn_forward.5} parent=35 // pred_fallthru
        _
      %p956 = scmp.lt.s32.totalorder %s20, 0
      %s957 = scalar_select %p956, %s20, 0
      %p958 = scmp.lt.s32.totalorder %s21, 0
      %s959 = scalar_select %p958, %s21, 0
      %s960 = sadd.s32 %s959, %s957
      %s961 = smul.addr %s960, 4
      %s962 = scalar_lea.vmem %s4, %s961
      // Predicated region
      $region49: #{simple_cnn_forward.5} parent=35 // pred_check
        %p963 = pneg %p160
      $region50: #{simple_cnn_forward.5} parent=35 // pred_check_branch
        %965 = sbr.rel (%p963) target = $region52
      $region51: #{simple_cnn_forward.5} parent=35 // pred_region
        _
      $region52: #{simple_cnn_forward.5} parent=35 // pred_fallthru
        _
      // Predicated region
      $region53: #{simple_cnn_forward.5} parent=35 // pred_check
        %p966 = pneg %p160
      $region54: #{simple_cnn_forward.5} parent=35 // pred_check_branch
        %968 = sbr.rel (%p966) target = $region56
      $region55: #{simple_cnn_forward.5} parent=35 // pred_region
        %p969 = scmp.lt.s32.totalorder %s20, 0
        %s970 = scalar_select %p969, %s20, 0
        %p971 = scmp.lt.s32.totalorder %s21, 0
        %s972 = scalar_select %p971, %s21, 0
        %s973 = sadd.s32 %s972, %s970
        %s974 = smul.addr %s973, 4
        %s975 = scalar_lea.vmem %s4, %s974
      $region56: #{simple_cnn_forward.5} parent=35 // pred_fallthru
        _
    $region36: #{simple_cnn_forward.5} parent=5 // pred_fallthru
      _
    %p976 = scmp.le.s32.totalorder 2, %s10
    // Predicated region
    $region57: #{simple_cnn_forward.5} parent=5 // pred_check
      %p977 = pneg %p976
    $region58: #{simple_cnn_forward.5} parent=5 // pred_check_branch
      %979 = sbr.rel (%p977) target = $region60
    $region59: #{simple_cnn_forward.5} parent=5 // pred_region
      %s980 = ssub.s32 %s10, 2
    $region60: #{simple_cnn_forward.5} parent=5 // pred_fallthru
      _
  $region6: #{simple_cnn_forward.5} parent=0 // loop_footer
    %s14 = sadd.s32 1, %s10
  $region7: #{simple_cnn_forward.5} parent=0 // loop_footer_branch
    %9 = sbr.rel target = $region3
  $region8: #{simple_cnn_forward.5} parent=0 // loop_exit
    _

// kernel: simple_cnn_forward.6
$region0: #{simple_cnn_forward.6}
  #allocation0 [shape = 'u32[]', space=smem, size = 0x4, offset = 0x4, fixed_abs, tag = 'smem constant byte address 0x4 - core index']
  #allocation1 [shape = 'u32[144,128]{1,0:T(1,128)}', space=vmem, size = 0x12000, scoped, tag = 'internal scratch']
  #allocation2 [shape = 'f32[2,128]{1,0:T(2,128)}', space=vmem, size = 0x400, scoped, tag = 'scratch operand']
  %s0 = inlined_call_operand.vmem [shape: bf16[4,2,640], index: 0, kind: input, shape index: {}]
  %s1 = inlined_call_operand.vmem [shape: bf16[640,128], index: 1, kind: input, shape index: {}]
  %s2 = inlined_call_operand.vmem [shape: f32[1,128], index: 2, kind: input, shape index: {}]
  %s3 = inlined_call_operand.vmem [shape: f32[1,128], index: 3, kind: input, shape index: {}]
  %s4 = inlined_call_operand.vmem [shape: bf16[2,128], index: 4, kind: output, shape index: {}]
  %s5 = sld [smem:[#allocation0]]
  $region61: #{simple_cnn_forward.6} parent=0
    _
  %s7 = ssub.s32 1, %s5
  %s8 = scalar_select 0, %s7, %s5
  loop: start=0, step=1, limit=6
  $region2: #{simple_cnn_forward.6} parent=0 // loop_pre_header
    _
  $region3: #{simple_cnn_forward.6} parent=0 // loop_header
    %s10 = sphi 0, %s14
    %p11 = scmp.ge.s32.totalorder %s10, 6
    %s17 = sphi 0, %s36
    %s18 = sphi 0, %s32
    %s19 = sphi 0, %s28
    %s20 = sphi 0, %s17
    %s21 = sphi 0, %s18
    %s22 = sphi 0, %s19
    %s23 = sphi 0, %s20
    %s24 = sphi 0, %s21
    %s25 = sphi 0, %s22
    %s41 = sphi 0, %s43
    %s44 = sphi 0, %s41
    %s45 = sphi 0, %s44
    %s61 = sphi 0, %s45
    %s67 = sphi 0, %s69
    %s70 = sphi 0, %s67
    %s71 = sphi 0, %s70
    %s87 = sphi 0, %s71
    %s93 = sphi 0, %s95
    %s96 = sphi 0, %s93
    %s97 = sphi 0, %s96
    %s113 = sphi 0, %s97
    %s119 = sphi 0, %s121
    %s122 = sphi 0, %s119
    %s123 = sphi 0, %s122
    %s139 = sphi 0, %s123
    %s147 = sphi 0, %s149
    %s150 = sphi 0, %s147
    %s151 = sphi 0, %s150
    %s167 = sphi 0, %s151
  $region4: #{simple_cnn_forward.6} parent=0 // loop_header_branch
    %13 = sbr.rel (%p11) target = $region8
  $region5: #{simple_cnn_forward.6} parent=0 // loop_body
    %s15 = ssub.s32 %s10, 1
    %s16 = ssub.s32 %s10, 2
    %s26 = sadd.s32 1, %s19
    %p27 = scmp.ge.s32.totalorder %s26, 4
    %s28 = scalar_select %p27, 0, %s26
    %s29 = sadd.s32 1, %s18
    %s30 = scalar_select %p27, %s29, %s18
    %p31 = scmp.ge.s32.totalorder %s30, 1
    %s32 = scalar_select %p31, 0, %s30
    %s33 = sadd.s32 1, %s17
    %s34 = scalar_select %p31, %s33, %s17
    %p35 = scmp.ge.s32.totalorder %s34, 1
    %s36 = scalar_select %p35, 0, %s34
    %s37 = ssub.s32 %s19, %s28
    %s38 = ssub.s32 %s17, %s36
    %s39 = sor.u32 %s37, %s38
    %p40 = scmp.eq.s32.totalorder %s39, 0
    %s42 = sadd.s32 %s41, 1
    %s43 = scalar_select %p40, %s41, %s42
    %p46 = pneg %p40
    %p47 = scmp.eq.s32.totalorder %s10, 3
    %p48 = por %p46, %p47
    %p49 = scmp.ne.s32.totalorder %s41, %s44
    %p50 = scmp.eq.s32.totalorder %s10, 0
    %p51 = por %p49, %p50
    %p52 = scmp.ne.s32.totalorder %s41, %s44
    %p53 = scmp.eq.s32.totalorder %s15, 3
    %p54 = por %p52, %p53
    %p55 = scmp.ne.s32.totalorder %s44, %s45
    %p56 = scmp.eq.s32.totalorder %s15, 0
    %p57 = por %p55, %p56
    %p58 = scmp.ne.s32.totalorder %s44, %s45
    %p59 = scmp.eq.s32.totalorder %s16, 3
    %p60 = por %p58, %p59
    %p62 = scmp.ne.s32.totalorder %s45, %s61
    %p63 = scmp.eq.s32.totalorder %s16, 0
    %p64 = por %p62, %p63
    %s65 = ssub.s32 %s18, %s32
    %p66 = scmp.eq.s32.totalorder %s65, 0
    %s68 = sadd.s32 %s67, 1
    %s69 = scalar_select %p66, %s67, %s68
    %p72 = pneg %p66
    %p73 = scmp.eq.s32.totalorder %s10, 3
    %p74 = por %p72, %p73
    %p75 = scmp.ne.s32.totalorder %s67, %s70
    %p76 = scmp.eq.s32.totalorder %s10, 0
    %p77 = por %p75, %p76
    %p78 = scmp.ne.s32.totalorder %s67, %s70
    %p79 = scmp.eq.s32.totalorder %s15, 3
    %p80 = por %p78, %p79
    %p81 = scmp.ne.s32.totalorder %s70, %s71
    %p82 = scmp.eq.s32.totalorder %s15, 0
    %p83 = por %p81, %p82
    %p84 = scmp.ne.s32.totalorder %s70, %s71
    %p85 = scmp.eq.s32.totalorder %s16, 3
    %p86 = por %p84, %p85
    %p88 = scmp.ne.s32.totalorder %s71, %s87
    %p89 = scmp.eq.s32.totalorder %s16, 0
    %p90 = por %p88, %p89
    %s91 = ssub.s32 %s18, %s32
    %p92 = scmp.eq.s32.totalorder %s91, 0
    %s94 = sadd.s32 %s93, 1
    %s95 = scalar_select %p92, %s93, %s94
    %p98 = pneg %p92
    %p99 = scmp.eq.s32.totalorder %s10, 3
    %p100 = por %p98, %p99
    %p101 = scmp.ne.s32.totalorder %s93, %s96
    %p102 = scmp.eq.s32.totalorder %s10, 0
    %p103 = por %p101, %p102
    %p104 = scmp.ne.s32.totalorder %s93, %s96
    %p105 = scmp.eq.s32.totalorder %s15, 3
    %p106 = por %p104, %p105
    %p107 = scmp.ne.s32.totalorder %s96, %s97
    %p108 = scmp.eq.s32.totalorder %s15, 0
    %p109 = por %p107, %p108
    %p110 = scmp.ne.s32.totalorder %s96, %s97
    %p111 = scmp.eq.s32.totalorder %s16, 3
    %p112 = por %p110, %p111
    %p114 = scmp.ne.s32.totalorder %s97, %s113
    %p115 = scmp.eq.s32.totalorder %s16, 0
    %p116 = por %p114, %p115
    %s117 = ssub.s32 %s18, %s32
    %p118 = scmp.eq.s32.totalorder %s117, 0
    %s120 = sadd.s32 %s119, 1
    %s121 = scalar_select %p118, %s119, %s120
    %p124 = pneg %p118
    %p125 = scmp.eq.s32.totalorder %s10, 3
    %p126 = por %p124, %p125
    %p127 = scmp.ne.s32.totalorder %s119, %s122
    %p128 = scmp.eq.s32.totalorder %s10, 0
    %p129 = por %p127, %p128
    %p130 = scmp.ne.s32.totalorder %s119, %s122
    %p131 = scmp.eq.s32.totalorder %s15, 3
    %p132 = por %p130, %p131
    %p133 = scmp.ne.s32.totalorder %s122, %s123
    %p134 = scmp.eq.s32.totalorder %s15, 0
    %p135 = por %p133, %p134
    %p136 = scmp.ne.s32.totalorder %s122, %s123
    %p137 = scmp.eq.s32.totalorder %s16, 3
    %p138 = por %p136, %p137
    %p140 = scmp.ne.s32.totalorder %s123, %s139
    %p141 = scmp.eq.s32.totalorder %s16, 0
    %p142 = por %p140, %p141
    %s143 = ssub.s32 %s17, %s36
    %s144 = ssub.s32 %s18, %s32
    %s145 = sor.u32 %s143, %s144
    %p146 = scmp.eq.s32.totalorder %s145, 0
    %s148 = sadd.s32 %s147, 1
    %s149 = scalar_select %p146, %s147, %s148
    %p152 = pneg %p146
    %p153 = scmp.eq.s32.totalorder %s10, 3
    %p154 = por %p152, %p153
    %p155 = scmp.ne.s32.totalorder %s147, %s150
    %p156 = scmp.eq.s32.totalorder %s10, 0
    %p157 = por %p155, %p156
    %p158 = scmp.ne.s32.totalorder %s147, %s150
    %p159 = scmp.eq.s32.totalorder %s15, 3
    %p160 = por %p158, %p159
    %p161 = scmp.ne.s32.totalorder %s150, %s151
    %p162 = scmp.eq.s32.totalorder %s15, 0
    %p163 = por %p161, %p162
    %p164 = scmp.ne.s32.totalorder %s150, %s151
    %p165 = scmp.eq.s32.totalorder %s16, 3
    %p166 = por %p164, %p165
    %p168 = scmp.ne.s32.totalorder %s151, %s167
    %p169 = scmp.eq.s32.totalorder %s16, 0
    %p170 = por %p168, %p169
    %p171 = scmp.le.s32.totalorder 1, %s10
    %p172 = scmp.lt.s32.totalorder %s10, 5
    %p173 = pnand %p171, %p172
    %p174 = pneg %p173
    // Predicated region
    $region9: #{simple_cnn_forward.6} parent=5 // pred_check
      _
    $region10: #{simple_cnn_forward.6} parent=5 // pred_check_branch
      %176 = sbr.rel (%p173) target = $region12
    $region11: #{simple_cnn_forward.6} parent=5 // pred_region
      %s177 = ssub.s32 %s10, 1
      // Predicated region
      $region13: #{simple_cnn_forward.6} parent=11 // pred_check
        %p178 = pneg %p83
      $region14: #{simple_cnn_forward.6} parent=11 // pred_check_branch
        %180 = sbr.rel (%p178) target = $region16
      $region15: #{simple_cnn_forward.6} parent=11 // pred_region
        %p181 = scmp.lt.s32.totalorder %s21, 0
        %s182 = scalar_select %p181, %s21, 0
        %s183 = smul.addr %s182, 4
        %s184 = scalar_lea.vmem %s1, %s183
      $region16: #{simple_cnn_forward.6} parent=11 // pred_fallthru
        _
      // Predicated region
      $region17: #{simple_cnn_forward.6} parent=11 // pred_check
        %p185 = pneg %p109
      $region18: #{simple_cnn_forward.6} parent=11 // pred_check_branch
        %187 = sbr.rel (%p185) target = $region20
      $region19: #{simple_cnn_forward.6} parent=11 // pred_region
        %p188 = scmp.lt.s32.totalorder %s21, 0
        %s189 = scalar_select %p188, %s21, 0
        %s190 = scalar_lea.vmem %s2, %s189
      $region20: #{simple_cnn_forward.6} parent=11 // pred_fallthru
        _
      // Predicated region
      $region21: #{simple_cnn_forward.6} parent=11 // pred_check
        %p191 = pneg %p135
      $region22: #{simple_cnn_forward.6} parent=11 // pred_check_branch
        %193 = sbr.rel (%p191) target = $region24
      $region23: #{simple_cnn_forward.6} parent=11 // pred_region
        %p194 = scmp.lt.s32.totalorder %s21, 0
        %s195 = scalar_select %p194, %s21, 0
        %s196 = scalar_lea.vmem %s3, %s195
      $region24: #{simple_cnn_forward.6} parent=11 // pred_fallthru
        _
    $region12: #{simple_cnn_forward.6} parent=5 // pred_fallthru
      _
    %p197 = scmp.lt.s32.totalorder %s10, 4
    // Predicated region
    $region25: #{simple_cnn_forward.6} parent=5 // pred_check
      %p198 = pneg %p197
    $region26: #{simple_cnn_forward.6} parent=5 // pred_check_branch
      %200 = sbr.rel (%p198) target = $region28
    $region27: #{simple_cnn_forward.6} parent=5 // pred_region
      // Predicated region
      $region29: #{simple_cnn_forward.6} parent=27 // pred_check
        %p201 = pneg %p51
      $region30: #{simple_cnn_forward.6} parent=27 // pred_check_branch
        %203 = sbr.rel (%p201) target = $region32
      $region31: #{simple_cnn_forward.6} parent=27 // pred_region
        %p204 = scmp.lt.s32.totalorder %s19, 3
        %s205 = scalar_select %p204, %s19, 3
        %p206 = scmp.lt.s32.totalorder %s17, 0
        %s207 = scalar_select %p206, %s17, 0
        %s208 = smul.addr %s207, 5
        %s209 = smul.addr %s205, 5
        %s210 = sadd.s32 %s208, %s209
        %s211 = scalar_lea.vmem %s0, %s210
      $region32: #{simple_cnn_forward.6} parent=27 // pred_fallthru
        _
    $region28: #{simple_cnn_forward.6} parent=5 // pred_fallthru
      _
    %p212 = scmp.le.s32.totalorder 1, %s10
    %p213 = scmp.lt.s32.totalorder %s10, 5
    %p214 = pnand %p212, %p213
    %p215 = pneg %p214
    // Predicated region
    $region33: #{simple_cnn_forward.6} parent=5 // pred_check
      _
    $region34: #{simple_cnn_forward.6} parent=5 // pred_check_branch
      %217 = sbr.rel (%p214) target = $region36
    $region35: #{simple_cnn_forward.6} parent=5 // pred_region
      %s218 = ssub.s32 %s10, 1
      %p219 = scmp.lt.s32.totalorder %s22, 3
      %s220 = scalar_select %p219, %s22, 3
      %p221 = scmp.lt.s32.totalorder %s20, 0
      %s222 = scalar_select %p221, %s20, 0
      %s223 = smul.addr %s222, 5
      %s224 = smul.addr %s220, 5
      %s225 = sadd.s32 %s223, %s224
      %s226 = scalar_lea.vmem %s0, %s225
      %p227 = pneg %p57
      %p228 = pneg %p54
      %p229 = scmp.lt.s32.totalorder %s21, 0
      %s230 = scalar_select %p229, %s21, 0
      %s231 = smul.addr %s230, 4
      %s232 = scalar_lea.vmem %s1, %s231
      %p233 = pneg %p83
      %p234 = pneg %p80
      %p235 = scmp.lt.s32.totalorder %s21, 0
      %s236 = scalar_select %p235, %s21, 0
      %s237 = scalar_lea.vmem %s2, %s236
      %p238 = pneg %p109
      %p239 = pneg %p106
      %p240 = scmp.lt.s32.totalorder %s21, 0
      %s241 = scalar_select %p240, %s21, 0
      %s242 = scalar_lea.vmem %s3, %s241
      %p243 = pneg %p135
      %p244 = pneg %p132
      %p245 = pneg %p163
      %p246 = pneg %p160
      %p247 = scmp.lt.s32.totalorder %s20, 0
      %s248 = scalar_select %p247, %s20, 0
      %p249 = scmp.lt.s32.totalorder %s21, 0
      %s250 = scalar_select %p249, %s21, 0
      %s251 = sadd.s32 %s250, %s248
      %s252 = scalar_lea.vmem %s4, %s251
      %p253 = scmp.lt.s32.totalorder %s22, 3
      %s254 = scalar_select %p253, %s22, 3
      %p255 = scmp.lt.s32.totalorder %s20, 0
      %s256 = scalar_select %p255, %s20, 0
      %s257 = smul.addr %s256, 5
      %s258 = smul.addr %s254, 5
      %s259 = sadd.s32 %s257, %s258
      %s260 = scalar_lea.vmem %s0, %s259
      %p261 = scmp.lt.s32.totalorder %s21, 0
      %s262 = scalar_select %p261, %s21, 0
      %s263 = smul.addr %s262, 4
      %s264 = scalar_lea.vmem %s1, %s263
      %p265 = scmp.lt.s32.totalorder %s21, 0
      %s266 = scalar_select %p265, %s21, 0
      %s267 = scalar_lea.vmem %s2, %s266
      %p268 = scmp.lt.s32.totalorder %s21, 0
      %s269 = scalar_select %p268, %s21, 0
      %s270 = scalar_lea.vmem %s3, %s269
      %p271 = scmp.lt.s32.totalorder %s20, 0
      %s272 = scalar_select %p271, %s20, 0
      %p273 = scmp.lt.s32.totalorder %s21, 0
      %s274 = scalar_select %p273, %s21, 0
      %s275 = sadd.s32 %s274, %s272
      %s276 = scalar_lea.vmem %s4, %s275
      %v278 = vld [vmem:[%s260] sm:$0x1f]
      %v279 = vld [vmem:[%s264] sm:$0xf]
      %v280 = vld [vmem:[%s264 + $0x4] sm:$0xf]
      %v281 = vld [vmem:[%s264 + $0x8] sm:$0xf]
      %v282 = vld [vmem:[%s264 + $0xc] sm:$0xf]
      %v283 = vld [vmem:[%s264 + $0x10] sm:$0xf]
      %v284 = vld [vmem:[%s264 + $0x14] sm:$0xf]
      %v285 = vld [vmem:[%s264 + $0x18] sm:$0xf]
      %v286 = vld [vmem:[%s264 + $0x1c] sm:$0xf]
      %v287 = vld [vmem:[%s264 + $0x20] sm:$0xf]
      %v288 = vld [vmem:[%s264 + $0x24] sm:$0xf]
      %v289 = vld [vmem:[%s264 + $0x28] sm:$0xf]
      %v290 = vld [vmem:[%s264 + $0x2c] sm:$0xf]
      %v291 = vld [vmem:[%s264 + $0x30] sm:$0xf]
      %v292 = vld [vmem:[%s264 + $0x34] sm:$0xf]
      %v293 = vld [vmem:[%s264 + $0x38] sm:$0xf]
      %v294 = vld [vmem:[%s264 + $0x3c] sm:$0xf]
      %v295 = vld [vmem:[%s264 + $0x40] sm:$0xf]
      %v296 = vld [vmem:[%s264 + $0x44] sm:$0xf]
      %v297 = vld [vmem:[%s264 + $0x48] sm:$0xf]
      %v298 = vld [vmem:[%s264 + $0x4c] sm:$0xf]
      %v299 = vld [vmem:[%s264 + $0x50] sm:$0xf]
      %v300 = vld [vmem:[%s264 + $0x54] sm:$0xf]
      %v301 = vld [vmem:[%s264 + $0x58] sm:$0xf]
      %v302 = vld [vmem:[%s264 + $0x5c] sm:$0xf]
      %v303 = vld [vmem:[%s264 + $0x60] sm:$0xf]
      %v304 = vld [vmem:[%s264 + $0x64] sm:$0xf]
      %v305 = vld [vmem:[%s264 + $0x68] sm:$0xf]
      %v306 = vld [vmem:[%s264 + $0x6c] sm:$0xf]
      %v307 = vld [vmem:[%s264 + $0x70] sm:$0xf]
      %v308 = vld [vmem:[%s264 + $0x74] sm:$0xf]
      %v309 = vld [vmem:[%s264 + $0x78] sm:$0xf]
      %v310 = vld [vmem:[%s264 + $0x7c] sm:$0xf]
      %v311 = vld [vmem:[%s264 + $0x80] sm:$0xf]
      %v312 = vld [vmem:[%s264 + $0x84] sm:$0xf]
      %v313 = vld [vmem:[%s264 + $0x88] sm:$0xf]
      %v314 = vld [vmem:[%s264 + $0x8c] sm:$0xf]
      %v315 = vld [vmem:[%s264 + $0x90] sm:$0xf]
      %v316 = vld [vmem:[%s264 + $0x94] sm:$0xf]
      %v317 = vld [vmem:[%s264 + $0x98] sm:$0xf]
      %v318 = vld [vmem:[%s264 + $0x9c] sm:$0xf]
      %v319 = vld [vmem:[%s264 + $0xa0] sm:$0xf]
      %v320 = vld [vmem:[%s264 + $0xa4] sm:$0xf]
      %v321 = vld [vmem:[%s264 + $0xa8] sm:$0xf]
      %v322 = vld [vmem:[%s264 + $0xac] sm:$0xf]
      %v323 = vld [vmem:[%s264 + $0xb0] sm:$0xf]
      %v324 = vld [vmem:[%s264 + $0xb4] sm:$0xf]
      %v325 = vld [vmem:[%s264 + $0xb8] sm:$0xf]
      %v326 = vld [vmem:[%s264 + $0xbc] sm:$0xf]
      %v327 = vld [vmem:[%s264 + $0xc0] sm:$0xf]
      %v328 = vld [vmem:[%s264 + $0xc4] sm:$0xf]
      %v329 = vld [vmem:[%s264 + $0xc8] sm:$0xf]
      %v330 = vld [vmem:[%s264 + $0xcc] sm:$0xf]
      %v331 = vld [vmem:[%s264 + $0xd0] sm:$0xf]
      %v332 = vld [vmem:[%s264 + $0xd4] sm:$0xf]
      %v333 = vld [vmem:[%s264 + $0xd8] sm:$0xf]
      %v334 = vld [vmem:[%s264 + $0xdc] sm:$0xf]
      %v335 = vld [vmem:[%s264 + $0xe0] sm:$0xf]
      %v336 = vld [vmem:[%s264 + $0xe4] sm:$0xf]
      %v337 = vld [vmem:[%s264 + $0xe8] sm:$0xf]
      %v338 = vld [vmem:[%s264 + $0xec] sm:$0xf]
      %v339 = vld [vmem:[%s264 + $0xf0] sm:$0xf]
      %v340 = vld [vmem:[%s264 + $0xf4] sm:$0xf]
      %v341 = vld [vmem:[%s264 + $0xf8] sm:$0xf]
      %v342 = vld [vmem:[%s264 + $0xfc] sm:$0xf]
      %v343 = vld [vmem:[%s264 + $0x100] sm:$0xf]
      %v344 = vld [vmem:[%s264 + $0x104] sm:$0xf]
      %v345 = vld [vmem:[%s264 + $0x108] sm:$0xf]
      %v346 = vld [vmem:[%s264 + $0x10c] sm:$0xf]
      %v347 = vld [vmem:[%s264 + $0x110] sm:$0xf]
      %v348 = vld [vmem:[%s264 + $0x114] sm:$0xf]
      %v349 = vld [vmem:[%s264 + $0x118] sm:$0xf]
      %v350 = vld [vmem:[%s264 + $0x11c] sm:$0xf]
      %v351 = vld [vmem:[%s264 + $0x120] sm:$0xf]
      %v352 = vld [vmem:[%s264 + $0x124] sm:$0xf]
      %v353 = vld [vmem:[%s264 + $0x128] sm:$0xf]
      %v354 = vld [vmem:[%s264 + $0x12c] sm:$0xf]
      %v355 = vld [vmem:[%s264 + $0x130] sm:$0xf]
      %v356 = vld [vmem:[%s264 + $0x134] sm:$0xf]
      %v357 = vld [vmem:[%s264 + $0x138] sm:$0xf]
      %v358 = vld [vmem:[%s264 + $0x13c] sm:$0xf]
      %v360 = vcombine.high %v278, %v278
      %v362 = vunpack.c.l.s4 1966171168
      %v363 = vunpack.c.0.s8 %v362
      %v364 = vlaneseq
      %v365 = vshrl.u32 %v364, 7
      %v366 = vsub.s32 %v363, %v365
      %v367 = vrot.slane %v278, %v366
      %v369 = vunpack.c.l.s4 1966171168
      %v370 = vunpack.c.0.s8 %v369
      %v371 = vlaneseq
      %v372 = vshrl.u32 %v371, 7
      %v373 = vsub.s32 %v370, %v372
      %v374 = vrot.slane %v360, %v373
      %v375 = vcombine.high %v367, %v367
      %v377 = vunpack.c.l.s4 1966171168
      %v378 = vunpack.c.0.s8 %v377
      %v379 = vlaneseq
      %v380 = vshrl.u32 %v379, 7
      %v381 = vsub.s32 %v378, %v380
      %v382 = vrot.slane %v367, %v381
      %v384 = vunpack.c.l.s4 1966171168
      %v385 = vunpack.c.0.s8 %v384
      %v386 = vlaneseq
      %v387 = vshrl.u32 %v386, 7
      %v388 = vsub.s32 %v385, %v387
      %v389 = vrot.slane %v374, %v388
      %v391 = vunpack.c.l.s4 1966171168
      %v392 = vunpack.c.0.s8 %v391
      %v393 = vlaneseq
      %v394 = vshrl.u32 %v393, 7
      %v395 = vsub.s32 %v392, %v394
      %v396 = vrot.slane %v375, %v395
      %v397 = vcombine.high %v382, %v382
      %v398 = vcombine.high %v396, %v396
      %v484 = vunpack.c.l.b16 %v279
      %v485 = vunpack.c.l.b16 %v280
      %v486 = vunpack.c.l.b16 %v281
      %v487 = vunpack.c.l.b16 %v282
      %v488 = vunpack.c.l.b16 %v283
      %v489 = vunpack.c.l.b16 %v284
      %v490 = vunpack.c.l.b16 %v285
      %v491 = vunpack.c.l.b16 %v286
      %v492 = vunpack.c.l.b16 %v287
      %v493 = vunpack.c.l.b16 %v288
      %v494 = vunpack.c.l.b16 %v289
      %v495 = vunpack.c.l.b16 %v290
      %v496 = vunpack.c.l.b16 %v291
      %v497 = vunpack.c.l.b16 %v292
      %v498 = vunpack.c.l.b16 %v293
      %v499 = vunpack.c.l.b16 %v294
      %v500 = vunpack.c.l.b16 %v295
      %v501 = vunpack.c.l.b16 %v296
      %v502 = vunpack.c.l.b16 %v297
      %v503 = vunpack.c.l.b16 %v298
      %v504 = vunpack.c.l.b16 %v299
      %v505 = vunpack.c.l.b16 %v300
      %v506 = vunpack.c.l.b16 %v301
      %v507 = vunpack.c.l.b16 %v302
      %v508 = vunpack.c.l.b16 %v303
      %v509 = vunpack.c.l.b16 %v304
      %v510 = vunpack.c.l.b16 %v305
      %v511 = vunpack.c.l.b16 %v306
      %v512 = vunpack.c.l.b16 %v307
      %v513 = vunpack.c.l.b16 %v308
      %v514 = vunpack.c.l.b16 %v309
      %v515 = vunpack.c.l.b16 %v310
      %v516 = vunpack.c.l.b16 %v311
      %v517 = vunpack.c.l.b16 %v312
      %v518 = vunpack.c.l.b16 %v313
      %v519 = vunpack.c.l.b16 %v314
      %v520 = vunpack.c.l.b16 %v315
      %v521 = vunpack.c.l.b16 %v316
      %v522 = vunpack.c.l.b16 %v317
      %v523 = vunpack.c.l.b16 %v318
      %v524 = vunpack.c.l.b16 %v319
      %v525 = vunpack.c.l.b16 %v320
      %v526 = vunpack.c.l.b16 %v321
      %v527 = vunpack.c.l.b16 %v322
      %v528 = vunpack.c.l.b16 %v323
      %v529 = vunpack.c.l.b16 %v324
      %v530 = vunpack.c.l.b16 %v325
      %v531 = vunpack.c.l.b16 %v326
      %v532 = vunpack.c.l.b16 %v327
      %v533 = vunpack.c.l.b16 %v328
      %v534 = vunpack.c.l.b16 %v329
      %v535 = vunpack.c.l.b16 %v330
      %v536 = vunpack.c.l.b16 %v331
      %v537 = vunpack.c.l.b16 %v332
      %v538 = vunpack.c.l.b16 %v333
      %v539 = vunpack.c.l.b16 %v334
      %v540 = vunpack.c.l.b16 %v335
      %v541 = vunpack.c.l.b16 %v336
      %v542 = vunpack.c.l.b16 %v337
      %v543 = vunpack.c.l.b16 %v338
      %v544 = vunpack.c.l.b16 %v339
      %v545 = vunpack.c.l.b16 %v340
      %v546 = vunpack.c.l.b16 %v341
      %v547 = vunpack.c.l.b16 %v342
      %v548 = vunpack.c.l.b16 %v343
      %v549 = vunpack.c.l.b16 %v344
      %v550 = vunpack.c.l.b16 %v345
      %v551 = vunpack.c.l.b16 %v346
      %v552 = vunpack.c.l.b16 %v347
      %v553 = vunpack.c.l.b16 %v348
      %v554 = vunpack.c.l.b16 %v349
      %v555 = vunpack.c.l.b16 %v350
      %v556 = vunpack.c.l.b16 %v351
      %v557 = vunpack.c.l.b16 %v352
      %v558 = vunpack.c.l.b16 %v353
      %v559 = vunpack.c.l.b16 %v354
      %v560 = vunpack.c.l.b16 %v355
      %v561 = vunpack.c.l.b16 %v356
      %v562 = vunpack.c.l.b16 %v357
      %v563 = vunpack.c.l.b16 %v358
      %v564 = vpack.c.b16 %v485, %v484
      %v565 = vpack.c.b16 %v487, %v486
      %v566 = vpack.c.b16 %v489, %v488
      %v567 = vpack.c.b16 %v491, %v490
      %v568 = vpack.c.b16 %v493, %v492
      %v569 = vpack.c.b16 %v495, %v494
      %v570 = vpack.c.b16 %v497, %v496
      %v571 = vpack.c.b16 %v499, %v498
      %v572 = vpack.c.b16 %v501, %v500
      %v573 = vpack.c.b16 %v503, %v502
      %v574 = vpack.c.b16 %v505, %v504
      %v575 = vpack.c.b16 %v507, %v506
      %v576 = vpack.c.b16 %v509, %v508
      %v577 = vpack.c.b16 %v511, %v510
      %v578 = vpack.c.b16 %v513, %v512
      %v579 = vpack.c.b16 %v515, %v514
      %v580 = vpack.c.b16 %v517, %v516
      %v581 = vpack.c.b16 %v519, %v518
      %v582 = vpack.c.b16 %v521, %v520
      %v583 = vpack.c.b16 %v523, %v522
      %v584 = vpack.c.b16 %v525, %v524
      %v585 = vpack.c.b16 %v527, %v526
      %v586 = vpack.c.b16 %v529, %v528
      %v587 = vpack.c.b16 %v531, %v530
      %v588 = vpack.c.b16 %v533, %v532
      %v589 = vpack.c.b16 %v535, %v534
      %v590 = vpack.c.b16 %v537, %v536
      %v591 = vpack.c.b16 %v539, %v538
      %v592 = vpack.c.b16 %v541, %v540
      %v593 = vpack.c.b16 %v543, %v542
      %v594 = vpack.c.b16 %v545, %v544
      %v595 = vpack.c.b16 %v547, %v546
      %v596 = vpack.c.b16 %v549, %v548
      %v597 = vpack.c.b16 %v551, %v550
      %v598 = vpack.c.b16 %v553, %v552
      %v599 = vpack.c.b16 %v555, %v554
      %v600 = vpack.c.b16 %v557, %v556
      %v601 = vpack.c.b16 %v559, %v558
      %v602 = vpack.c.b16 %v561, %v560
      %v603 = vpack.c.b16 %v563, %v562
      %644 = vmatprep.subr.bf16.mxu0 0
      %645 = vmatpush1.bf16.msra.mxu0 %v564
      %646 = vmatprep.subr.bf16.mxu0 0
      %647 = vmatpush1.bf16.msra.mxu0 %v565
      %648 = vmatprep.subr.bf16.mxu0 0
      %649 = vmatpush1.bf16.msra.mxu0 %v566
      %650 = vmatprep.subr.bf16.mxu0 0
      %651 = vmatpush1.bf16.msra.mxu0 %v567
      %652 = vmatprep.subr.bf16.mxu0 0
      %653 = vmatpush1.bf16.msra.mxu0 %v568
      %654 = vmatprep.subr.bf16.mxu0 0
      %655 = vmatpush1.bf16.msra.mxu0 %v569
      %656 = vmatprep.subr.bf16.mxu0 0
      %657 = vmatpush1.bf16.msra.mxu0 %v570
      %658 = vmatprep.subr.bf16.mxu0 0
      %659 = vmatpush1.bf16.msra.mxu0 %v571
      %660 = vmatprep.subr.bf16.mxu0 0
      %661 = vmatpush1.bf16.msra.mxu0 %v572
      %662 = vmatprep.subr.bf16.mxu0 0
      %663 = vmatpush1.bf16.msra.mxu0 %v573
      %664 = vmatprep.subr.bf16.mxu0 0
      %665 = vmatpush1.bf16.msra.mxu0 %v574
      %666 = vmatprep.subr.bf16.mxu0 0
      %667 = vmatpush1.bf16.msra.mxu0 %v575
      %668 = vmatprep.subr.bf16.mxu0 0
      %669 = vmatpush1.bf16.msra.mxu0 %v576
      %670 = vmatprep.subr.bf16.mxu0 0
      %671 = vmatpush1.bf16.msra.mxu0 %v577
      %672 = vmatprep.subr.bf16.mxu0 0
      %673 = vmatpush1.bf16.msra.mxu0 %v578
      %674 = vmatprep.subr.bf16.mxu0 0
      %675 = vmatpush1.bf16.msra.mxu0 %v579
      %676 = vmatprep.mubr.bf16.mxu0 %v396
      %677 = vmatmul.mubr.bf16.gmra.mrb[0].mxu0 %v382
      %v678 = vpop.f32.mrb[0].mxu0
      %v679 = vadd.f32 0.0, %v678
      %v680 = vpop.f32.mrb[0].mxu0
      %v681 = vpop.f32.mrb[0].mxu0
      %v682 = vpop.f32.mrb[0].mxu0
      %683 = vdwg.mxu0
      %684 = vmatprep.subr.bf16.mxu0 0
      %685 = vmatpush1.bf16.msra.mxu0 %v580
      %686 = vmatprep.subr.bf16.mxu0 0
      %687 = vmatpush1.bf16.msra.mxu0 %v581
      %688 = vmatprep.subr.bf16.mxu0 0
      %689 = vmatpush1.bf16.msra.mxu0 %v582
      %690 = vmatprep.subr.bf16.mxu0 0
      %691 = vmatpush1.bf16.msra.mxu0 %v583
      %692 = vmatprep.subr.bf16.mxu0 0
      %693 = vmatpush1.bf16.msra.mxu0 %v584
      %694 = vmatprep.subr.bf16.mxu0 0
      %695 = vmatpush1.bf16.msra.mxu0 %v585
      %696 = vmatprep.subr.bf16.mxu0 0
      %697 = vmatpush1.bf16.msra.mxu0 %v586
      %698 = vmatprep.subr.bf16.mxu0 0
      %699 = vmatpush1.bf16.msra.mxu0 %v587
      %700 = vmatprep.subr.bf16.mxu0 0
      %701 = vmatpush1.bf16.msra.mxu0 %v588
      %702 = vmatprep.subr.bf16.mxu0 0
      %703 = vmatpush1.bf16.msra.mxu0 %v589
      %704 = vmatprep.subr.bf16.mxu0 0
      %705 = vmatpush1.bf16.msra.mxu0 %v590
      %706 = vmatprep.subr.bf16.mxu0 0
      %707 = vmatpush1.bf16.msra.mxu0 %v591
      %708 = vmatprep.subr.bf16.mxu0 0
      %709 = vmatpush1.bf16.msra.mxu0 %v592
      %710 = vmatprep.subr.bf16.mxu0 0
      %711 = vmatpush1.bf16.msra.mxu0 %v593
      %712 = vmatprep.subr.bf16.mxu0 0
      %713 = vmatpush1.bf16.msra.mxu0 %v594
      %714 = vmatprep.subr.bf16.mxu0 0
      %715 = vmatpush1.bf16.msra.mxu0 %v595
      %716 = vmatprep.mubr.bf16.mxu0 %v398
      %717 = vmatmul.mubr.bf16.gmra.mrb[0].mxu0 %v397
      %v718 = vpop.f32.mrb[0].mxu0
      %v719 = vadd.f32 %v679, %v718
      %v720 = vpop.f32.mrb[0].mxu0
      %v721 = vpop.f32.mrb[0].mxu0
      %v722 = vpop.f32.mrb[0].mxu0
      %723 = vdwg.mxu0
      %724 = vmatprep.subr.bf16.mxu0 0
      %725 = vmatpush1.bf16.msra.mxu0 %v596
      %726 = vmatprep.subr.bf16.mxu0 0
      %727 = vmatpush1.bf16.msra.mxu0 %v597
      %728 = vmatprep.subr.bf16.mxu0 0
      %729 = vmatpush1.bf16.msra.mxu0 %v598
      %730 = vmatprep.subr.bf16.mxu0 0
      %731 = vmatpush1.bf16.msra.mxu0 %v599
      %732 = vmatprep.subr.bf16.mxu0 0
      %733 = vmatpush1.bf16.msra.mxu0 %v600
      %734 = vmatprep.subr.bf16.mxu0 0
      %735 = vmatpush1.bf16.msra.mxu0 %v601
      %736 = vmatprep.subr.bf16.mxu0 0
      %737 = vmatpush1.bf16.msra.mxu0 %v602
      %738 = vmatprep.subr.bf16.mxu0 0
      %739 = vmatpush1.bf16.msra.mxu0 %v603
      %740 = vmatprep.subr.bf16.mxu0 0
      %741 = vmatpush1.bf16.msra.mxu0 0
      %742 = vmatprep.subr.bf16.mxu0 0
      %743 = vmatpush1.bf16.msra.mxu0 0
      %744 = vmatprep.subr.bf16.mxu0 0
      %745 = vmatpush1.bf16.msra.mxu0 0
      %746 = vmatprep.subr.bf16.mxu0 0
      %747 = vmatpush1.bf16.msra.mxu0 0
      %748 = vmatprep.subr.bf16.mxu0 0
      %749 = vmatpush1.bf16.msra.mxu0 0
      %750 = vmatprep.subr.bf16.mxu0 0
      %751 = vmatpush1.bf16.msra.mxu0 0
      %752 = vmatprep.subr.bf16.mxu0 0
      %753 = vmatpush1.bf16.msra.mxu0 0
      %754 = vmatprep.subr.bf16.mxu0 0
      %755 = vmatpush1.bf16.msra.mxu0 0
      %756 = vmatprep.mubr.bf16.mxu0 0
      %757 = vmatmul.mubr.bf16.gmra.mrb[0].mxu0 %v389
      %v758 = vpop.f32.mrb[0].mxu0
      %v759 = vadd.f32 %v719, %v758
      %v760 = vpop.f32.mrb[0].mxu0
      %v761 = vpop.f32.mrb[0].mxu0
      %v762 = vpop.f32.mrb[0].mxu0
      %763 = vdwg.mxu0
      %p764 = scmp.eq.s32.totalorder %s22, 0
      // Predicated region
      $region37: #{simple_cnn_forward.6} parent=35 // pred_check
        %p765 = pneg %p764
      $region38: #{simple_cnn_forward.6} parent=35 // pred_check_branch
        %767 = sbr.rel (%p765) target = $region40
      $region39: #{simple_cnn_forward.6} parent=35 // pred_region
        %768 = vst [vmem:[#allocation2] sm:$0x3] %v759
      $region40: #{simple_cnn_forward.6} parent=35 // pred_fallthru
        _
      %p769 = scmp.gt.s32.totalorder %s22, 0
      // Predicated region
      $region41: #{simple_cnn_forward.6} parent=35 // pred_check
        %p770 = pneg %p769
      $region42: #{simple_cnn_forward.6} parent=35 // pred_check_branch
        %772 = sbr.rel (%p770) target = $region44
      $region43: #{simple_cnn_forward.6} parent=35 // pred_region
        %v773 = vld [vmem:[#allocation2] sm:$0x3]
        %v774 = vmax.f32 %v773, %v759
        %775 = vst [vmem:[#allocation2] sm:$0x3] %v774
      $region44: #{simple_cnn_forward.6} parent=35 // pred_fallthru
        _
      %p776 = scmp.eq.s32.totalorder %s22, 3
      // Predicated region
      $region45: #{simple_cnn_forward.6} parent=35 // pred_check
        %p777 = pneg %p776
      $region46: #{simple_cnn_forward.6} parent=35 // pred_check_branch
        %779 = sbr.rel (%p777) target = $region48
      $region47: #{simple_cnn_forward.6} parent=35 // pred_region
        %v780 = vld [vmem:[#allocation2] sm:$0x3]
        %v781 = vld [vmem:[%s267] sm:$0x1]
        %v783 = vlaneseq
        %v784 = vshrl.u32 %v783, 7
        %v785 = vsub.s32 0, %v784
        %v786 = vrot.slane %v781, %v785
        %v788 = vmul.f32 %v780, %v786
        %v789 = vld [vmem:[%s270] sm:$0x1]
        %v791 = vlaneseq
        %v792 = vshrl.u32 %v791, 7
        %v793 = vsub.s32 0, %v792
        %v794 = vrot.slane %v789, %v793
        %v796 = vadd.f32 %v788, %v794
        %v797 = vmax.f32 %v796, 0.0
        %v798 = vpack.c.bf16 %v797, %v797
        %799 = vst [vmem:[%s276] sm:$0x1] %v798
      $region48: #{simple_cnn_forward.6} parent=35 // pred_fallthru
        _
      %p800 = scmp.lt.s32.totalorder %s20, 0
      %s801 = scalar_select %p800, %s20, 0
      %p802 = scmp.lt.s32.totalorder %s21, 0
      %s803 = scalar_select %p802, %s21, 0
      %s804 = sadd.s32 %s803, %s801
      %s805 = scalar_lea.vmem %s4, %s804
      // Predicated region
      $region49: #{simple_cnn_forward.6} parent=35 // pred_check
        %p806 = pneg %p160
      $region50: #{simple_cnn_forward.6} parent=35 // pred_check_branch
        %808 = sbr.rel (%p806) target = $region52
      $region51: #{simple_cnn_forward.6} parent=35 // pred_region
        _
      $region52: #{simple_cnn_forward.6} parent=35 // pred_fallthru
        _
      // Predicated region
      $region53: #{simple_cnn_forward.6} parent=35 // pred_check
        %p809 = pneg %p160
      $region54: #{simple_cnn_forward.6} parent=35 // pred_check_branch
        %811 = sbr.rel (%p809) target = $region56
      $region55: #{simple_cnn_forward.6} parent=35 // pred_region
        %p812 = scmp.lt.s32.totalorder %s20, 0
        %s813 = scalar_select %p812, %s20, 0
        %p814 = scmp.lt.s32.totalorder %s21, 0
        %s815 = scalar_select %p814, %s21, 0
        %s816 = sadd.s32 %s815, %s813
        %s817 = scalar_lea.vmem %s4, %s816
      $region56: #{simple_cnn_forward.6} parent=35 // pred_fallthru
        _
    $region36: #{simple_cnn_forward.6} parent=5 // pred_fallthru
      _
    %p818 = scmp.le.s32.totalorder 2, %s10
    // Predicated region
    $region57: #{simple_cnn_forward.6} parent=5 // pred_check
      %p819 = pneg %p818
    $region58: #{simple_cnn_forward.6} parent=5 // pred_check_branch
      %821 = sbr.rel (%p819) target = $region60
    $region59: #{simple_cnn_forward.6} parent=5 // pred_region
      %s822 = ssub.s32 %s10, 2
    $region60: #{simple_cnn_forward.6} parent=5 // pred_fallthru
      _
  $region6: #{simple_cnn_forward.6} parent=0 // loop_footer
    %s14 = sadd.s32 1, %s10
  $region7: #{simple_cnn_forward.6} parent=0 // loop_footer_branch
    %9 = sbr.rel target = $region3
  $region8: #{simple_cnn_forward.6} parent=0 // loop_exit
    _

// kernel: simple_cnn_forward.7
$region0: #{simple_cnn_forward.7}
  #allocation0 [shape = 'u32[]', space=smem, size = 0x4, offset = 0x4, fixed_abs, tag = 'smem constant byte address 0x4 - core index']
  #allocation1 [shape = 'u32[144,128]{1,0:T(1,128)}', space=vmem, size = 0x12000, scoped, tag = 'internal scratch']
  %s0 = inlined_call_operand.vmem [shape: bf16[2,128], index: 0, kind: input, shape index: {}]
  %s1 = inlined_call_operand.vmem [shape: bf16[128,256], index: 1, kind: input, shape index: {}]
  %s2 = inlined_call_operand.vmem [shape: f32[1,256], index: 2, kind: input, shape index: {}]
  %s3 = inlined_call_operand.vmem [shape: f32[1,256], index: 3, kind: input, shape index: {}]
  %s4 = inlined_call_operand.vmem [shape: bf16[256,256], index: 4, kind: input, shape index: {}]
  %s5 = inlined_call_operand.vmem [shape: f32[1,256], index: 5, kind: input, shape index: {}]
  %s6 = inlined_call_operand.vmem [shape: f32[1,256], index: 6, kind: input, shape index: {}]
  %s7 = inlined_call_operand.vmem [shape: bf16[256,512], index: 7, kind: input, shape index: {}]
  %s8 = inlined_call_operand.vmem [shape: f32[1,512], index: 8, kind: input, shape index: {}]
  %s9 = inlined_call_operand.vmem [shape: f32[1,512], index: 9, kind: input, shape index: {}]
  %s10 = inlined_call_operand.vmem [shape: bf16[512,128], index: 10, kind: input, shape index: {}]
  %s11 = inlined_call_operand.vmem [shape: f32[1,128], index: 11, kind: input, shape index: {}]
  %s12 = inlined_call_operand.hbm [shape: f32[2,128], index: 12, kind: output, shape index: {}]
  %s13 = sld [smem:[#allocation0]]
  $region58: #{simple_cnn_forward.7} parent=0
    _
  %s15 = ssub.s32 1, %s13
  %s16 = scalar_select 0, %s15, %s13
  $region1: #{simple_cnn_forward.7} parent=0
    #allocation2 [shape = 'u8[1024]{0}', space=vmem, size = 0x400, scoped, tag = 'output window, operand 0, single buffered']
    #allocation3 [shape = 's32[1]{0}', space=sflag, size = 0x4, scoped, tag = 'scoped memory for simple_cnn_forward.7']
    %17 = vsyncpa [#allocation3], 0
    // Predicated region
    $region2: #{simple_cnn_forward.7} parent=1 // pred_check
      _
    $region3: #{simple_cnn_forward.7} parent=1 // pred_check_branch
      %19 = sbr.rel (0) target = $region5
    $region4: #{simple_cnn_forward.7} parent=1 // pred_region
      _
    $region5: #{simple_cnn_forward.7} parent=1 // pred_fallthru
      _
    // Predicated region
    $region6: #{simple_cnn_forward.7} parent=1 // pred_check
      _
    $region7: #{simple_cnn_forward.7} parent=1 // pred_check_branch
      %21 = sbr.rel (0) target = $region9
    $region8: #{simple_cnn_forward.7} parent=1 // pred_region
      _
    $region9: #{simple_cnn_forward.7} parent=1 // pred_fallthru
      _
    // Predicated region
    $region10: #{simple_cnn_forward.7} parent=1 // pred_check
      _
    $region11: #{simple_cnn_forward.7} parent=1 // pred_check_branch
      %23 = sbr.rel (0) target = $region13
    $region12: #{simple_cnn_forward.7} parent=1 // pred_region
      _
    $region13: #{simple_cnn_forward.7} parent=1 // pred_fallthru
      _
    // Predicated region
    $region14: #{simple_cnn_forward.7} parent=1 // pred_check
      _
    $region15: #{simple_cnn_forward.7} parent=1 // pred_check_branch
      %25 = sbr.rel (0) target = $region17
    $region16: #{simple_cnn_forward.7} parent=1 // pred_region
      _
    $region17: #{simple_cnn_forward.7} parent=1 // pred_fallthru
      _
    // Predicated region
    $region18: #{simple_cnn_forward.7} parent=1 // pred_check
      _
    $region19: #{simple_cnn_forward.7} parent=1 // pred_check_branch
      %27 = sbr.rel (0) target = $region21
    $region20: #{simple_cnn_forward.7} parent=1 // pred_region
      _
    $region21: #{simple_cnn_forward.7} parent=1 // pred_fallthru
      _
    // Predicated region
    $region22: #{simple_cnn_forward.7} parent=1 // pred_check
      _
    $region23: #{simple_cnn_forward.7} parent=1 // pred_check_branch
      %29 = sbr.rel (0) target = $region25
    $region24: #{simple_cnn_forward.7} parent=1 // pred_region
      _
    $region25: #{simple_cnn_forward.7} parent=1 // pred_fallthru
      _
    // Predicated region
    $region26: #{simple_cnn_forward.7} parent=1 // pred_check
      _
    $region27: #{simple_cnn_forward.7} parent=1 // pred_check_branch
      %31 = sbr.rel (0) target = $region29
    $region28: #{simple_cnn_forward.7} parent=1 // pred_region
      _
    $region29: #{simple_cnn_forward.7} parent=1 // pred_fallthru
      _
    // Predicated region
    $region30: #{simple_cnn_forward.7} parent=1 // pred_check
      _
    $region31: #{simple_cnn_forward.7} parent=1 // pred_check_branch
      %33 = sbr.rel (0) target = $region33
    $region32: #{simple_cnn_forward.7} parent=1 // pred_region
      _
    $region33: #{simple_cnn_forward.7} parent=1 // pred_fallthru
      _
    // Predicated region
    $region34: #{simple_cnn_forward.7} parent=1 // pred_check
      _
    $region35: #{simple_cnn_forward.7} parent=1 // pred_check_branch
      %35 = sbr.rel (0) target = $region37
    $region36: #{simple_cnn_forward.7} parent=1 // pred_region
      _
    $region37: #{simple_cnn_forward.7} parent=1 // pred_fallthru
      _
    // Predicated region
    $region38: #{simple_cnn_forward.7} parent=1 // pred_check
      _
    $region39: #{simple_cnn_forward.7} parent=1 // pred_check_branch
      %37 = sbr.rel (0) target = $region41
    $region40: #{simple_cnn_forward.7} parent=1 // pred_region
      _
    $region41: #{simple_cnn_forward.7} parent=1 // pred_fallthru
      _
    // Predicated region
    $region42: #{simple_cnn_forward.7} parent=1 // pred_check
      _
    $region43: #{simple_cnn_forward.7} parent=1 // pred_check_branch
      %39 = sbr.rel (0) target = $region45
    $region44: #{simple_cnn_forward.7} parent=1 // pred_region
      _
    $region45: #{simple_cnn_forward.7} parent=1 // pred_fallthru
      _
    // Predicated region
    $region46: #{simple_cnn_forward.7} parent=1 // pred_check
      _
    $region47: #{simple_cnn_forward.7} parent=1 // pred_check_branch
      %41 = sbr.rel (0) target = $region49
    $region48: #{simple_cnn_forward.7} parent=1 // pred_region
      _
    $region49: #{simple_cnn_forward.7} parent=1 // pred_fallthru
      _
    %v43 = vld [vmem:[%s0] sm:$0x1]
    %v44 = vld [vmem:[%s1] sm:$0xff]
    %v45 = vld [vmem:[%s1 + $0x8] sm:$0xff]
    %v46 = vld [vmem:[%s1 + $0x10] sm:$0xff]
    %v47 = vld [vmem:[%s1 + $0x18] sm:$0xff]
    %v48 = vld [vmem:[%s1 + $0x20] sm:$0xff]
    %v49 = vld [vmem:[%s1 + $0x28] sm:$0xff]
    %v50 = vld [vmem:[%s1 + $0x30] sm:$0xff]
    %v51 = vld [vmem:[%s1 + $0x38] sm:$0xff]
    %v52 = vld [vmem:[%s1 + $0x40] sm:$0xff]
    %v53 = vld [vmem:[%s1 + $0x48] sm:$0xff]
    %v54 = vld [vmem:[%s1 + $0x50] sm:$0xff]
    %v55 = vld [vmem:[%s1 + $0x58] sm:$0xff]
    %v56 = vld [vmem:[%s1 + $0x60] sm:$0xff]
    %v57 = vld [vmem:[%s1 + $0x68] sm:$0xff]
    %v58 = vld [vmem:[%s1 + $0x70] sm:$0xff]
    %v59 = vld [vmem:[%s1 + $0x78] sm:$0xff]
    %v76 = vunpack.c.l.b16 %v44
    %v77 = vunpack.c.h.b16 %v44
    %v78 = vunpack.c.l.b16 %v45
    %v79 = vunpack.c.h.b16 %v45
    %v80 = vunpack.c.l.b16 %v46
    %v81 = vunpack.c.h.b16 %v46
    %v82 = vunpack.c.l.b16 %v47
    %v83 = vunpack.c.h.b16 %v47
    %v84 = vunpack.c.l.b16 %v48
    %v85 = vunpack.c.h.b16 %v48
    %v86 = vunpack.c.l.b16 %v49
    %v87 = vunpack.c.h.b16 %v49
    %v88 = vunpack.c.l.b16 %v50
    %v89 = vunpack.c.h.b16 %v50
    %v90 = vunpack.c.l.b16 %v51
    %v91 = vunpack.c.h.b16 %v51
    %v92 = vunpack.c.l.b16 %v52
    %v93 = vunpack.c.h.b16 %v52
    %v94 = vunpack.c.l.b16 %v53
    %v95 = vunpack.c.h.b16 %v53
    %v96 = vunpack.c.l.b16 %v54
    %v97 = vunpack.c.h.b16 %v54
    %v98 = vunpack.c.l.b16 %v55
    %v99 = vunpack.c.h.b16 %v55
    %v100 = vunpack.c.l.b16 %v56
    %v101 = vunpack.c.h.b16 %v56
    %v102 = vunpack.c.l.b16 %v57
    %v103 = vunpack.c.h.b16 %v57
    %v104 = vunpack.c.l.b16 %v58
    %v105 = vunpack.c.h.b16 %v58
    %v106 = vunpack.c.l.b16 %v59
    %v107 = vunpack.c.h.b16 %v59
    %v108 = vpack.c.b16 %v78, %v76
    %v109 = vpack.c.b16 %v79, %v77
    %v110 = vpack.c.b16 %v82, %v80
    %v111 = vpack.c.b16 %v83, %v81
    %v112 = vpack.c.b16 %v86, %v84
    %v113 = vpack.c.b16 %v87, %v85
    %v114 = vpack.c.b16 %v90, %v88
    %v115 = vpack.c.b16 %v91, %v89
    %v116 = vpack.c.b16 %v94, %v92
    %v117 = vpack.c.b16 %v95, %v93
    %v118 = vpack.c.b16 %v98, %v96
    %v119 = vpack.c.b16 %v99, %v97
    %v120 = vpack.c.b16 %v102, %v100
    %v121 = vpack.c.b16 %v103, %v101
    %v122 = vpack.c.b16 %v106, %v104
    %v123 = vpack.c.b16 %v107, %v105
    %140 = vmatprep.subr.bf16.mxu0 %v109
    %141 = vmatpush1.bf16.msra.mxu0 %v108
    %142 = vmatprep.subr.bf16.mxu0 %v111
    %143 = vmatpush1.bf16.msra.mxu0 %v110
    %144 = vmatprep.subr.bf16.mxu0 %v113
    %145 = vmatpush1.bf16.msra.mxu0 %v112
    %146 = vmatprep.subr.bf16.mxu0 %v115
    %147 = vmatpush1.bf16.msra.mxu0 %v114
    %148 = vmatprep.subr.bf16.mxu0 %v117
    %149 = vmatpush1.bf16.msra.mxu0 %v116
    %150 = vmatprep.subr.bf16.mxu0 %v119
    %151 = vmatpush1.bf16.msra.mxu0 %v118
    %152 = vmatprep.subr.bf16.mxu0 %v121
    %153 = vmatpush1.bf16.msra.mxu0 %v120
    %154 = vmatprep.subr.bf16.mxu0 %v123
    %155 = vmatpush1.bf16.msra.mxu0 %v122
    %156 = vmatprep.subr.bf16.mxu0 0
    %157 = vmatpush1.bf16.msra.mxu0 0
    %158 = vmatprep.subr.bf16.mxu0 0
    %159 = vmatpush1.bf16.msra.mxu0 0
    %160 = vmatprep.subr.bf16.mxu0 0
    %161 = vmatpush1.bf16.msra.mxu0 0
    %162 = vmatprep.subr.bf16.mxu0 0
    %163 = vmatpush1.bf16.msra.mxu0 0
    %164 = vmatprep.subr.bf16.mxu0 0
    %165 = vmatpush1.bf16.msra.mxu0 0
    %166 = vmatprep.subr.bf16.mxu0 0
    %167 = vmatpush1.bf16.msra.mxu0 0
    %168 = vmatprep.subr.bf16.mxu0 0
    %169 = vmatpush1.bf16.msra.mxu0 0
    %170 = vmatprep.subr.bf16.mxu0 0
    %171 = vmatpush1.bf16.msra.mxu0 0
    %172 = vmatprep.mubr.bf16.mxu0 0
    %173 = vmatmul.mubr.bf16.gmra.mrb[0].mxu0 %v43
    %v174 = vpop.f32.mrb[0].mxu0
    %v175 = vadd.f32 0.0, %v174
    %v176 = vpop.f32.mrb[0].mxu0
    %v177 = vadd.f32 0.0, %v176
    %v178 = vpop.f32.mrb[0].mxu0
    %v179 = vpop.f32.mrb[0].mxu0
    %180 = vdwg.mxu0
    %v181 = vld [vmem:[%s2] sm:$0x3]
    %v183 = vlaneseq
    %v184 = vshrl.u32 %v183, 7
    %v185 = vsub.s32 0, %v184
    %v186 = vrot.slane %v181, %v185
    %v187 = vlaneseq
    %v188 = vshrl.u32 %v187, 7
    %v189 = vsub.s32 1, %v188
    %v190 = vrot.slane %v181, %v189
    %v193 = vmul.f32 %v175, %v186
    %v194 = vmul.f32 %v177, %v190
    %v195 = vld [vmem:[%s3] sm:$0x3]
    %v197 = vlaneseq
    %v198 = vshrl.u32 %v197, 7
    %v199 = vsub.s32 0, %v198
    %v200 = vrot.slane %v195, %v199
    %v201 = vlaneseq
    %v202 = vshrl.u32 %v201, 7
    %v203 = vsub.s32 1, %v202
    %v204 = vrot.slane %v195, %v203
    %v207 = vadd.f32 %v193, %v200
    %v208 = vadd.f32 %v194, %v204
    %v209 = vmax.f32 %v207, 0.0
    %v210 = vmax.f32 %v208, 0.0
    %v211 = vpack.c.bf16 %v209, %v209
    %v212 = vpack.c.bf16 %v210, %v210
    %v213 = vld [vmem:[%s4] sm:$0xff]
    %v214 = vld [vmem:[%s4 + $0x8] sm:$0xff]
    %v215 = vld [vmem:[%s4 + $0x10] sm:$0xff]
    %v216 = vld [vmem:[%s4 + $0x18] sm:$0xff]
    %v217 = vld [vmem:[%s4 + $0x20] sm:$0xff]
    %v218 = vld [vmem:[%s4 + $0x28] sm:$0xff]
    %v219 = vld [vmem:[%s4 + $0x30] sm:$0xff]
    %v220 = vld [vmem:[%s4 + $0x38] sm:$0xff]
    %v221 = vld [vmem:[%s4 + $0x40] sm:$0xff]
    %v222 = vld [vmem:[%s4 + $0x48] sm:$0xff]
    %v223 = vld [vmem:[%s4 + $0x50] sm:$0xff]
    %v224 = vld [vmem:[%s4 + $0x58] sm:$0xff]
    %v225 = vld [vmem:[%s4 + $0x60] sm:$0xff]
    %v226 = vld [vmem:[%s4 + $0x68] sm:$0xff]
    %v227 = vld [vmem:[%s4 + $0x70] sm:$0xff]
    %v228 = vld [vmem:[%s4 + $0x78] sm:$0xff]
    %v229 = vld [vmem:[%s4 + $0x80] sm:$0xff]
    %v230 = vld [vmem:[%s4 + $0x88] sm:$0xff]
    %v231 = vld [vmem:[%s4 + $0x90] sm:$0xff]
    %v232 = vld [vmem:[%s4 + $0x98] sm:$0xff]
    %v233 = vld [vmem:[%s4 + $0xa0] sm:$0xff]
    %v234 = vld [vmem:[%s4 + $0xa8] sm:$0xff]
    %v235 = vld [vmem:[%s4 + $0xb0] sm:$0xff]
    %v236 = vld [vmem:[%s4 + $0xb8] sm:$0xff]
    %v237 = vld [vmem:[%s4 + $0xc0] sm:$0xff]
    %v238 = vld [vmem:[%s4 + $0xc8] sm:$0xff]
    %v239 = vld [vmem:[%s4 + $0xd0] sm:$0xff]
    %v240 = vld [vmem:[%s4 + $0xd8] sm:$0xff]
    %v241 = vld [vmem:[%s4 + $0xe0] sm:$0xff]
    %v242 = vld [vmem:[%s4 + $0xe8] sm:$0xff]
    %v243 = vld [vmem:[%s4 + $0xf0] sm:$0xff]
    %v244 = vld [vmem:[%s4 + $0xf8] sm:$0xff]
    %v277 = vunpack.c.l.b16 %v213
    %v278 = vunpack.c.h.b16 %v213
    %v279 = vunpack.c.l.b16 %v214
    %v280 = vunpack.c.h.b16 %v214
    %v281 = vunpack.c.l.b16 %v215
    %v282 = vunpack.c.h.b16 %v215
    %v283 = vunpack.c.l.b16 %v216
    %v284 = vunpack.c.h.b16 %v216
    %v285 = vunpack.c.l.b16 %v217
    %v286 = vunpack.c.h.b16 %v217
    %v287 = vunpack.c.l.b16 %v218
    %v288 = vunpack.c.h.b16 %v218
    %v289 = vunpack.c.l.b16 %v219
    %v290 = vunpack.c.h.b16 %v219
    %v291 = vunpack.c.l.b16 %v220
    %v292 = vunpack.c.h.b16 %v220
    %v293 = vunpack.c.l.b16 %v221
    %v294 = vunpack.c.h.b16 %v221
    %v295 = vunpack.c.l.b16 %v222
    %v296 = vunpack.c.h.b16 %v222
    %v297 = vunpack.c.l.b16 %v223
    %v298 = vunpack.c.h.b16 %v223
    %v299 = vunpack.c.l.b16 %v224
    %v300 = vunpack.c.h.b16 %v224
    %v301 = vunpack.c.l.b16 %v225
    %v302 = vunpack.c.h.b16 %v225
    %v303 = vunpack.c.l.b16 %v226
    %v304 = vunpack.c.h.b16 %v226
    %v305 = vunpack.c.l.b16 %v227
    %v306 = vunpack.c.h.b16 %v227
    %v307 = vunpack.c.l.b16 %v228
    %v308 = vunpack.c.h.b16 %v228
    %v309 = vunpack.c.l.b16 %v229
    %v310 = vunpack.c.h.b16 %v229
    %v311 = vunpack.c.l.b16 %v230
    %v312 = vunpack.c.h.b16 %v230
    %v313 = vunpack.c.l.b16 %v231
    %v314 = vunpack.c.h.b16 %v231
    %v315 = vunpack.c.l.b16 %v232
    %v316 = vunpack.c.h.b16 %v232
    %v317 = vunpack.c.l.b16 %v233
    %v318 = vunpack.c.h.b16 %v233
    %v319 = vunpack.c.l.b16 %v234
    %v320 = vunpack.c.h.b16 %v234
    %v321 = vunpack.c.l.b16 %v235
    %v322 = vunpack.c.h.b16 %v235
    %v323 = vunpack.c.l.b16 %v236
    %v324 = vunpack.c.h.b16 %v236
    %v325 = vunpack.c.l.b16 %v237
    %v326 = vunpack.c.h.b16 %v237
    %v327 = vunpack.c.l.b16 %v238
    %v328 = vunpack.c.h.b16 %v238
    %v329 = vunpack.c.l.b16 %v239
    %v330 = vunpack.c.h.b16 %v239
    %v331 = vunpack.c.l.b16 %v240
    %v332 = vunpack.c.h.b16 %v240
    %v333 = vunpack.c.l.b16 %v241
    %v334 = vunpack.c.h.b16 %v241
    %v335 = vunpack.c.l.b16 %v242
    %v336 = vunpack.c.h.b16 %v242
    %v337 = vunpack.c.l.b16 %v243
    %v338 = vunpack.c.h.b16 %v243
    %v339 = vunpack.c.l.b16 %v244
    %v340 = vunpack.c.h.b16 %v244
    %v341 = vpack.c.b16 %v279, %v277
    %v342 = vpack.c.b16 %v280, %v278
    %v343 = vpack.c.b16 %v283, %v281
    %v344 = vpack.c.b16 %v284, %v282
    %v345 = vpack.c.b16 %v287, %v285
    %v346 = vpack.c.b16 %v288, %v286
    %v347 = vpack.c.b16 %v291, %v289
    %v348 = vpack.c.b16 %v292, %v290
    %v349 = vpack.c.b16 %v295, %v293
    %v350 = vpack.c.b16 %v296, %v294
    %v351 = vpack.c.b16 %v299, %v297
    %v352 = vpack.c.b16 %v300, %v298
    %v353 = vpack.c.b16 %v303, %v301
    %v354 = vpack.c.b16 %v304, %v302
    %v355 = vpack.c.b16 %v307, %v305
    %v356 = vpack.c.b16 %v308, %v306
    %v357 = vpack.c.b16 %v311, %v309
    %v358 = vpack.c.b16 %v312, %v310
    %v359 = vpack.c.b16 %v315, %v313
    %v360 = vpack.c.b16 %v316, %v314
    %v361 = vpack.c.b16 %v319, %v317
    %v362 = vpack.c.b16 %v320, %v318
    %v363 = vpack.c.b16 %v323, %v321
    %v364 = vpack.c.b16 %v324, %v322
    %v365 = vpack.c.b16 %v327, %v325
    %v366 = vpack.c.b16 %v328, %v326
    %v367 = vpack.c.b16 %v331, %v329
    %v368 = vpack.c.b16 %v332, %v330
    %v369 = vpack.c.b16 %v335, %v333
    %v370 = vpack.c.b16 %v336, %v334
    %v371 = vpack.c.b16 %v339, %v337
    %v372 = vpack.c.b16 %v340, %v338
    %405 = vmatprep.subr.bf16.mxu0 %v342
    %406 = vmatpush1.bf16.msra.mxu0 %v341
    %407 = vmatprep.subr.bf16.mxu0 %v344
    %408 = vmatpush1.bf16.msra.mxu0 %v343
    %409 = vmatprep.subr.bf16.mxu0 %v346
    %410 = vmatpush1.bf16.msra.mxu0 %v345
    %411 = vmatprep.subr.bf16.mxu0 %v348
    %412 = vmatpush1.bf16.msra.mxu0 %v347
    %413 = vmatprep.subr.bf16.mxu0 %v350
    %414 = vmatpush1.bf16.msra.mxu0 %v349
    %415 = vmatprep.subr.bf16.mxu0 %v352
    %416 = vmatpush1.bf16.msra.mxu0 %v351
    %417 = vmatprep.subr.bf16.mxu0 %v354
    %418 = vmatpush1.bf16.msra.mxu0 %v353
    %419 = vmatprep.subr.bf16.mxu0 %v356
    %420 = vmatpush1.bf16.msra.mxu0 %v355
    %421 = vmatprep.subr.bf16.mxu0 %v358
    %422 = vmatpush1.bf16.msra.mxu0 %v357
    %423 = vmatprep.subr.bf16.mxu0 %v360
    %424 = vmatpush1.bf16.msra.mxu0 %v359
    %425 = vmatprep.subr.bf16.mxu0 %v362
    %426 = vmatpush1.bf16.msra.mxu0 %v361
    %427 = vmatprep.subr.bf16.mxu0 %v364
    %428 = vmatpush1.bf16.msra.mxu0 %v363
    %429 = vmatprep.subr.bf16.mxu0 %v366
    %430 = vmatpush1.bf16.msra.mxu0 %v365
    %431 = vmatprep.subr.bf16.mxu0 %v368
    %432 = vmatpush1.bf16.msra.mxu0 %v367
    %433 = vmatprep.subr.bf16.mxu0 %v370
    %434 = vmatpush1.bf16.msra.mxu0 %v369
    %435 = vmatprep.subr.bf16.mxu0 %v372
    %436 = vmatpush1.bf16.msra.mxu0 %v371
    %437 = vmatprep.mubr.bf16.mxu0 %v212
    %438 = vmatmul.mubr.bf16.gmra.mrb[0].mxu0 %v211
    %v439 = vpop.f32.mrb[0].mxu0
    %v440 = vadd.f32 0.0, %v439
    %v441 = vpop.f32.mrb[0].mxu0
    %v442 = vadd.f32 0.0, %v441
    %v443 = vpop.f32.mrb[0].mxu0
    %v444 = vpop.f32.mrb[0].mxu0
    %445 = vdwg.mxu0
    %v446 = vld [vmem:[%s5] sm:$0x3]
    %v448 = vlaneseq
    %v449 = vshrl.u32 %v448, 7
    %v450 = vsub.s32 0, %v449
    %v451 = vrot.slane %v446, %v450
    %v452 = vlaneseq
    %v453 = vshrl.u32 %v452, 7
    %v454 = vsub.s32 1, %v453
    %v455 = vrot.slane %v446, %v454
    %v458 = vmul.f32 %v440, %v451
    %v459 = vmul.f32 %v442, %v455
    %v460 = vld [vmem:[%s6] sm:$0x3]
    %v462 = vlaneseq
    %v463 = vshrl.u32 %v462, 7
    %v464 = vsub.s32 0, %v463
    %v465 = vrot.slane %v460, %v464
    %v466 = vlaneseq
    %v467 = vshrl.u32 %v466, 7
    %v468 = vsub.s32 1, %v467
    %v469 = vrot.slane %v460, %v468
    %v472 = vadd.f32 %v458, %v465
    %v473 = vadd.f32 %v459, %v469
    %v474 = vmax.f32 %v472, 0.0
    %v475 = vmax.f32 %v473, 0.0
    %v476 = vpack.c.bf16 %v474, %v474
    %v477 = vpack.c.bf16 %v475, %v475
    %v478 = vld [vmem:[%s7] sm:$0xff]
    %v479 = vld [vmem:[%s7 + $0x8] sm:$0xff]
    %v480 = vld [vmem:[%s7 + $0x10] sm:$0xff]
    %v481 = vld [vmem:[%s7 + $0x18] sm:$0xff]
    %v482 = vld [vmem:[%s7 + $0x20] sm:$0xff]
    %v483 = vld [vmem:[%s7 + $0x28] sm:$0xff]
    %v484 = vld [vmem:[%s7 + $0x30] sm:$0xff]
    %v485 = vld [vmem:[%s7 + $0x38] sm:$0xff]
    %v486 = vld [vmem:[%s7 + $0x40] sm:$0xff]
    %v487 = vld [vmem:[%s7 + $0x48] sm:$0xff]
    %v488 = vld [vmem:[%s7 + $0x50] sm:$0xff]
    %v489 = vld [vmem:[%s7 + $0x58] sm:$0xff]
    %v490 = vld [vmem:[%s7 + $0x60] sm:$0xff]
    %v491 = vld [vmem:[%s7 + $0x68] sm:$0xff]
    %v492 = vld [vmem:[%s7 + $0x70] sm:$0xff]
    %v493 = vld [vmem:[%s7 + $0x78] sm:$0xff]
    %v494 = vld [vmem:[%s7 + $0x80] sm:$0xff]
    %v495 = vld [vmem:[%s7 + $0x88] sm:$0xff]
    %v496 = vld [vmem:[%s7 + $0x90] sm:$0xff]
    %v497 = vld [vmem:[%s7 + $0x98] sm:$0xff]
    %v498 = vld [vmem:[%s7 + $0xa0] sm:$0xff]
    %v499 = vld [vmem:[%s7 + $0xa8] sm:$0xff]
    %v500 = vld [vmem:[%s7 + $0xb0] sm:$0xff]
    %v501 = vld [vmem:[%s7 + $0xb8] sm:$0xff]
    %v502 = vld [vmem:[%s7 + $0xc0] sm:$0xff]
    %v503 = vld [vmem:[%s7 + $0xc8] sm:$0xff]
    %v504 = vld [vmem:[%s7 + $0xd0] sm:$0xff]
    %v505 = vld [vmem:[%s7 + $0xd8] sm:$0xff]
    %v506 = vld [vmem:[%s7 + $0xe0] sm:$0xff]
    %v507 = vld [vmem:[%s7 + $0xe8] sm:$0xff]
    %v508 = vld [vmem:[%s7 + $0xf0] sm:$0xff]
    %v509 = vld [vmem:[%s7 + $0xf8] sm:$0xff]
    %v510 = vld [vmem:[%s7 + $0x100] sm:$0xff]
    %v511 = vld [vmem:[%s7 + $0x108] sm:$0xff]
    %v512 = vld [vmem:[%s7 + $0x110] sm:$0xff]
    %v513 = vld [vmem:[%s7 + $0x118] sm:$0xff]
    %v514 = vld [vmem:[%s7 + $0x120] sm:$0xff]
    %v515 = vld [vmem:[%s7 + $0x128] sm:$0xff]
    %v516 = vld [vmem:[%s7 + $0x130] sm:$0xff]
    %v517 = vld [vmem:[%s7 + $0x138] sm:$0xff]
    %v518 = vld [vmem:[%s7 + $0x140] sm:$0xff]
    %v519 = vld [vmem:[%s7 + $0x148] sm:$0xff]
    %v520 = vld [vmem:[%s7 + $0x150] sm:$0xff]
    %v521 = vld [vmem:[%s7 + $0x158] sm:$0xff]
    %v522 = vld [vmem:[%s7 + $0x160] sm:$0xff]
    %v523 = vld [vmem:[%s7 + $0x168] sm:$0xff]
    %v524 = vld [vmem:[%s7 + $0x170] sm:$0xff]
    %v525 = vld [vmem:[%s7 + $0x178] sm:$0xff]
    %v526 = vld [vmem:[%s7 + $0x180] sm:$0xff]
    %v527 = vld [vmem:[%s7 + $0x188] sm:$0xff]
    %v528 = vld [vmem:[%s7 + $0x190] sm:$0xff]
    %v529 = vld [vmem:[%s7 + $0x198] sm:$0xff]
    %v530 = vld [vmem:[%s7 + $0x1a0] sm:$0xff]
    %v531 = vld [vmem:[%s7 + $0x1a8] sm:$0xff]
    %v532 = vld [vmem:[%s7 + $0x1b0] sm:$0xff]
    %v533 = vld [vmem:[%s7 + $0x1b8] sm:$0xff]
    %v534 = vld [vmem:[%s7 + $0x1c0] sm:$0xff]
    %v535 = vld [vmem:[%s7 + $0x1c8] sm:$0xff]
    %v536 = vld [vmem:[%s7 + $0x1d0] sm:$0xff]
    %v537 = vld [vmem:[%s7 + $0x1d8] sm:$0xff]
    %v538 = vld [vmem:[%s7 + $0x1e0] sm:$0xff]
    %v539 = vld [vmem:[%s7 + $0x1e8] sm:$0xff]
    %v540 = vld [vmem:[%s7 + $0x1f0] sm:$0xff]
    %v541 = vld [vmem:[%s7 + $0x1f8] sm:$0xff]
    %v606 = vunpack.c.l.b16 %v478
    %v607 = vunpack.c.h.b16 %v478
    %v608 = vunpack.c.l.b16 %v479
    %v609 = vunpack.c.h.b16 %v479
    %v610 = vunpack.c.l.b16 %v480
    %v611 = vunpack.c.h.b16 %v480
    %v612 = vunpack.c.l.b16 %v481
    %v613 = vunpack.c.h.b16 %v481
    %v614 = vunpack.c.l.b16 %v482
    %v615 = vunpack.c.h.b16 %v482
    %v616 = vunpack.c.l.b16 %v483
    %v617 = vunpack.c.h.b16 %v483
    %v618 = vunpack.c.l.b16 %v484
    %v619 = vunpack.c.h.b16 %v484
    %v620 = vunpack.c.l.b16 %v485
    %v621 = vunpack.c.h.b16 %v485
    %v622 = vunpack.c.l.b16 %v486
    %v623 = vunpack.c.h.b16 %v486
    %v624 = vunpack.c.l.b16 %v487
    %v625 = vunpack.c.h.b16 %v487
    %v626 = vunpack.c.l.b16 %v488
    %v627 = vunpack.c.h.b16 %v488
    %v628 = vunpack.c.l.b16 %v489
    %v629 = vunpack.c.h.b16 %v489
    %v630 = vunpack.c.l.b16 %v490
    %v631 = vunpack.c.h.b16 %v490
    %v632 = vunpack.c.l.b16 %v491
    %v633 = vunpack.c.h.b16 %v491
    %v634 = vunpack.c.l.b16 %v492
    %v635 = vunpack.c.h.b16 %v492
    %v636 = vunpack.c.l.b16 %v493
    %v637 = vunpack.c.h.b16 %v493
    %v638 = vunpack.c.l.b16 %v494
    %v639 = vunpack.c.h.b16 %v494
    %v640 = vunpack.c.l.b16 %v495
    %v641 = vunpack.c.h.b16 %v495
    %v642 = vunpack.c.l.b16 %v496
    %v643 = vunpack.c.h.b16 %v496
    %v644 = vunpack.c.l.b16 %v497
    %v645 = vunpack.c.h.b16 %v497
    %v646 = vunpack.c.l.b16 %v498
    %v647 = vunpack.c.h.b16 %v498
    %v648 = vunpack.c.l.b16 %v499
    %v649 = vunpack.c.h.b16 %v499
    %v650 = vunpack.c.l.b16 %v500
    %v651 = vunpack.c.h.b16 %v500
    %v652 = vunpack.c.l.b16 %v501
    %v653 = vunpack.c.h.b16 %v501
    %v654 = vunpack.c.l.b16 %v502
    %v655 = vunpack.c.h.b16 %v502
    %v656 = vunpack.c.l.b16 %v503
    %v657 = vunpack.c.h.b16 %v503
    %v658 = vunpack.c.l.b16 %v504
    %v659 = vunpack.c.h.b16 %v504
    %v660 = vunpack.c.l.b16 %v505
    %v661 = vunpack.c.h.b16 %v505
    %v662 = vunpack.c.l.b16 %v506
    %v663 = vunpack.c.h.b16 %v506
    %v664 = vunpack.c.l.b16 %v507
    %v665 = vunpack.c.h.b16 %v507
    %v666 = vunpack.c.l.b16 %v508
    %v667 = vunpack.c.h.b16 %v508
    %v668 = vunpack.c.l.b16 %v509
    %v669 = vunpack.c.h.b16 %v509
    %v670 = vunpack.c.l.b16 %v510
    %v671 = vunpack.c.h.b16 %v510
    %v672 = vunpack.c.l.b16 %v511
    %v673 = vunpack.c.h.b16 %v511
    %v674 = vunpack.c.l.b16 %v512
    %v675 = vunpack.c.h.b16 %v512
    %v676 = vunpack.c.l.b16 %v513
    %v677 = vunpack.c.h.b16 %v513
    %v678 = vunpack.c.l.b16 %v514
    %v679 = vunpack.c.h.b16 %v514
    %v680 = vunpack.c.l.b16 %v515
    %v681 = vunpack.c.h.b16 %v515
    %v682 = vunpack.c.l.b16 %v516
    %v683 = vunpack.c.h.b16 %v516
    %v684 = vunpack.c.l.b16 %v517
    %v685 = vunpack.c.h.b16 %v517
    %v686 = vunpack.c.l.b16 %v518
    %v687 = vunpack.c.h.b16 %v518
    %v688 = vunpack.c.l.b16 %v519
    %v689 = vunpack.c.h.b16 %v519
    %v690 = vunpack.c.l.b16 %v520
    %v691 = vunpack.c.h.b16 %v520
    %v692 = vunpack.c.l.b16 %v521
    %v693 = vunpack.c.h.b16 %v521
    %v694 = vunpack.c.l.b16 %v522
    %v695 = vunpack.c.h.b16 %v522
    %v696 = vunpack.c.l.b16 %v523
    %v697 = vunpack.c.h.b16 %v523
    %v698 = vunpack.c.l.b16 %v524
    %v699 = vunpack.c.h.b16 %v524
    %v700 = vunpack.c.l.b16 %v525
    %v701 = vunpack.c.h.b16 %v525
    %v702 = vunpack.c.l.b16 %v526
    %v703 = vunpack.c.h.b16 %v526
    %v704 = vunpack.c.l.b16 %v527
    %v705 = vunpack.c.h.b16 %v527
    %v706 = vunpack.c.l.b16 %v528
    %v707 = vunpack.c.h.b16 %v528
    %v708 = vunpack.c.l.b16 %v529
    %v709 = vunpack.c.h.b16 %v529
    %v710 = vunpack.c.l.b16 %v530
    %v711 = vunpack.c.h.b16 %v530
    %v712 = vunpack.c.l.b16 %v531
    %v713 = vunpack.c.h.b16 %v531
    %v714 = vunpack.c.l.b16 %v532
    %v715 = vunpack.c.h.b16 %v532
    %v716 = vunpack.c.l.b16 %v533
    %v717 = vunpack.c.h.b16 %v533
    %v718 = vunpack.c.l.b16 %v534
    %v719 = vunpack.c.h.b16 %v534
    %v720 = vunpack.c.l.b16 %v535
    %v721 = vunpack.c.h.b16 %v535
    %v722 = vunpack.c.l.b16 %v536
    %v723 = vunpack.c.h.b16 %v536
    %v724 = vunpack.c.l.b16 %v537
    %v725 = vunpack.c.h.b16 %v537
    %v726 = vunpack.c.l.b16 %v538
    %v727 = vunpack.c.h.b16 %v538
    %v728 = vunpack.c.l.b16 %v539
    %v729 = vunpack.c.h.b16 %v539
    %v730 = vunpack.c.l.b16 %v540
    %v731 = vunpack.c.h.b16 %v540
    %v732 = vunpack.c.l.b16 %v541
    %v733 = vunpack.c.h.b16 %v541
    %v734 = vpack.c.b16 %v610, %v606
    %v735 = vpack.c.b16 %v611, %v607
    %v736 = vpack.c.b16 %v612, %v608
    %v737 = vpack.c.b16 %v613, %v609
    %v738 = vpack.c.b16 %v618, %v614
    %v739 = vpack.c.b16 %v619, %v615
    %v740 = vpack.c.b16 %v620, %v616
    %v741 = vpack.c.b16 %v621, %v617
    %v742 = vpack.c.b16 %v626, %v622
    %v743 = vpack.c.b16 %v627, %v623
    %v744 = vpack.c.b16 %v628, %v624
    %v745 = vpack.c.b16 %v629, %v625
    %v746 = vpack.c.b16 %v634, %v630
    %v747 = vpack.c.b16 %v635, %v631
    %v748 = vpack.c.b16 %v636, %v632
    %v749 = vpack.c.b16 %v637, %v633
    %v750 = vpack.c.b16 %v642, %v638
    %v751 = vpack.c.b16 %v643, %v639
    %v752 = vpack.c.b16 %v644, %v640
    %v753 = vpack.c.b16 %v645, %v641
    %v754 = vpack.c.b16 %v650, %v646
    %v755 = vpack.c.b16 %v651, %v647
    %v756 = vpack.c.b16 %v652, %v648
    %v757 = vpack.c.b16 %v653, %v649
    %v758 = vpack.c.b16 %v658, %v654
    %v759 = vpack.c.b16 %v659, %v655
    %v760 = vpack.c.b16 %v660, %v656
    %v761 = vpack.c.b16 %v661, %v657
    %v762 = vpack.c.b16 %v666, %v662
    %v763 = vpack.c.b16 %v667, %v663
    %v764 = vpack.c.b16 %v668, %v664
    %v765 = vpack.c.b16 %v669, %v665
    %v766 = vpack.c.b16 %v674, %v670
    %v767 = vpack.c.b16 %v675, %v671
    %v768 = vpack.c.b16 %v676, %v672
    %v769 = vpack.c.b16 %v677, %v673
    %v770 = vpack.c.b16 %v682, %v678
    %v771 = vpack.c.b16 %v683, %v679
    %v772 = vpack.c.b16 %v684, %v680
    %v773 = vpack.c.b16 %v685, %v681
    %v774 = vpack.c.b16 %v690, %v686
    %v775 = vpack.c.b16 %v691, %v687
    %v776 = vpack.c.b16 %v692, %v688
    %v777 = vpack.c.b16 %v693, %v689
    %v778 = vpack.c.b16 %v698, %v694
    %v779 = vpack.c.b16 %v699, %v695
    %v780 = vpack.c.b16 %v700, %v696
    %v781 = vpack.c.b16 %v701, %v697
    %v782 = vpack.c.b16 %v706, %v702
    %v783 = vpack.c.b16 %v707, %v703
    %v784 = vpack.c.b16 %v708, %v704
    %v785 = vpack.c.b16 %v709, %v705
    %v786 = vpack.c.b16 %v714, %v710
    %v787 = vpack.c.b16 %v715, %v711
    %v788 = vpack.c.b16 %v716, %v712
    %v789 = vpack.c.b16 %v717, %v713
    %v790 = vpack.c.b16 %v722, %v718
    %v791 = vpack.c.b16 %v723, %v719
    %v792 = vpack.c.b16 %v724, %v720
    %v793 = vpack.c.b16 %v725, %v721
    %v794 = vpack.c.b16 %v730, %v726
    %v795 = vpack.c.b16 %v731, %v727
    %v796 = vpack.c.b16 %v732, %v728
    %v797 = vpack.c.b16 %v733, %v729
    %862 = vmatprep.subr.bf16.mxu0 %v735
    %863 = vmatpush1.bf16.msra.mxu0 %v734
    %864 = vmatprep.subr.bf16.mxu0 %v739
    %865 = vmatpush1.bf16.msra.mxu0 %v738
    %866 = vmatprep.subr.bf16.mxu0 %v743
    %867 = vmatpush1.bf16.msra.mxu0 %v742
    %868 = vmatprep.subr.bf16.mxu0 %v747
    %869 = vmatpush1.bf16.msra.mxu0 %v746
    %870 = vmatprep.subr.bf16.mxu0 %v751
    %871 = vmatpush1.bf16.msra.mxu0 %v750
    %872 = vmatprep.subr.bf16.mxu0 %v755
    %873 = vmatpush1.bf16.msra.mxu0 %v754
    %874 = vmatprep.subr.bf16.mxu0 %v759
    %875 = vmatpush1.bf16.msra.mxu0 %v758
    %876 = vmatprep.subr.bf16.mxu0 %v763
    %877 = vmatpush1.bf16.msra.mxu0 %v762
    %878 = vmatprep.subr.bf16.mxu0 %v767
    %879 = vmatpush1.bf16.msra.mxu0 %v766
    %880 = vmatprep.subr.bf16.mxu0 %v771
    %881 = vmatpush1.bf16.msra.mxu0 %v770
    %882 = vmatprep.subr.bf16.mxu0 %v775
    %883 = vmatpush1.bf16.msra.mxu0 %v774
    %884 = vmatprep.subr.bf16.mxu0 %v779
    %885 = vmatpush1.bf16.msra.mxu0 %v778
    %886 = vmatprep.subr.bf16.mxu0 %v783
    %887 = vmatpush1.bf16.msra.mxu0 %v782
    %888 = vmatprep.subr.bf16.mxu0 %v787
    %889 = vmatpush1.bf16.msra.mxu0 %v786
    %890 = vmatprep.subr.bf16.mxu0 %v791
    %891 = vmatpush1.bf16.msra.mxu0 %v790
    %892 = vmatprep.subr.bf16.mxu0 %v795
    %893 = vmatpush1.bf16.msra.mxu0 %v794
    %894 = vmatprep.mubr.bf16.mxu0 %v477
    %895 = vmatmul.mubr.bf16.gmra.mrb[0].mxu0 %v476
    %v896 = vpop.f32.mrb[0].mxu0
    %v897 = vadd.f32 0.0, %v896
    %v898 = vpop.f32.mrb[0].mxu0
    %v899 = vadd.f32 0.0, %v898
    %v900 = vpop.f32.mrb[0].mxu0
    %v901 = vpop.f32.mrb[0].mxu0
    %902 = vdwg.mxu0
    %903 = vmatprep.subr.bf16.mxu0 %v737
    %904 = vmatpush1.bf16.msra.mxu0 %v736
    %905 = vmatprep.subr.bf16.mxu0 %v741
    %906 = vmatpush1.bf16.msra.mxu0 %v740
    %907 = vmatprep.subr.bf16.mxu0 %v745
    %908 = vmatpush1.bf16.msra.mxu0 %v744
    %909 = vmatprep.subr.bf16.mxu0 %v749
    %910 = vmatpush1.bf16.msra.mxu0 %v748
    %911 = vmatprep.subr.bf16.mxu0 %v753
    %912 = vmatpush1.bf16.msra.mxu0 %v752
    %913 = vmatprep.subr.bf16.mxu0 %v757
    %914 = vmatpush1.bf16.msra.mxu0 %v756
    %915 = vmatprep.subr.bf16.mxu0 %v761
    %916 = vmatpush1.bf16.msra.mxu0 %v760
    %917 = vmatprep.subr.bf16.mxu0 %v765
    %918 = vmatpush1.bf16.msra.mxu0 %v764
    %919 = vmatprep.subr.bf16.mxu0 %v769
    %920 = vmatpush1.bf16.msra.mxu0 %v768
    %921 = vmatprep.subr.bf16.mxu0 %v773
    %922 = vmatpush1.bf16.msra.mxu0 %v772
    %923 = vmatprep.subr.bf16.mxu0 %v777
    %924 = vmatpush1.bf16.msra.mxu0 %v776
    %925 = vmatprep.subr.bf16.mxu0 %v781
    %926 = vmatpush1.bf16.msra.mxu0 %v780
    %927 = vmatprep.subr.bf16.mxu0 %v785
    %928 = vmatpush1.bf16.msra.mxu0 %v784
    %929 = vmatprep.subr.bf16.mxu0 %v789
    %930 = vmatpush1.bf16.msra.mxu0 %v788
    %931 = vmatprep.subr.bf16.mxu0 %v793
    %932 = vmatpush1.bf16.msra.mxu0 %v792
    %933 = vmatprep.subr.bf16.mxu0 %v797
    %934 = vmatpush1.bf16.msra.mxu0 %v796
    %935 = vmatprep.mubr.bf16.mxu0 %v477
    %936 = vmatmul.mubr.bf16.gmra.mrb[0].mxu0 %v476
    %v937 = vpop.f32.mrb[0].mxu0
    %v938 = vadd.f32 0.0, %v937
    %v939 = vpop.f32.mrb[0].mxu0
    %v940 = vadd.f32 0.0, %v939
    %v941 = vpop.f32.mrb[0].mxu0
    %v942 = vpop.f32.mrb[0].mxu0
    %943 = vdwg.mxu0
    %v944 = vld [vmem:[%s8] sm:$0xf]
    %v946 = vlaneseq
    %v947 = vshrl.u32 %v946, 7
    %v948 = vsub.s32 0, %v947
    %v949 = vrot.slane %v944, %v948
    %v950 = vlaneseq
    %v951 = vshrl.u32 %v950, 7
    %v952 = vsub.s32 1, %v951
    %v953 = vrot.slane %v944, %v952
    %v954 = vlaneseq
    %v955 = vshrl.u32 %v954, 7
    %v956 = vsub.s32 2, %v955
    %v957 = vrot.slane %v944, %v956
    %v958 = vlaneseq
    %v959 = vshrl.u32 %v958, 7
    %v960 = vsub.s32 3, %v959
    %v961 = vrot.slane %v944, %v960
    %v966 = vmul.f32 %v897, %v949
    %v967 = vmul.f32 %v899, %v953
    %v968 = vmul.f32 %v938, %v957
    %v969 = vmul.f32 %v940, %v961
    %v970 = vld [vmem:[%s9] sm:$0xf]
    %v972 = vlaneseq
    %v973 = vshrl.u32 %v972, 7
    %v974 = vsub.s32 0, %v973
    %v975 = vrot.slane %v970, %v974
    %v976 = vlaneseq
    %v977 = vshrl.u32 %v976, 7
    %v978 = vsub.s32 1, %v977
    %v979 = vrot.slane %v970, %v978
    %v980 = vlaneseq
    %v981 = vshrl.u32 %v980, 7
    %v982 = vsub.s32 2, %v981
    %v983 = vrot.slane %v970, %v982
    %v984 = vlaneseq
    %v985 = vshrl.u32 %v984, 7
    %v986 = vsub.s32 3, %v985
    %v987 = vrot.slane %v970, %v986
    %v992 = vadd.f32 %v966, %v975
    %v993 = vadd.f32 %v967, %v979
    %v994 = vadd.f32 %v968, %v983
    %v995 = vadd.f32 %v969, %v987
    %v996 = vmax.f32 %v992, 0.0
    %v997 = vmax.f32 %v993, 0.0
    %v998 = vmax.f32 %v994, 0.0
    %v999 = vmax.f32 %v995, 0.0
    %v1000 = vpack.c.bf16 %v996, %v996
    %v1001 = vpack.c.bf16 %v997, %v997
    %v1002 = vpack.c.bf16 %v998, %v998
    %v1003 = vpack.c.bf16 %v999, %v999
    %v1004 = vld [vmem:[%s10] sm:$0xf]
    %v1005 = vld [vmem:[%s10 + $0x4] sm:$0xf]
    %v1006 = vld [vmem:[%s10 + $0x8] sm:$0xf]
    %v1007 = vld [vmem:[%s10 + $0xc] sm:$0xf]
    %v1008 = vld [vmem:[%s10 + $0x10] sm:$0xf]
    %v1009 = vld [vmem:[%s10 + $0x14] sm:$0xf]
    %v1010 = vld [vmem:[%s10 + $0x18] sm:$0xf]
    %v1011 = vld [vmem:[%s10 + $0x1c] sm:$0xf]
    %v1012 = vld [vmem:[%s10 + $0x20] sm:$0xf]
    %v1013 = vld [vmem:[%s10 + $0x24] sm:$0xf]
    %v1014 = vld [vmem:[%s10 + $0x28] sm:$0xf]
    %v1015 = vld [vmem:[%s10 + $0x2c] sm:$0xf]
    %v1016 = vld [vmem:[%s10 + $0x30] sm:$0xf]
    %v1017 = vld [vmem:[%s10 + $0x34] sm:$0xf]
    %v1018 = vld [vmem:[%s10 + $0x38] sm:$0xf]
    %v1019 = vld [vmem:[%s10 + $0x3c] sm:$0xf]
    %v1020 = vld [vmem:[%s10 + $0x40] sm:$0xf]
    %v1021 = vld [vmem:[%s10 + $0x44] sm:$0xf]
    %v1022 = vld [vmem:[%s10 + $0x48] sm:$0xf]
    %v1023 = vld [vmem:[%s10 + $0x4c] sm:$0xf]
    %v1024 = vld [vmem:[%s10 + $0x50] sm:$0xf]
    %v1025 = vld [vmem:[%s10 + $0x54] sm:$0xf]
    %v1026 = vld [vmem:[%s10 + $0x58] sm:$0xf]
    %v1027 = vld [vmem:[%s10 + $0x5c] sm:$0xf]
    %v1028 = vld [vmem:[%s10 + $0x60] sm:$0xf]
    %v1029 = vld [vmem:[%s10 + $0x64] sm:$0xf]
    %v1030 = vld [vmem:[%s10 + $0x68] sm:$0xf]
    %v1031 = vld [vmem:[%s10 + $0x6c] sm:$0xf]
    %v1032 = vld [vmem:[%s10 + $0x70] sm:$0xf]
    %v1033 = vld [vmem:[%s10 + $0x74] sm:$0xf]
    %v1034 = vld [vmem:[%s10 + $0x78] sm:$0xf]
    %v1035 = vld [vmem:[%s10 + $0x7c] sm:$0xf]
    %v1036 = vld [vmem:[%s10 + $0x80] sm:$0xf]
    %v1037 = vld [vmem:[%s10 + $0x84] sm:$0xf]
    %v1038 = vld [vmem:[%s10 + $0x88] sm:$0xf]
    %v1039 = vld [vmem:[%s10 + $0x8c] sm:$0xf]
    %v1040 = vld [vmem:[%s10 + $0x90] sm:$0xf]
    %v1041 = vld [vmem:[%s10 + $0x94] sm:$0xf]
    %v1042 = vld [vmem:[%s10 + $0x98] sm:$0xf]
    %v1043 = vld [vmem:[%s10 + $0x9c] sm:$0xf]
    %v1044 = vld [vmem:[%s10 + $0xa0] sm:$0xf]
    %v1045 = vld [vmem:[%s10 + $0xa4] sm:$0xf]
    %v1046 = vld [vmem:[%s10 + $0xa8] sm:$0xf]
    %v1047 = vld [vmem:[%s10 + $0xac] sm:$0xf]
    %v1048 = vld [vmem:[%s10 + $0xb0] sm:$0xf]
    %v1049 = vld [vmem:[%s10 + $0xb4] sm:$0xf]
    %v1050 = vld [vmem:[%s10 + $0xb8] sm:$0xf]
    %v1051 = vld [vmem:[%s10 + $0xbc] sm:$0xf]
    %v1052 = vld [vmem:[%s10 + $0xc0] sm:$0xf]
    %v1053 = vld [vmem:[%s10 + $0xc4] sm:$0xf]
    %v1054 = vld [vmem:[%s10 + $0xc8] sm:$0xf]
    %v1055 = vld [vmem:[%s10 + $0xcc] sm:$0xf]
    %v1056 = vld [vmem:[%s10 + $0xd0] sm:$0xf]
    %v1057 = vld [vmem:[%s10 + $0xd4] sm:$0xf]
    %v1058 = vld [vmem:[%s10 + $0xd8] sm:$0xf]
    %v1059 = vld [vmem:[%s10 + $0xdc] sm:$0xf]
    %v1060 = vld [vmem:[%s10 + $0xe0] sm:$0xf]
    %v1061 = vld [vmem:[%s10 + $0xe4] sm:$0xf]
    %v1062 = vld [vmem:[%s10 + $0xe8] sm:$0xf]
    %v1063 = vld [vmem:[%s10 + $0xec] sm:$0xf]
    %v1064 = vld [vmem:[%s10 + $0xf0] sm:$0xf]
    %v1065 = vld [vmem:[%s10 + $0xf4] sm:$0xf]
    %v1066 = vld [vmem:[%s10 + $0xf8] sm:$0xf]
    %v1067 = vld [vmem:[%s10 + $0xfc] sm:$0xf]
    %v1068 = vld [vmem:[%s11] sm:$0x1]
    %v1070 = vlaneseq
    %v1071 = vshrl.u32 %v1070, 7
    %v1072 = vsub.s32 0, %v1071
    %v1073 = vrot.slane %v1068, %v1072
    %v1139 = vunpack.c.l.b16 %v1004
    %v1140 = vunpack.c.l.b16 %v1005
    %v1141 = vunpack.c.l.b16 %v1006
    %v1142 = vunpack.c.l.b16 %v1007
    %v1143 = vunpack.c.l.b16 %v1008
    %v1144 = vunpack.c.l.b16 %v1009
    %v1145 = vunpack.c.l.b16 %v1010
    %v1146 = vunpack.c.l.b16 %v1011
    %v1147 = vunpack.c.l.b16 %v1012
    %v1148 = vunpack.c.l.b16 %v1013
    %v1149 = vunpack.c.l.b16 %v1014
    %v1150 = vunpack.c.l.b16 %v1015
    %v1151 = vunpack.c.l.b16 %v1016
    %v1152 = vunpack.c.l.b16 %v1017
    %v1153 = vunpack.c.l.b16 %v1018
    %v1154 = vunpack.c.l.b16 %v1019
    %v1155 = vunpack.c.l.b16 %v1020
    %v1156 = vunpack.c.l.b16 %v1021
    %v1157 = vunpack.c.l.b16 %v1022
    %v1158 = vunpack.c.l.b16 %v1023
    %v1159 = vunpack.c.l.b16 %v1024
    %v1160 = vunpack.c.l.b16 %v1025
    %v1161 = vunpack.c.l.b16 %v1026
    %v1162 = vunpack.c.l.b16 %v1027
    %v1163 = vunpack.c.l.b16 %v1028
    %v1164 = vunpack.c.l.b16 %v1029
    %v1165 = vunpack.c.l.b16 %v1030
    %v1166 = vunpack.c.l.b16 %v1031
    %v1167 = vunpack.c.l.b16 %v1032
    %v1168 = vunpack.c.l.b16 %v1033
    %v1169 = vunpack.c.l.b16 %v1034
    %v1170 = vunpack.c.l.b16 %v1035
    %v1171 = vunpack.c.l.b16 %v1036
    %v1172 = vunpack.c.l.b16 %v1037
    %v1173 = vunpack.c.l.b16 %v1038
    %v1174 = vunpack.c.l.b16 %v1039
    %v1175 = vunpack.c.l.b16 %v1040
    %v1176 = vunpack.c.l.b16 %v1041
    %v1177 = vunpack.c.l.b16 %v1042
    %v1178 = vunpack.c.l.b16 %v1043
    %v1179 = vunpack.c.l.b16 %v1044
    %v1180 = vunpack.c.l.b16 %v1045
    %v1181 = vunpack.c.l.b16 %v1046
    %v1182 = vunpack.c.l.b16 %v1047
    %v1183 = vunpack.c.l.b16 %v1048
    %v1184 = vunpack.c.l.b16 %v1049
    %v1185 = vunpack.c.l.b16 %v1050
    %v1186 = vunpack.c.l.b16 %v1051
    %v1187 = vunpack.c.l.b16 %v1052
    %v1188 = vunpack.c.l.b16 %v1053
    %v1189 = vunpack.c.l.b16 %v1054
    %v1190 = vunpack.c.l.b16 %v1055
    %v1191 = vunpack.c.l.b16 %v1056
    %v1192 = vunpack.c.l.b16 %v1057
    %v1193 = vunpack.c.l.b16 %v1058
    %v1194 = vunpack.c.l.b16 %v1059
    %v1195 = vunpack.c.l.b16 %v1060
    %v1196 = vunpack.c.l.b16 %v1061
    %v1197 = vunpack.c.l.b16 %v1062
    %v1198 = vunpack.c.l.b16 %v1063
    %v1199 = vunpack.c.l.b16 %v1064
    %v1200 = vunpack.c.l.b16 %v1065
    %v1201 = vunpack.c.l.b16 %v1066
    %v1202 = vunpack.c.l.b16 %v1067
    %v1203 = vpack.c.b16 %v1140, %v1139
    %v1204 = vpack.c.b16 %v1142, %v1141
    %v1205 = vpack.c.b16 %v1144, %v1143
    %v1206 = vpack.c.b16 %v1146, %v1145
    %v1207 = vpack.c.b16 %v1148, %v1147
    %v1208 = vpack.c.b16 %v1150, %v1149
    %v1209 = vpack.c.b16 %v1152, %v1151
    %v1210 = vpack.c.b16 %v1154, %v1153
    %v1211 = vpack.c.b16 %v1156, %v1155
    %v1212 = vpack.c.b16 %v1158, %v1157
    %v1213 = vpack.c.b16 %v1160, %v1159
    %v1214 = vpack.c.b16 %v1162, %v1161
    %v1215 = vpack.c.b16 %v1164, %v1163
    %v1216 = vpack.c.b16 %v1166, %v1165
    %v1217 = vpack.c.b16 %v1168, %v1167
    %v1218 = vpack.c.b16 %v1170, %v1169
    %v1219 = vpack.c.b16 %v1172, %v1171
    %v1220 = vpack.c.b16 %v1174, %v1173
    %v1221 = vpack.c.b16 %v1176, %v1175
    %v1222 = vpack.c.b16 %v1178, %v1177
    %v1223 = vpack.c.b16 %v1180, %v1179
    %v1224 = vpack.c.b16 %v1182, %v1181
    %v1225 = vpack.c.b16 %v1184, %v1183
    %v1226 = vpack.c.b16 %v1186, %v1185
    %v1227 = vpack.c.b16 %v1188, %v1187
    %v1228 = vpack.c.b16 %v1190, %v1189
    %v1229 = vpack.c.b16 %v1192, %v1191
    %v1230 = vpack.c.b16 %v1194, %v1193
    %v1231 = vpack.c.b16 %v1196, %v1195
    %v1232 = vpack.c.b16 %v1198, %v1197
    %v1233 = vpack.c.b16 %v1200, %v1199
    %v1234 = vpack.c.b16 %v1202, %v1201
    %1267 = vmatprep.subr.bf16.mxu0 0
    %1268 = vmatpush1.bf16.msra.mxu0 %v1203
    %1269 = vmatprep.subr.bf16.mxu0 0
    %1270 = vmatpush1.bf16.msra.mxu0 %v1204
    %1271 = vmatprep.subr.bf16.mxu0 0
    %1272 = vmatpush1.bf16.msra.mxu0 %v1205
    %1273 = vmatprep.subr.bf16.mxu0 0
    %1274 = vmatpush1.bf16.msra.mxu0 %v1206
    %1275 = vmatprep.subr.bf16.mxu0 0
    %1276 = vmatpush1.bf16.msra.mxu0 %v1207
    %1277 = vmatprep.subr.bf16.mxu0 0
    %1278 = vmatpush1.bf16.msra.mxu0 %v1208
    %1279 = vmatprep.subr.bf16.mxu0 0
    %1280 = vmatpush1.bf16.msra.mxu0 %v1209
    %1281 = vmatprep.subr.bf16.mxu0 0
    %1282 = vmatpush1.bf16.msra.mxu0 %v1210
    %1283 = vmatprep.subr.bf16.mxu0 0
    %1284 = vmatpush1.bf16.msra.mxu0 %v1211
    %1285 = vmatprep.subr.bf16.mxu0 0
    %1286 = vmatpush1.bf16.msra.mxu0 %v1212
    %1287 = vmatprep.subr.bf16.mxu0 0
    %1288 = vmatpush1.bf16.msra.mxu0 %v1213
    %1289 = vmatprep.subr.bf16.mxu0 0
    %1290 = vmatpush1.bf16.msra.mxu0 %v1214
    %1291 = vmatprep.subr.bf16.mxu0 0
    %1292 = vmatpush1.bf16.msra.mxu0 %v1215
    %1293 = vmatprep.subr.bf16.mxu0 0
    %1294 = vmatpush1.bf16.msra.mxu0 %v1216
    %1295 = vmatprep.subr.bf16.mxu0 0
    %1296 = vmatpush1.bf16.msra.mxu0 %v1217
    %1297 = vmatprep.subr.bf16.mxu0 0
    %1298 = vmatpush1.bf16.msra.mxu0 %v1218
    %1299 = vmatprep.mubr.bf16.mxu0 %v1001
    %1300 = vmatmul.mubr.bf16.gmra.mrb[0].mxu0 %v1000
    %v1301 = vpop.f32.mrb[0].mxu0
    %v1302 = vadd.f32 %v1073, %v1301
    %v1303 = vpop.f32.mrb[0].mxu0
    %v1304 = vpop.f32.mrb[0].mxu0
    %v1305 = vpop.f32.mrb[0].mxu0
    %1306 = vdwg.mxu0
    %1307 = vmatprep.subr.bf16.mxu0 0
    %1308 = vmatpush1.bf16.msra.mxu0 %v1219
    %1309 = vmatprep.subr.bf16.mxu0 0
    %1310 = vmatpush1.bf16.msra.mxu0 %v1220
    %1311 = vmatprep.subr.bf16.mxu0 0
    %1312 = vmatpush1.bf16.msra.mxu0 %v1221
    %1313 = vmatprep.subr.bf16.mxu0 0
    %1314 = vmatpush1.bf16.msra.mxu0 %v1222
    %1315 = vmatprep.subr.bf16.mxu0 0
    %1316 = vmatpush1.bf16.msra.mxu0 %v1223
    %1317 = vmatprep.subr.bf16.mxu0 0
    %1318 = vmatpush1.bf16.msra.mxu0 %v1224
    %1319 = vmatprep.subr.bf16.mxu0 0
    %1320 = vmatpush1.bf16.msra.mxu0 %v1225
    %1321 = vmatprep.subr.bf16.mxu0 0
    %1322 = vmatpush1.bf16.msra.mxu0 %v1226
    %1323 = vmatprep.subr.bf16.mxu0 0
    %1324 = vmatpush1.bf16.msra.mxu0 %v1227
    %1325 = vmatprep.subr.bf16.mxu0 0
    %1326 = vmatpush1.bf16.msra.mxu0 %v1228
    %1327 = vmatprep.subr.bf16.mxu0 0
    %1328 = vmatpush1.bf16.msra.mxu0 %v1229
    %1329 = vmatprep.subr.bf16.mxu0 0
    %1330 = vmatpush1.bf16.msra.mxu0 %v1230
    %1331 = vmatprep.subr.bf16.mxu0 0
    %1332 = vmatpush1.bf16.msra.mxu0 %v1231
    %1333 = vmatprep.subr.bf16.mxu0 0
    %1334 = vmatpush1.bf16.msra.mxu0 %v1232
    %1335 = vmatprep.subr.bf16.mxu0 0
    %1336 = vmatpush1.bf16.msra.mxu0 %v1233
    %1337 = vmatprep.subr.bf16.mxu0 0
    %1338 = vmatpush1.bf16.msra.mxu0 %v1234
    %1339 = vmatprep.mubr.bf16.mxu0 %v1003
    %1340 = vmatmul.mubr.bf16.gmra.mrb[0].mxu0 %v1002
    %v1341 = vpop.f32.mrb[0].mxu0
    %v1342 = vadd.f32 %v1302, %v1341
    %v1343 = vpop.f32.mrb[0].mxu0
    %v1344 = vpop.f32.mrb[0].mxu0
    %v1345 = vpop.f32.mrb[0].mxu0
    %1346 = vdwg.mxu0
    %1347 = vst [vmem:[#allocation2] sm:$0x3] %v1342
    // Predicated region
    $region50: #{simple_cnn_forward.7} parent=1 // pred_check
      _
    $region51: #{simple_cnn_forward.7} parent=1 // pred_check_branch
      %1349 = sbr.rel (0) target = $region53
    $region52: #{simple_cnn_forward.7} parent=1 // pred_region
      %s1351 = ssub.s32 32, 32
      %1352 = vsyncadd [#allocation3], %s1351
      %s1354 = sshll.u32 [#allocation2], 4
      %s1355 = int_to_ptr.vmem [resolvable:$true] %s1354
      %1357 = dma.vmem_to_hbm [thread:$0]  %s1355, 32, %s12, [#allocation3]
    $region53: #{simple_cnn_forward.7} parent=1 // pred_fallthru
      _
    // Predicated region
    $region54: #{simple_cnn_forward.7} parent=1 // pred_check
      _
    $region55: #{simple_cnn_forward.7} parent=1 // pred_check_branch
      %1359 = sbr.rel (0) target = $region57
    $region56: #{simple_cnn_forward.7} parent=1 // pred_region
      %1360 = dma.done [#allocation3], 32
    $region57: #{simple_cnn_forward.7} parent=1 // pred_fallthru
      _
    %1361 = vsyncpa [#allocation3], 1

</llo_original>
